<compile_context>
chip_gen: v7x
topology: tpu7x:2x2x1
jax: 0.10.0
libtpu: 0.0.40
codegen_flags: <defaults>
</compile_context>

<pallas_src>
import math

import jax
import jax.numpy as jnp
from jax.experimental import pallas as pl
from jax.experimental.pallas import tpu as pltpu

# ------------------------------------------------------------------ config ----
B, S = 2, 8                        # batch, sequence
H = 128                            # hidden (lane-dense)
N_HEAD, D_HEAD = 2, 64             # heads, head dim (N_HEAD * D_HEAD == H)
N_LAYER = 2
D_MLP = 4 * H                      # 512
V = 256                            # vocab (lane-dense)
LN_EPS = 1e-5

M_ROWS = B * S                     # total token rows
TM = 8                             # rows per head/loss block (M_ROWS % TM == 0)
TV = 128                           # vocab block for online softmax (V % TV == 0)

NEG_BIG = -1.0e30


# ---------------------------------------------------------- in-kernel helpers ----
def _layernorm(x, g, b):
    mu = jnp.mean(x, axis=-1, keepdims=True)
    var = jnp.mean((x - mu) ** 2, axis=-1, keepdims=True)
    return (x - mu) * jax.lax.rsqrt(var + LN_EPS) * g + b


def _gelu(y):
    # gelu_new (tanh approximation), matching HF GPT-2; f32 math.
    c = math.sqrt(2.0 / math.pi)
    return 0.5 * y * (1.0 + jnp.tanh(c * (y + 0.044715 * (y ** 3))))


# ----------------------------------------------------------------- kernels ----
def _stack_kernel(h_in, ln1_g, ln1_b, w_qkv, b_qkv, w_o, b_o,
                  ln2_g, ln2_b, w_fc, b_fc, w_proj, b_proj, h_out):
    """All N_LAYER transformer blocks for one batch row.

    Grid = (B, N_LAYER).  h_out's block index is constant along the layer axis, so
    it stays resident in VMEM and carries the residual stream between layers; HBM
    is touched once per batch row (read h_in at l==0, write h_out when b changes).
    """
    l = pl.program_id(1)

    @pl.when(l == 0)
    def _():
        h_out[...] = h_in[...]

    x = h_out[...]                                                   # (S, H) f32

    # ---- attention block ----
    xn = _layernorm(x, ln1_g[...], ln1_b[...])
    qkv = jnp.dot(xn.astype(jnp.bfloat16), w_qkv[...],
                  preferred_element_type=jnp.float32) + b_qkv[...]   # (S, 3H) f32

    scale = 1.0 / math.sqrt(D_HEAD)
    row = jax.lax.broadcasted_iota(jnp.int32, (S, S), 0)
    col = jax.lax.broadcasted_iota(jnp.int32, (S, S), 1)
    causal = col <= row

    ctx_heads = []
    for hh in range(N_HEAD):                       # static, unrolled (N_HEAD == 2)
        q = qkv[:, hh * D_HEAD:(hh + 1) * D_HEAD]                    # (S, Dh)
        k = qkv[:, H + hh * D_HEAD:H + (hh + 1) * D_HEAD]
        v = qkv[:, 2 * H + hh * D_HEAD:2 * H + (hh + 1) * D_HEAD]
        s = jax.lax.dot_general(q, k, (((1,), (1,)), ((), ())),
                                preferred_element_type=jnp.float32) * scale
        s = jnp.where(causal, s, NEG_BIG)
        m = jnp.max(s, axis=-1, keepdims=True)
        p = jnp.exp(s - m)
        p = p * pl.reciprocal(jnp.sum(p, axis=-1, keepdims=True), approx=True)
        ctx_heads.append(jnp.dot(p, v, preferred_element_type=jnp.float32))

    # Concat head contexts along lanes -> single (S, H) @ (H, H) out-projection.
    ctx = jnp.concatenate(ctx_heads, axis=-1)                        # (S, H) f32
    attn = jnp.dot(ctx.astype(jnp.bfloat16), w_o[...],
                   preferred_element_type=jnp.float32) + b_o[...]
    h1 = x + attn

    # ---- MLP block ----
    xn2 = _layernorm(h1, ln2_g[...], ln2_b[...])
    m1 = _gelu(jnp.dot(xn2.astype(jnp.bfloat16), w_fc[...],
                       preferred_element_type=jnp.float32) + b_fc[...])
    m2 = jnp.dot(m1.astype(jnp.bfloat16), w_proj[...],
                 preferred_element_type=jnp.float32) + b_proj[...]

    h_out[...] = h1 + m2


def _head_loss_kernel(h_ref, g_ref, b_ref, lab_ref, slab_ref, w_ref,
                      loss_ref, correct_ref,
                      xn_s, m_run, s_run, lab_logit, amax_val, amax_idx,
                      nll_acc, valid_acc, correct_acc):
    """Final LN + tied LM head + shifted CE loss + argmax accuracy.

    Grid = (M_ROWS // TM, V // TV).  The vocab axis is an online-softmax reduction:
    (TM, V) logits are never stored, only a (TM, TV) block at a time.
    """
    r = pl.program_id(0)
    vi = pl.program_id(1)
    nr = pl.num_programs(0)
    nv = pl.num_programs(1)

    @pl.when(jnp.logical_and(r == 0, vi == 0))
    def _():
        nll_acc[0] = 0.0
        valid_acc[0] = 0.0
        correct_acc[0] = 0.0

    @pl.when(vi == 0)
    def _():
        xn = _layernorm(h_ref[...], g_ref[...], b_ref[...])          # f32 math
        xn_s[...] = xn.astype(jnp.bfloat16)
        m_run[...] = jnp.full((TM, 1), NEG_BIG, jnp.float32)
        s_run[...] = jnp.zeros((TM, 1), jnp.float32)
        lab_logit[...] = jnp.zeros((TM, 1), jnp.float32)
        amax_val[...] = jnp.full((TM, 1), NEG_BIG, jnp.float32)
        amax_idx[...] = jnp.zeros((TM, 1), jnp.int32)

    # (TM, TV) logits block for this vocab slab
    logits = jnp.dot(xn_s[...], w_ref[...],
                     preferred_element_type=jnp.float32)

    slab = slab_ref[...]                                             # (TM, 1) int32
    gid = vi * TV + jax.lax.broadcasted_iota(jnp.int32, (TM, TV), 1)

    # ---- online LSE over vocab blocks ----
    blk_max = jnp.max(logits, axis=-1, keepdims=True)
    m_new = jnp.maximum(m_run[...], blk_max)
    s_run[...] = (s_run[...] * jnp.exp(m_run[...] - m_new)
                  + jnp.sum(jnp.exp(logits - m_new), axis=-1, keepdims=True))
    m_run[...] = m_new

    # ---- logit of the (shifted) target token ----
    lab_logit[...] = lab_logit[...] + jnp.sum(
        jnp.where(gid == slab, logits, 0.0), axis=-1, keepdims=True)

    # ---- running argmax (first-max tie-break) over UNSHIFTED labels ----
    blk_arg = jnp.min(jnp.where(logits == blk_max, gid, jnp.int32(V)),
                      axis=-1, keepdims=True)
    upd = blk_max > amax_val[...]
    amax_idx[...] = jnp.where(upd, blk_arg, amax_idx[...])
    amax_val[...] = jnp.maximum(amax_val[...], blk_max)

    @pl.when(vi == nv - 1)
    def _():
        lse = m_run[...] + jnp.log(s_run[...])
        valid = (slab != -100).astype(jnp.float32)
        nll_acc[0] += jnp.sum((lse - lab_logit[...]) * valid)
        valid_acc[0] += jnp.sum(valid)
        correct_acc[0] += jnp.sum((amax_idx[...] == lab_ref[...]).astype(jnp.float32))

    @pl.when(jnp.logical_and(r == nr - 1, vi == nv - 1))
    def _():
        loss_ref[0, 0] = nll_acc[0] / jnp.maximum(valid_acc[0], 1.0)
        correct_ref[0, 0] = correct_acc[0]


# ---------------------------------------------------------------- wrappers ----
def transformer_stack(params, h):
    def wspec(shape):   # stacked (N_LAYER, *shape) weight, blocked on layer axis
        return pl.BlockSpec((None,) + shape, lambda b, l: (l, 0, 0))

    in_specs = [
        pl.BlockSpec((None, S, H), lambda b, l: (b, 0, 0)),   # h
        wspec((1, H)), wspec((1, H)),                         # ln1
        wspec((H, 3 * H)), wspec((1, 3 * H)),                 # qkv proj
        wspec((H, H)), wspec((1, H)),                         # out proj
        wspec((1, H)), wspec((1, H)),                         # ln2
        wspec((H, D_MLP)), wspec((1, D_MLP)),                 # mlp fc
        wspec((D_MLP, H)), wspec((1, H)),                     # mlp proj
    ]
    return pl.pallas_call(
        _stack_kernel,
        out_shape=jax.ShapeDtypeStruct((B, S, H), jnp.float32),
        grid=(B, N_LAYER),
        in_specs=in_specs,
        out_specs=pl.BlockSpec((None, S, H), lambda b, l: (b, 0, 0)),
        compiler_params=pltpu.CompilerParams(
            dimension_semantics=("parallel", "arbitrary")),
    )(h, params["ln1_g"], params["ln1_b"], params["w_qkv"], params["b_qkv"],
      params["w_o"], params["b_o"], params["ln2_g"], params["ln2_b"],
      params["w_fc"], params["b_fc"], params["w_proj"], params["b_proj"])


def head_loss_accuracy(params, h, labels):
    """Fused final-LN + LM-head + loss + accuracy.  Logits never hit HBM."""
    h2 = h.reshape(M_ROWS, H)
    labels2 = labels.reshape(M_ROWS, 1).astype(jnp.int32)
    # shifted targets (tiny int tensor): labels[:, 1:] with -100 at sequence ends
    shifted = jnp.concatenate(
        [labels[:, 1:], jnp.full((B, 1), -100, labels.dtype)], axis=1)
    slabels2 = shifted.reshape(M_ROWS, 1).astype(jnp.int32)

    loss, correct = pl.pallas_call(
        _head_loss_kernel,
        out_shape=(jax.ShapeDtypeStruct((1, 1), jnp.float32),
                   jax.ShapeDtypeStruct((1, 1), jnp.float32)),
        grid=(M_ROWS // TM, V // TV),
        in_specs=[
            pl.BlockSpec((TM, H), lambda r, v: (r, 0)),       # hidden rows
            pl.BlockSpec((1, H), lambda r, v: (0, 0)),        # ln_f gamma
            pl.BlockSpec((1, H), lambda r, v: (0, 0)),        # ln_f beta
            pl.BlockSpec((TM, 1), lambda r, v: (r, 0)),       # labels (unshifted)
            pl.BlockSpec((TM, 1), lambda r, v: (r, 0)),       # labels (shifted)
            pl.BlockSpec((H, TV), lambda r, v: (0, v)),       # tied LM head slab
        ],
        out_specs=(
            pl.BlockSpec((1, 1), lambda r, v: (0, 0),
                         memory_space=pltpu.MemorySpace.SMEM),
            pl.BlockSpec((1, 1), lambda r, v: (0, 0),
                         memory_space=pltpu.MemorySpace.SMEM)),
        scratch_shapes=[
            pltpu.VMEM((TM, H), jnp.bfloat16),                # ln_f(h) rows, reused per V slab
            pltpu.VMEM((TM, 1), jnp.float32),                 # running max
            pltpu.VMEM((TM, 1), jnp.float32),                 # running sum-exp
            pltpu.VMEM((TM, 1), jnp.float32),                 # target logit
            pltpu.VMEM((TM, 1), jnp.float32),                 # argmax value
            pltpu.VMEM((TM, 1), jnp.int32),                   # argmax index
            pltpu.SMEM((1,), jnp.float32),                    # nll accumulator
            pltpu.SMEM((1,), jnp.float32),                    # valid-token count
            pltpu.SMEM((1,), jnp.float32),                    # correct count
        ],
        compiler_params=pltpu.CompilerParams(
            dimension_semantics=("arbitrary", "arbitrary")),
    )(h2, params["lnf_g"], params["lnf_b"], labels2, slabels2, params["w_lm"])

    accuracy = correct[0, 0] / float(M_ROWS)
    return loss[0, 0], accuracy


# ------------------------------------------------------------------- model ----
def init_params(key):
    keys = jax.random.split(key, 6)

    def nrm(k, shape):
        return (0.02 * jax.random.normal(k, shape, dtype=jnp.float32)
                ).astype(jnp.bfloat16)

    wte = 0.02 * jax.random.normal(keys[0], (V, H), dtype=jnp.float32)
    return {
        "wte": wte,                                     # f32: embedding gather
        "wpe": 0.02 * jax.random.normal(keys[1], (S, H), dtype=jnp.float32),
        "w_lm": wte.T.astype(jnp.bfloat16),             # tied head, pre-transposed once
        "lnf_g": jnp.ones((1, H), jnp.float32),
        "lnf_b": jnp.zeros((1, H), jnp.float32),
        # ---- stacked per-layer weights: (N_LAYER, ...) ----
        "ln1_g": jnp.ones((N_LAYER, 1, H), jnp.float32),
        "ln1_b": jnp.zeros((N_LAYER, 1, H), jnp.float32),
        "w_qkv": nrm(keys[2], (N_LAYER, H, 3 * H)),
        "b_qkv": jnp.zeros((N_LAYER, 1, 3 * H), jnp.float32),
        "w_o": nrm(keys[3], (N_LAYER, H, H)),
        "b_o": jnp.zeros((N_LAYER, 1, H), jnp.float32),
        "ln2_g": jnp.ones((N_LAYER, 1, H), jnp.float32),
        "ln2_b": jnp.zeros((N_LAYER, 1, H), jnp.float32),
        "w_fc": nrm(keys[4], (N_LAYER, H, D_MLP)),
        "b_fc": jnp.zeros((N_LAYER, 1, D_MLP), jnp.float32),
        "w_proj": nrm(keys[5], (N_LAYER, D_MLP, H)),
        "b_proj": jnp.zeros((N_LAYER, 1, H), jnp.float32),
    }


def trainer_forward(params, batch, calc_acc=True):
    """Mirrors GPTNLGTrainer.forward(batch, calc_acc): returns (loss, stats)."""
    # TODO(synk): batch['attention_mask'] is ignored; dense unpadded sequences assumed.
    input_ids = batch["input_ids"]
    labels = batch["labels"]

    # embedding gather + position add stays in XLA glue
    h = params["wte"][input_ids] + params["wpe"][None, :, :]          # (B, S, H) f32
    h = transformer_stack(params, h)                                  # 1 fused call
    loss, accuracy = head_loss_accuracy(params, h, labels)            # 1 fused call

    seq_len = input_ids.shape[1]      # == outputs.hidden_states[-2].shape[1]
    stats = {"loss": loss, "seq_len": seq_len}
    if calc_acc:
        stats["accuracy"] = accuracy
    return loss, stats


# -------------------------------------------------------------------- main ----
if __name__ == "__main__":
    key = jax.random.PRNGKey(0)
    pkey, dkey = jax.random.split(key)
    params = init_params(pkey)

    input_ids = jax.random.randint(dkey, (B, S), 0, V, dtype=jnp.int32)
    labels = input_ids.at[:, :2].set(-100)   # mask the "prompt" tokens, HF-style
    batch = {"input_ids": input_ids,
             "attention_mask": jnp.ones((B, S), jnp.int32),
             "labels": labels}

    fwd = jax.jit(lambda p, ii, ll: trainer_forward(
        p, {"input_ids": ii, "labels": ll}, calc_acc=True))
    loss, stats = fwd(params, input_ids, labels)

    jax.block_until_ready(loss)
    jax.block_until_ready(stats["accuracy"])
    assert bool(jnp.isfinite(loss))
    assert stats["seq_len"] == S
    print("KERNEL_OK")
</pallas_src>

<mosaic_0001>
module attributes {stable_mosaic.version = 11 : i64} {
  func.func @_stack_kernel(%arg0: i32, %arg1: i32, %arg2: memref<1x8x128xf32, #tpu.memory_space<vmem>>, %arg3: memref<1x1x128xf32, #tpu.memory_space<vmem>>, %arg4: memref<1x1x128xf32, #tpu.memory_space<vmem>>, %arg5: memref<1x128x384xbf16, #tpu.memory_space<vmem>>, %arg6: memref<1x1x384xf32, #tpu.memory_space<vmem>>, %arg7: memref<1x128x128xbf16, #tpu.memory_space<vmem>>, %arg8: memref<1x1x128xf32, #tpu.memory_space<vmem>>, %arg9: memref<1x1x128xf32, #tpu.memory_space<vmem>>, %arg10: memref<1x1x128xf32, #tpu.memory_space<vmem>>, %arg11: memref<1x128x512xbf16, #tpu.memory_space<vmem>>, %arg12: memref<1x1x512xf32, #tpu.memory_space<vmem>>, %arg13: memref<1x512x128xbf16, #tpu.memory_space<vmem>>, %arg14: memref<1x1x128xf32, #tpu.memory_space<vmem>>, %arg15: memref<1x8x128xf32, #tpu.memory_space<vmem>>) attributes {dimension_semantics = [#tpu.dimension_semantics<parallel>, #tpu.dimension_semantics<arbitrary>], iteration_bounds = array<i64: 2, 2>, scalar_prefetch = 0 : i64, scratch_operands = 0 : i64, tpu.core_type = #tpu.core_type<tc>, window_params = [{transform_indices = @transform_0, window_bounds = array<i64: 1, 8, 128>}, {transform_indices = @transform_1, window_bounds = array<i64: 1, 1, 128>}, {transform_indices = @transform_2, window_bounds = array<i64: 1, 1, 128>}, {transform_indices = @transform_3, window_bounds = array<i64: 1, 128, 384>}, {transform_indices = @transform_4, window_bounds = array<i64: 1, 1, 384>}, {transform_indices = @transform_5, window_bounds = array<i64: 1, 128, 128>}, {transform_indices = @transform_6, window_bounds = array<i64: 1, 1, 128>}, {transform_indices = @transform_7, window_bounds = array<i64: 1, 1, 128>}, {transform_indices = @transform_8, window_bounds = array<i64: 1, 1, 128>}, {transform_indices = @transform_9, window_bounds = array<i64: 1, 128, 512>}, {transform_indices = @transform_10, window_bounds = array<i64: 1, 1, 512>}, {transform_indices = @transform_11, window_bounds = array<i64: 1, 512, 128>}, {transform_indices = @transform_12, window_bounds = array<i64: 1, 1, 128>}, {transform_indices = @transform_13, window_bounds = array<i64: 1, 8, 128>}]} {
    %c0_i32 = arith.constant 0 : i32
    %0 = arith.cmpi eq, %arg1, %c0_i32 : i32
    %1 = arith.extui %0 : i1 to i32
    %c0_i32_0 = arith.constant 0 : i32
    %2 = arith.cmpi ne, %1, %c0_i32_0 : i32
    scf.if %2 {
      %c0_71 = arith.constant 0 : index
      %c0_72 = arith.constant 0 : index
      %c0_73 = arith.constant 0 : index
      %149 = vector.load %arg2[%c0_71, %c0_72, %c0_73] : memref<1x8x128xf32, #tpu.memory_space<vmem>>, vector<1x8x128xf32>
      %150 = vector.shape_cast %149 : vector<1x8x128xf32> to vector<8x128xf32>
      %c0_74 = arith.constant 0 : index
      %c0_75 = arith.constant 0 : index
      %c0_76 = arith.constant 0 : index
      %151 = vector.load %arg15[%c0_74, %c0_75, %c0_76] : memref<1x8x128xf32, #tpu.memory_space<vmem>>, vector<1x8x128xf32>
      %152 = vector.shape_cast %151 : vector<1x8x128xf32> to vector<8x128xf32>
      %153 = vector.shape_cast %150 : vector<8x128xf32> to vector<1x8x128xf32>
      tpu.vector_store %arg15[%c0_74, %c0_75, %c0_76], %153 {strides = array<i32>} : memref<1x8x128xf32, #tpu.memory_space<vmem>>, vector<1x8x128xf32>,
    } else {
    }
    %c0 = arith.constant 0 : index
    %c0_1 = arith.constant 0 : index
    %c0_2 = arith.constant 0 : index
    %3 = vector.load %arg15[%c0, %c0_1, %c0_2] : memref<1x8x128xf32, #tpu.memory_space<vmem>>, vector<1x8x128xf32>
    %4 = vector.shape_cast %3 : vector<1x8x128xf32> to vector<8x128xf32>
    %c0_3 = arith.constant 0 : index
    %c0_4 = arith.constant 0 : index
    %c0_5 = arith.constant 0 : index
    %5 = vector.load %arg3[%c0_3, %c0_4, %c0_5] : memref<1x1x128xf32, #tpu.memory_space<vmem>>, vector<1x1x128xf32>
    %6 = vector.shape_cast %5 : vector<1x1x128xf32> to vector<1x128xf32>
    %c0_6 = arith.constant 0 : index
    %c0_7 = arith.constant 0 : index
    %c0_8 = arith.constant 0 : index
    %7 = vector.load %arg4[%c0_6, %c0_7, %c0_8] : memref<1x1x128xf32, #tpu.memory_space<vmem>>, vector<1x1x128xf32>
    %8 = vector.shape_cast %7 : vector<1x1x128xf32> to vector<1x128xf32>
    %cst = arith.constant dense<0.000000e+00> : vector<8xf32>
    %9 = vector.multi_reduction <add>, %4, %cst [1] : vector<8x128xf32> to vector<8xf32>
    %10 = vector.shape_cast %9 : vector<8xf32> to vector<8x1xf32>
    %cst_9 = arith.constant 1.280000e+02 : f32
    %11 = vector.broadcast %cst_9 : f32 to vector<8x1xf32>
    %12 = arith.divf %10, %11 : vector<8x1xf32>
    %13 = vector.broadcast %12 : vector<8x1xf32> to vector<8x128xf32>
    %14 = arith.subf %4, %13 : vector<8x128xf32>
    %15 = arith.mulf %14, %14 : vector<8x128xf32>
    %cst_10 = arith.constant dense<0.000000e+00> : vector<8xf32>
    %16 = vector.multi_reduction <add>, %15, %cst_10 [1] : vector<8x128xf32> to vector<8xf32>
    %17 = vector.shape_cast %16 : vector<8xf32> to vector<8x1xf32>
    %cst_11 = arith.constant 1.280000e+02 : f32
    %18 = vector.broadcast %cst_11 : f32 to vector<8x1xf32>
    %19 = arith.divf %17, %18 : vector<8x1xf32>
    %20 = vector.broadcast %12 : vector<8x1xf32> to vector<8x128xf32>
    %21 = arith.subf %4, %20 : vector<8x128xf32>
    %cst_12 = arith.constant 9.99999974E-6 : f32
    %22 = vector.broadcast %cst_12 : f32 to vector<8x1xf32>
    %23 = arith.addf %19, %22 : vector<8x1xf32>
    %24 = math.rsqrt %23 : vector<8x1xf32>
    %25 = vector.broadcast %24 : vector<8x1xf32> to vector<8x128xf32>
    %26 = arith.mulf %21, %25 : vector<8x128xf32>
    %27 = vector.broadcast %6 : vector<1x128xf32> to vector<8x128xf32>
    %28 = arith.mulf %26, %27 : vector<8x128xf32>
    %29 = vector.broadcast %8 : vector<1x128xf32> to vector<8x128xf32>
    %30 = arith.addf %28, %29 : vector<8x128xf32>
    %31 = arith.truncf %30 : vector<8x128xf32> to vector<8x128xbf16>
    %c0_13 = arith.constant 0 : index
    %c0_14 = arith.constant 0 : index
    %c0_15 = arith.constant 0 : index
    %32 = vector.load %arg5[%c0_13, %c0_14, %c0_15] : memref<1x128x384xbf16, #tpu.memory_space<vmem>>, vector<1x128x384xbf16>
    %33 = vector.shape_cast %32 : vector<1x128x384xbf16> to vector<128x384xbf16>
    %cst_16 = arith.constant dense<0.000000e+00> : vector<8x384xf32>
    %34 = tpu.matmul %31, %33, %cst_16 {dimension_numbers = #tpu.dot_dimension_numbers<[1], [0], [0], [1], [0, 0, 1, 1], [], []>} : vector<8x128xbf16>, vector<128x384xbf16>, vector<8x384xf32> -> vector<8x384xf32>
    %c0_17 = arith.constant 0 : index
    %c0_18 = arith.constant 0 : index
    %c0_19 = arith.constant 0 : index
    %35 = vector.load %arg6[%c0_17, %c0_18, %c0_19] : memref<1x1x384xf32, #tpu.memory_space<vmem>>, vector<1x1x384xf32>
    %36 = vector.shape_cast %35 : vector<1x1x384xf32> to vector<1x384xf32>
    %37 = vector.broadcast %36 : vector<1x384xf32> to vector<8x384xf32>
    %38 = arith.addf %34, %37 : vector<8x384xf32>
    %39 = tpu.iota {dimensions = array<i32: 0>} : vector<8x8xi32>
    %40 = tpu.iota {dimensions = array<i32: 1>} : vector<8x8xi32>
    %41 = arith.cmpi sle, %40, %39 : vector<8x8xi32>
    %42 = vector.extract_strided_slice %38 {offsets = [0, 0], sizes = [8, 64], strides = [1, 1]} : vector<8x384xf32> to vector<8x64xf32>
    %43 = vector.extract_strided_slice %38 {offsets = [0, 128], sizes = [8, 64], strides = [1, 1]} : vector<8x384xf32> to vector<8x64xf32>
    %44 = vector.extract_strided_slice %38 {offsets = [0, 256], sizes = [8, 64], strides = [1, 1]} : vector<8x384xf32> to vector<8x64xf32>
    %cst_20 = arith.constant dense<0.000000e+00> : vector<8x8xf32>
    %45 = tpu.matmul %42, %43, %cst_20 {dimension_numbers = #tpu.dot_dimension_numbers<[1], [1], [0], [0], [0, 0, 1, 0], [], []>} : vector<8x64xf32>, vector<8x64xf32>, vector<8x8xf32> -> vector<8x8xf32>
    %cst_21 = arith.constant 1.250000e-01 : f32
    %46 = vector.broadcast %cst_21 : f32 to vector<8x8xf32>
    %47 = arith.mulf %45, %46 : vector<8x8xf32>
    %cst_22 = arith.constant -1.000000e+30 : f32
    %48 = vector.broadcast %cst_22 : f32 to vector<8x8xf32>
    %49 = arith.select %41, %47, %48 : vector<8x8xi1>, vector<8x8xf32>
    %cst_23 = arith.constant dense<0xFF800000> : vector<8xf32>
    %50 = vector.multi_reduction <maximumf>, %49, %cst_23 [1] : vector<8x8xf32> to vector<8xf32>
    %51 = vector.shape_cast %50 : vector<8xf32> to vector<8x1xf32>
    %52 = vector.broadcast %51 : vector<8x1xf32> to vector<8x8xf32>
    %53 = arith.subf %49, %52 : vector<8x8xf32>
    %54 = math.exp %53 : vector<8x8xf32>
    %cst_24 = arith.constant dense<0.000000e+00> : vector<8xf32>
    %55 = vector.multi_reduction <add>, %54, %cst_24 [1] : vector<8x8xf32> to vector<8xf32>
    %56 = vector.shape_cast %55 : vector<8xf32> to vector<8x1xf32>
    %57 = tpu.reciprocal %56 {approx = true} : vector<8x1xf32> -> vector<8x1xf32>
    %58 = vector.broadcast %57 : vector<8x1xf32> to vector<8x8xf32>
    %59 = arith.mulf %54, %58 : vector<8x8xf32>
    %cst_25 = arith.constant dense<0.000000e+00> : vector<8x64xf32>
    %60 = tpu.matmul %59, %44, %cst_25 {dimension_numbers = #tpu.dot_dimension_numbers<[1], [0], [0], [1], [0, 0, 1, 1], [], []>} : vector<8x8xf32>, vector<8x64xf32>, vector<8x64xf32> -> vector<8x64xf32>
    %61 = vector.extract_strided_slice %38 {offsets = [0, 64], sizes = [8, 64], strides = [1, 1]} : vector<8x384xf32> to vector<8x64xf32>
    %62 = vector.extract_strided_slice %38 {offsets = [0, 192], sizes = [8, 64], strides = [1, 1]} : vector<8x384xf32> to vector<8x64xf32>
    %63 = vector.extract_strided_slice %38 {offsets = [0, 320], sizes = [8, 64], strides = [1, 1]} : vector<8x384xf32> to vector<8x64xf32>
    %cst_26 = arith.constant dense<0.000000e+00> : vector<8x8xf32>
    %64 = tpu.matmul %61, %62, %cst_26 {dimension_numbers = #tpu.dot_dimension_numbers<[1], [1], [0], [0], [0, 0, 1, 0], [], []>} : vector<8x64xf32>, vector<8x64xf32>, vector<8x8xf32> -> vector<8x8xf32>
    %cst_27 = arith.constant 1.250000e-01 : f32
    %65 = vector.broadcast %cst_27 : f32 to vector<8x8xf32>
    %66 = arith.mulf %64, %65 : vector<8x8xf32>
    %cst_28 = arith.constant -1.000000e+30 : f32
    %67 = vector.broadcast %cst_28 : f32 to vector<8x8xf32>
    %68 = arith.select %41, %66, %67 : vector<8x8xi1>, vector<8x8xf32>
    %cst_29 = arith.constant dense<0xFF800000> : vector<8xf32>
    %69 = vector.multi_reduction <maximumf>, %68, %cst_29 [1] : vector<8x8xf32> to vector<8xf32>
    %70 = vector.shape_cast %69 : vector<8xf32> to vector<8x1xf32>
    %71 = vector.broadcast %70 : vector<8x1xf32> to vector<8x8xf32>
    %72 = arith.subf %68, %71 : vector<8x8xf32>
    %73 = math.exp %72 : vector<8x8xf32>
    %cst_30 = arith.constant dense<0.000000e+00> : vector<8xf32>
    %74 = vector.multi_reduction <add>, %73, %cst_30 [1] : vector<8x8xf32> to vector<8xf32>
    %75 = vector.shape_cast %74 : vector<8xf32> to vector<8x1xf32>
    %76 = tpu.reciprocal %75 {approx = true} : vector<8x1xf32> -> vector<8x1xf32>
    %77 = vector.broadcast %76 : vector<8x1xf32> to vector<8x8xf32>
    %78 = arith.mulf %73, %77 : vector<8x8xf32>
    %cst_31 = arith.constant dense<0.000000e+00> : vector<8x64xf32>
    %79 = tpu.matmul %78, %63, %cst_31 {dimension_numbers = #tpu.dot_dimension_numbers<[1], [0], [0], [1], [0, 0, 1, 1], [], []>} : vector<8x8xf32>, vector<8x64xf32>, vector<8x64xf32> -> vector<8x64xf32>
    %80 = tpu.concatenate %60, %79 in 1 : vector<8x64xf32>, vector<8x64xf32> -> vector<8x128xf32>
    %81 = arith.truncf %80 : vector<8x128xf32> to vector<8x128xbf16>
    %c0_32 = arith.constant 0 : index
    %c0_33 = arith.constant 0 : index
    %c0_34 = arith.constant 0 : index
    %82 = vector.load %arg7[%c0_32, %c0_33, %c0_34] : memref<1x128x128xbf16, #tpu.memory_space<vmem>>, vector<1x128x128xbf16>
    %83 = vector.shape_cast %82 : vector<1x128x128xbf16> to vector<128x128xbf16>
    %cst_35 = arith.constant dense<0.000000e+00> : vector<8x128xf32>
    %84 = tpu.matmul %81, %83, %cst_35 {dimension_numbers = #tpu.dot_dimension_numbers<[1], [0], [0], [1], [0, 0, 1, 1], [], []>} : vector<8x128xbf16>, vector<128x128xbf16>, vector<8x128xf32> -> vector<8x128xf32>
    %c0_36 = arith.constant 0 : index
    %c0_37 = arith.constant 0 : index
    %c0_38 = arith.constant 0 : index
    %85 = vector.load %arg8[%c0_36, %c0_37, %c0_38] : memref<1x1x128xf32, #tpu.memory_space<vmem>>, vector<1x1x128xf32>
    %86 = vector.shape_cast %85 : vector<1x1x128xf32> to vector<1x128xf32>
    %87 = vector.broadcast %86 : vector<1x128xf32> to vector<8x128xf32>
    %88 = arith.addf %84, %87 : vector<8x128xf32>
    %89 = arith.addf %4, %88 : vector<8x128xf32>
    %c0_39 = arith.constant 0 : index
    %c0_40 = arith.constant 0 : index
    %c0_41 = arith.constant 0 : index
    %90 = vector.load %arg9[%c0_39, %c0_40, %c0_41] : memref<1x1x128xf32, #tpu.memory_space<vmem>>, vector<1x1x128xf32>
    %91 = vector.shape_cast %90 : vector<1x1x128xf32> to vector<1x128xf32>
    %c0_42 = arith.constant 0 : index
    %c0_43 = arith.constant 0 : index
    %c0_44 = arith.constant 0 : index
    %92 = vector.load %arg10[%c0_42, %c0_43, %c0_44] : memref<1x1x128xf32, #tpu.memory_space<vmem>>, vector<1x1x128xf32>
    %93 = vector.shape_cast %92 : vector<1x1x128xf32> to vector<1x128xf32>
    %cst_45 = arith.constant dense<0.000000e+00> : vector<8xf32>
    %94 = vector.multi_reduction <add>, %89, %cst_45 [1] : vector<8x128xf32> to vector<8xf32>
    %95 = vector.shape_cast %94 : vector<8xf32> to vector<8x1xf32>
    %cst_46 = arith.constant 1.280000e+02 : f32
    %96 = vector.broadcast %cst_46 : f32 to vector<8x1xf32>
    %97 = arith.divf %95, %96 : vector<8x1xf32>
    %98 = vector.broadcast %97 : vector<8x1xf32> to vector<8x128xf32>
    %99 = arith.subf %89, %98 : vector<8x128xf32>
    %100 = arith.mulf %99, %99 : vector<8x128xf32>
    %cst_47 = arith.constant dense<0.000000e+00> : vector<8xf32>
    %101 = vector.multi_reduction <add>, %100, %cst_47 [1] : vector<8x128xf32> to vector<8xf32>
    %102 = vector.shape_cast %101 : vector<8xf32> to vector<8x1xf32>
    %cst_48 = arith.constant 1.280000e+02 : f32
    %103 = vector.broadcast %cst_48 : f32 to vector<8x1xf32>
    %104 = arith.divf %102, %103 : vector<8x1xf32>
    %105 = vector.broadcast %97 : vector<8x1xf32> to vector<8x128xf32>
    %106 = arith.subf %89, %105 : vector<8x128xf32>
    %cst_49 = arith.constant 9.99999974E-6 : f32
    %107 = vector.broadcast %cst_49 : f32 to vector<8x1xf32>
    %108 = arith.addf %104, %107 : vector<8x1xf32>
    %109 = math.rsqrt %108 : vector<8x1xf32>
    %110 = vector.broadcast %109 : vector<8x1xf32> to vector<8x128xf32>
    %111 = arith.mulf %106, %110 : vector<8x128xf32>
    %112 = vector.broadcast %91 : vector<1x128xf32> to vector<8x128xf32>
    %113 = arith.mulf %111, %112 : vector<8x128xf32>
    %114 = vector.broadcast %93 : vector<1x128xf32> to vector<8x128xf32>
    %115 = arith.addf %113, %114 : vector<8x128xf32>
    %116 = arith.truncf %115 : vector<8x128xf32> to vector<8x128xbf16>
    %c0_50 = arith.constant 0 : index
    %c0_51 = arith.constant 0 : index
    %c0_52 = arith.constant 0 : index
    %117 = vector.load %arg11[%c0_50, %c0_51, %c0_52] : memref<1x128x512xbf16, #tpu.memory_space<vmem>>, vector<1x128x512xbf16>
    %118 = vector.shape_cast %117 : vector<1x128x512xbf16> to vector<128x512xbf16>
    %cst_53 = arith.constant dense<0.000000e+00> : vector<8x512xf32>
    %119 = tpu.matmul %116, %118, %cst_53 {dimension_numbers = #tpu.dot_dimension_numbers<[1], [0], [0], [1], [0, 0, 1, 1], [], []>} : vector<8x128xbf16>, vector<128x512xbf16>, vector<8x512xf32> -> vector<8x512xf32>
    %c0_54 = arith.constant 0 : index
    %c0_55 = arith.constant 0 : index
    %c0_56 = arith.constant 0 : index
    %120 = vector.load %arg12[%c0_54, %c0_55, %c0_56] : memref<1x1x512xf32, #tpu.memory_space<vmem>>, vector<1x1x512xf32>
    %121 = vector.shape_cast %120 : vector<1x1x512xf32> to vector<1x512xf32>
    %122 = vector.broadcast %121 : vector<1x512xf32> to vector<8x512xf32>
    %123 = arith.addf %119, %122 : vector<8x512xf32>
    %cst_57 = arith.constant 5.000000e-01 : f32
    %124 = vector.broadcast %cst_57 : f32 to vector<8x512xf32>
    %125 = arith.mulf %124, %123 : vector<8x512xf32>
    %126 = arith.mulf %123, %123 : vector<8x512xf32>
    %127 = arith.mulf %123, %126 : vector<8x512xf32>
    %cst_58 = arith.constant 4.471500e-02 : f32
    %128 = vector.broadcast %cst_58 : f32 to vector<8x512xf32>
    %129 = arith.mulf %128, %127 : vector<8x512xf32>
    %130 = arith.addf %123, %129 : vector<8x512xf32>
    %cst_59 = arith.constant 0.797884583 : f32
    %131 = vector.broadcast %cst_59 : f32 to vector<8x512xf32>
    %132 = arith.mulf %131, %130 : vector<8x512xf32>
    %133 = math.tanh %132 : vector<8x512xf32>
    %cst_60 = arith.constant 1.000000e+00 : f32
    %134 = vector.broadcast %cst_60 : f32 to vector<8x512xf32>
    %135 = arith.addf %134, %133 : vector<8x512xf32>
    %136 = arith.mulf %125, %135 : vector<8x512xf32>
    %137 = arith.truncf %136 : vector<8x512xf32> to vector<8x512xbf16>
    %c0_61 = arith.constant 0 : index
    %c0_62 = arith.constant 0 : index
    %c0_63 = arith.constant 0 : index
    %138 = vector.load %arg13[%c0_61, %c0_62, %c0_63] : memref<1x512x128xbf16, #tpu.memory_space<vmem>>, vector<1x512x128xbf16>
    %139 = vector.shape_cast %138 : vector<1x512x128xbf16> to vector<512x128xbf16>
    %cst_64 = arith.constant dense<0.000000e+00> : vector<8x128xf32>
    %140 = tpu.matmul %137, %139, %cst_64 {dimension_numbers = #tpu.dot_dimension_numbers<[1], [0], [0], [1], [0, 0, 1, 1], [], []>} : vector<8x512xbf16>, vector<512x128xbf16>, vector<8x128xf32> -> vector<8x128xf32>
    %c0_65 = arith.constant 0 : index
    %c0_66 = arith.constant 0 : index
    %c0_67 = arith.constant 0 : index
    %141 = vector.load %arg14[%c0_65, %c0_66, %c0_67] : memref<1x1x128xf32, #tpu.memory_space<vmem>>, vector<1x1x128xf32>
    %142 = vector.shape_cast %141 : vector<1x1x128xf32> to vector<1x128xf32>
    %143 = vector.broadcast %142 : vector<1x128xf32> to vector<8x128xf32>
    %144 = arith.addf %140, %143 : vector<8x128xf32>
    %145 = arith.addf %89, %144 : vector<8x128xf32>
    %c0_68 = arith.constant 0 : index
    %c0_69 = arith.constant 0 : index
    %c0_70 = arith.constant 0 : index
    %146 = vector.load %arg15[%c0_68, %c0_69, %c0_70] : memref<1x8x128xf32, #tpu.memory_space<vmem>>, vector<1x8x128xf32>
    %147 = vector.shape_cast %146 : vector<1x8x128xf32> to vector<8x128xf32>
    %148 = vector.shape_cast %145 : vector<8x128xf32> to vector<1x8x128xf32>
    tpu.vector_store %arg15[%c0_68, %c0_69, %c0_70], %148 {strides = array<i32>} : memref<1x8x128xf32, #tpu.memory_space<vmem>>, vector<1x8x128xf32>,
    return
  }
  func.func @transform_0(%arg0: i32, %arg1: i32) -> (i32, i32, i32) {
    %c0_i32 = arith.constant 0 : i32
    %c0_i32_0 = arith.constant 0 : i32
    %c0_i32_1 = arith.constant 0 : i32
    return %arg0, %c0_i32, %c0_i32_0 : i32, i32, i32
  }
  func.func @transform_1(%arg0: i32, %arg1: i32) -> (i32, i32, i32) {
    %c0_i32 = arith.constant 0 : i32
    %c0_i32_0 = arith.constant 0 : i32
    %c0_i32_1 = arith.constant 0 : i32
    return %arg1, %c0_i32, %c0_i32_0 : i32, i32, i32
  }
  func.func @transform_2(%arg0: i32, %arg1: i32) -> (i32, i32, i32) {
    %c0_i32 = arith.constant 0 : i32
    %c0_i32_0 = arith.constant 0 : i32
    %c0_i32_1 = arith.constant 0 : i32
    return %arg1, %c0_i32, %c0_i32_0 : i32, i32, i32
  }
  func.func @transform_3(%arg0: i32, %arg1: i32) -> (i32, i32, i32) {
    %c0_i32 = arith.constant 0 : i32
    %c0_i32_0 = arith.constant 0 : i32
    %c0_i32_1 = arith.constant 0 : i32
    return %arg1, %c0_i32, %c0_i32_0 : i32, i32, i32
  }
  func.func @transform_4(%arg0: i32, %arg1: i32) -> (i32, i32, i32) {
    %c0_i32 = arith.constant 0 : i32
    %c0_i32_0 = arith.constant 0 : i32
    %c0_i32_1 = arith.constant 0 : i32
    return %arg1, %c0_i32, %c0_i32_0 : i32, i32, i32
  }
  func.func @transform_5(%arg0: i32, %arg1: i32) -> (i32, i32, i32) {
    %c0_i32 = arith.constant 0 : i32
    %c0_i32_0 = arith.constant 0 : i32
    %c0_i32_1 = arith.constant 0 : i32
    return %arg1, %c0_i32, %c0_i32_0 : i32, i32, i32
  }
  func.func @transform_6(%arg0: i32, %arg1: i32) -> (i32, i32, i32) {
    %c0_i32 = arith.constant 0 : i32
    %c0_i32_0 = arith.constant 0 : i32
    %c0_i32_1 = arith.constant 0 : i32
    return %arg1, %c0_i32, %c0_i32_0 : i32, i32, i32
  }
  func.func @transform_7(%arg0: i32, %arg1: i32) -> (i32, i32, i32) {
    %c0_i32 = arith.constant 0 : i32
    %c0_i32_0 = arith.constant 0 : i32
    %c0_i32_1 = arith.constant 0 : i32
    return %arg1, %c0_i32, %c0_i32_0 : i32, i32, i32
  }
  func.func @transform_8(%arg0: i32, %arg1: i32) -> (i32, i32, i32) {
    %c0_i32 = arith.constant 0 : i32
    %c0_i32_0 = arith.constant 0 : i32
    %c0_i32_1 = arith.constant 0 : i32
    return %arg1, %c0_i32, %c0_i32_0 : i32, i32, i32
  }
  func.func @transform_9(%arg0: i32, %arg1: i32) -> (i32, i32, i32) {
    %c0_i32 = arith.constant 0 : i32
    %c0_i32_0 = arith.constant 0 : i32
    %c0_i32_1 = arith.constant 0 : i32
    return %arg1, %c0_i32, %c0_i32_0 : i32, i32, i32
  }
  func.func @transform_10(%arg0: i32, %arg1: i32) -> (i32, i32, i32) {
    %c0_i32 = arith.constant 0 : i32
    %c0_i32_0 = arith.constant 0 : i32
    %c0_i32_1 = arith.constant 0 : i32
    return %arg1, %c0_i32, %c0_i32_0 : i32, i32, i32
  }
  func.func @transform_11(%arg0: i32, %arg1: i32) -> (i32, i32, i32) {
    %c0_i32 = arith.constant 0 : i32
    %c0_i32_0 = arith.constant 0 : i32
    %c0_i32_1 = arith.constant 0 : i32
    return %arg1, %c0_i32, %c0_i32_0 : i32, i32, i32
  }
  func.func @transform_12(%arg0: i32, %arg1: i32) -> (i32, i32, i32) {
    %c0_i32 = arith.constant 0 : i32
    %c0_i32_0 = arith.constant 0 : i32
    %c0_i32_1 = arith.constant 0 : i32
    return %arg1, %c0_i32, %c0_i32_0 : i32, i32, i32
  }
  func.func @transform_13(%arg0: i32, %arg1: i32) -> (i32, i32, i32) {
    %c0_i32 = arith.constant 0 : i32
    %c0_i32_0 = arith.constant 0 : i32
    %c0_i32_1 = arith.constant 0 : i32
    return %arg0, %c0_i32, %c0_i32_0 : i32, i32, i32
  }
}

module attributes {stable_mosaic.version = 11 : i64} {
  func.func @_head_loss_kernel(%arg0: i32, %arg1: i32, %arg2: memref<8x128xf32, #tpu.memory_space<vmem>>, %arg3: memref<1x128xf32, #tpu.memory_space<vmem>>, %arg4: memref<1x128xf32, #tpu.memory_space<vmem>>, %arg5: memref<8x1xi32, #tpu.memory_space<vmem>>, %arg6: memref<8x1xi32, #tpu.memory_space<vmem>>, %arg7: memref<128x128xbf16, #tpu.memory_space<vmem>>, %arg8: memref<1x1xf32, #tpu.memory_space<smem>>, %arg9: memref<1x1xf32, #tpu.memory_space<smem>>, %arg10: memref<8x128xbf16, #tpu.memory_space<vmem>>, %arg11: memref<8x1xf32, #tpu.memory_space<vmem>>, %arg12: memref<8x1xf32, #tpu.memory_space<vmem>>, %arg13: memref<8x1xf32, #tpu.memory_space<vmem>>, %arg14: memref<8x1xf32, #tpu.memory_space<vmem>>, %arg15: memref<8x1xi32, #tpu.memory_space<vmem>>, %arg16: memref<1xf32, #tpu.memory_space<smem>>, %arg17: memref<1xf32, #tpu.memory_space<smem>>, %arg18: memref<1xf32, #tpu.memory_space<smem>>) attributes {dimension_semantics = [#tpu.dimension_semantics<arbitrary>, #tpu.dimension_semantics<arbitrary>], iteration_bounds = array<i64: 2, 2>, scalar_prefetch = 0 : i64, scratch_operands = 9 : i64, tpu.core_type = #tpu.core_type<tc>, window_params = [{transform_indices = @transform_0, window_bounds = array<i64: 8, 128>}, {pipeline_mode = #tpu.pipeline_mode<synchronous>, transform_indices = @transform_1, window_bounds = array<i64: 1, 128>}, {pipeline_mode = #tpu.pipeline_mode<synchronous>, transform_indices = @transform_2, window_bounds = array<i64: 1, 128>}, {transform_indices = @transform_3, window_bounds = array<i64: 8, 1>}, {transform_indices = @transform_4, window_bounds = array<i64: 8, 1>}, {transform_indices = @transform_5, window_bounds = array<i64: 128, 128>}, {transform_indices = @transform_6, window_bounds = array<i64: 1, 1>}, {transform_indices = @transform_7, window_bounds = array<i64: 1, 1>}]} {
    %c0_i32 = arith.constant 0 : i32
    %0 = arith.cmpi eq, %arg0, %c0_i32 : i32
    %c0_i32_0 = arith.constant 0 : i32
    %1 = arith.cmpi eq, %arg1, %c0_i32_0 : i32
    %2 = arith.andi %0, %1 : i1
    %3 = arith.extui %2 : i1 to i32
    %c0_i32_1 = arith.constant 0 : i32
    %4 = arith.cmpi ne, %3, %c0_i32_1 : i32
    scf.if %4 {
      %cst_42 = arith.constant 0.000000e+00 : f32
      %c0_43 = arith.constant 0 : index
      %64 = memref.load %arg16[%c0_43] : memref<1xf32, #tpu.memory_space<smem>>
      memref.store %cst_42, %arg16[%c0_43] : memref<1xf32, #tpu.memory_space<smem>>
      %cst_44 = arith.constant 0.000000e+00 : f32
      %c0_45 = arith.constant 0 : index
      %65 = memref.load %arg17[%c0_45] : memref<1xf32, #tpu.memory_space<smem>>
      memref.store %cst_44, %arg17[%c0_45] : memref<1xf32, #tpu.memory_space<smem>>
      %cst_46 = arith.constant 0.000000e+00 : f32
      %c0_47 = arith.constant 0 : index
      %66 = memref.load %arg18[%c0_47] : memref<1xf32, #tpu.memory_space<smem>>
      memref.store %cst_46, %arg18[%c0_47] : memref<1xf32, #tpu.memory_space<smem>>
    } else {
    }
    %c0_i32_2 = arith.constant 0 : i32
    %5 = arith.cmpi eq, %arg1, %c0_i32_2 : i32
    %6 = arith.extui %5 : i1 to i32
    %c0_i32_3 = arith.constant 0 : i32
    %7 = arith.cmpi ne, %6, %c0_i32_3 : i32
    scf.if %7 {
      %c0_42 = arith.constant 0 : index
      %c0_43 = arith.constant 0 : index
      %64 = vector.load %arg2[%c0_42, %c0_43] : memref<8x128xf32, #tpu.memory_space<vmem>>, vector<8x128xf32>
      %c0_44 = arith.constant 0 : index
      %c0_45 = arith.constant 0 : index
      %65 = vector.load %arg3[%c0_44, %c0_45] : memref<1x128xf32, #tpu.memory_space<vmem>>, vector<1x128xf32>
      %c0_46 = arith.constant 0 : index
      %c0_47 = arith.constant 0 : index
      %66 = vector.load %arg4[%c0_46, %c0_47] : memref<1x128xf32, #tpu.memory_space<vmem>>, vector<1x128xf32>
      %cst_48 = arith.constant dense<0.000000e+00> : vector<8xf32>
      %67 = vector.multi_reduction <add>, %64, %cst_48 [1] : vector<8x128xf32> to vector<8xf32>
      %68 = vector.shape_cast %67 : vector<8xf32> to vector<8x1xf32>
      %cst_49 = arith.constant 1.280000e+02 : f32
      %69 = vector.broadcast %cst_49 : f32 to vector<8x1xf32>
      %70 = arith.divf %68, %69 : vector<8x1xf32>
      %71 = vector.broadcast %70 : vector<8x1xf32> to vector<8x128xf32>
      %72 = arith.subf %64, %71 : vector<8x128xf32>
      %73 = arith.mulf %72, %72 : vector<8x128xf32>
      %cst_50 = arith.constant dense<0.000000e+00> : vector<8xf32>
      %74 = vector.multi_reduction <add>, %73, %cst_50 [1] : vector<8x128xf32> to vector<8xf32>
      %75 = vector.shape_cast %74 : vector<8xf32> to vector<8x1xf32>
      %cst_51 = arith.constant 1.280000e+02 : f32
      %76 = vector.broadcast %cst_51 : f32 to vector<8x1xf32>
      %77 = arith.divf %75, %76 : vector<8x1xf32>
      %78 = vector.broadcast %70 : vector<8x1xf32> to vector<8x128xf32>
      %79 = arith.subf %64, %78 : vector<8x128xf32>
      %cst_52 = arith.constant 9.99999974E-6 : f32
      %80 = vector.broadcast %cst_52 : f32 to vector<8x1xf32>
      %81 = arith.addf %77, %80 : vector<8x1xf32>
      %82 = math.rsqrt %81 : vector<8x1xf32>
      %83 = vector.broadcast %82 : vector<8x1xf32> to vector<8x128xf32>
      %84 = arith.mulf %79, %83 : vector<8x128xf32>
      %85 = vector.broadcast %65 : vector<1x128xf32> to vector<8x128xf32>
      %86 = arith.mulf %84, %85 : vector<8x128xf32>
      %87 = vector.broadcast %66 : vector<1x128xf32> to vector<8x128xf32>
      %88 = arith.addf %86, %87 : vector<8x128xf32>
      %89 = arith.truncf %88 : vector<8x128xf32> to vector<8x128xbf16>
      %c0_53 = arith.constant 0 : index
      %c0_54 = arith.constant 0 : index
      %90 = vector.load %arg10[%c0_53, %c0_54] : memref<8x128xbf16, #tpu.memory_space<vmem>>, vector<8x128xbf16>
      tpu.vector_store %arg10[%c0_53, %c0_54], %89 {strides = array<i32>} : memref<8x128xbf16, #tpu.memory_space<vmem>>, vector<8x128xbf16>,
      %cst_55 = arith.constant -1.000000e+30 : f32
      %91 = vector.broadcast %cst_55 : f32 to vector<8x1xf32>
      %c0_56 = arith.constant 0 : index
      %c0_57 = arith.constant 0 : index
      %92 = vector.load %arg11[%c0_56, %c0_57] : memref<8x1xf32, #tpu.memory_space<vmem>>, vector<8x1xf32>
      tpu.vector_store %arg11[%c0_56, %c0_57], %91 {strides = array<i32>} : memref<8x1xf32, #tpu.memory_space<vmem>>, vector<8x1xf32>,
      %cst_58 = arith.constant 0.000000e+00 : f32
      %93 = vector.broadcast %cst_58 : f32 to vector<8x1xf32>
      %c0_59 = arith.constant 0 : index
      %c0_60 = arith.constant 0 : index
      %94 = vector.load %arg12[%c0_59, %c0_60] : memref<8x1xf32, #tpu.memory_space<vmem>>, vector<8x1xf32>
      tpu.vector_store %arg12[%c0_59, %c0_60], %93 {strides = array<i32>} : memref<8x1xf32, #tpu.memory_space<vmem>>, vector<8x1xf32>,
      %cst_61 = arith.constant 0.000000e+00 : f32
      %95 = vector.broadcast %cst_61 : f32 to vector<8x1xf32>
      %c0_62 = arith.constant 0 : index
      %c0_63 = arith.constant 0 : index
      %96 = vector.load %arg13[%c0_62, %c0_63] : memref<8x1xf32, #tpu.memory_space<vmem>>, vector<8x1xf32>
      tpu.vector_store %arg13[%c0_62, %c0_63], %95 {strides = array<i32>} : memref<8x1xf32, #tpu.memory_space<vmem>>, vector<8x1xf32>,
      %cst_64 = arith.constant -1.000000e+30 : f32
      %97 = vector.broadcast %cst_64 : f32 to vector<8x1xf32>
      %c0_65 = arith.constant 0 : index
      %c0_66 = arith.constant 0 : index
      %98 = vector.load %arg14[%c0_65, %c0_66] : memref<8x1xf32, #tpu.memory_space<vmem>>, vector<8x1xf32>
      tpu.vector_store %arg14[%c0_65, %c0_66], %97 {strides = array<i32>} : memref<8x1xf32, #tpu.memory_space<vmem>>, vector<8x1xf32>,
      %c0_i32_67 = arith.constant 0 : i32
      %99 = vector.broadcast %c0_i32_67 : i32 to vector<8x1xi32>
      %c0_68 = arith.constant 0 : index
      %c0_69 = arith.constant 0 : index
      %100 = vector.load %arg15[%c0_68, %c0_69] : memref<8x1xi32, #tpu.memory_space<vmem>>, vector<8x1xi32>
      tpu.vector_store %arg15[%c0_68, %c0_69], %99 {strides = array<i32>} : memref<8x1xi32, #tpu.memory_space<vmem>>, vector<8x1xi32>,
    } else {
    }
    %c0 = arith.constant 0 : index
    %c0_4 = arith.constant 0 : index
    %8 = vector.load %arg10[%c0, %c0_4] : memref<8x128xbf16, #tpu.memory_space<vmem>>, vector<8x128xbf16>
    %c0_5 = arith.constant 0 : index
    %c0_6 = arith.constant 0 : index
    %9 = vector.load %arg7[%c0_5, %c0_6] : memref<128x128xbf16, #tpu.memory_space<vmem>>, vector<128x128xbf16>
    %cst = arith.constant dense<0.000000e+00> : vector<8x128xf32>
    %10 = tpu.matmul %8, %9, %cst {dimension_numbers = #tpu.dot_dimension_numbers<[1], [0], [0], [1], [0, 0, 1, 1], [], []>} : vector<8x128xbf16>, vector<128x128xbf16>, vector<8x128xf32> -> vector<8x128xf32>
    %c0_7 = arith.constant 0 : index
    %c0_8 = arith.constant 0 : index
    %11 = vector.load %arg6[%c0_7, %c0_8] : memref<8x1xi32, #tpu.memory_space<vmem>>, vector<8x1xi32>
    %c128_i32 = arith.constant 128 : i32
    %12 = arith.muli %arg1, %c128_i32 : i32
    %13 = tpu.iota {dimensions = array<i32: 1>} : vector<8x128xi32>
    %14 = vector.broadcast %12 : i32 to vector<8x128xi32>
    %15 = arith.addi %14, %13 : vector<8x128xi32>
    %cst_9 = arith.constant dense<0xFF800000> : vector<8xf32>
    %16 = vector.multi_reduction <maximumf>, %10, %cst_9 [1] : vector<8x128xf32> to vector<8xf32>
    %17 = vector.shape_cast %16 : vector<8xf32> to vector<8x1xf32>
    %c0_10 = arith.constant 0 : index
    %c0_11 = arith.constant 0 : index
    %18 = vector.load %arg11[%c0_10, %c0_11] : memref<8x1xf32, #tpu.memory_space<vmem>>, vector<8x1xf32>
    %19 = arith.maximumf %18, %17 : vector<8x1xf32>
    %c0_12 = arith.constant 0 : index
    %c0_13 = arith.constant 0 : index
    %20 = vector.load %arg12[%c0_12, %c0_13] : memref<8x1xf32, #tpu.memory_space<vmem>>, vector<8x1xf32>
    %c0_14 = arith.constant 0 : index
    %c0_15 = arith.constant 0 : index
    %21 = vector.load %arg11[%c0_14, %c0_15] : memref<8x1xf32, #tpu.memory_space<vmem>>, vector<8x1xf32>
    %22 = arith.subf %21, %19 : vector<8x1xf32>
    %23 = math.exp %22 : vector<8x1xf32>
    %24 = arith.mulf %20, %23 : vector<8x1xf32>
    %25 = vector.broadcast %19 : vector<8x1xf32> to vector<8x128xf32>
    %26 = arith.subf %10, %25 : vector<8x128xf32>
    %27 = math.exp %26 : vector<8x128xf32>
    %cst_16 = arith.constant dense<0.000000e+00> : vector<8xf32>
    %28 = vector.multi_reduction <add>, %27, %cst_16 [1] : vector<8x128xf32> to vector<8xf32>
    %29 = vector.shape_cast %28 : vector<8xf32> to vector<8x1xf32>
    %30 = arith.addf %24, %29 : vector<8x1xf32>
    %c0_17 = arith.constant 0 : index
    %c0_18 = arith.constant 0 : index
    %31 = vector.load %arg12[%c0_17, %c0_18] : memref<8x1xf32, #tpu.memory_space<vmem>>, vector<8x1xf32>
    tpu.vector_store %arg12[%c0_17, %c0_18], %30 {strides = array<i32>} : memref<8x1xf32, #tpu.memory_space<vmem>>, vector<8x1xf32>,
    %c0_19 = arith.constant 0 : index
    %c0_20 = arith.constant 0 : index
    %32 = vector.load %arg11[%c0_19, %c0_20] : memref<8x1xf32, #tpu.memory_space<vmem>>, vector<8x1xf32>
    tpu.vector_store %arg11[%c0_19, %c0_20], %19 {strides = array<i32>} : memref<8x1xf32, #tpu.memory_space<vmem>>, vector<8x1xf32>,
    %c0_21 = arith.constant 0 : index
    %c0_22 = arith.constant 0 : index
    %33 = vector.load %arg13[%c0_21, %c0_22] : memref<8x1xf32, #tpu.memory_space<vmem>>, vector<8x1xf32>
    %34 = vector.broadcast %11 : vector<8x1xi32> to vector<8x128xi32>
    %35 = arith.cmpi eq, %15, %34 : vector<8x128xi32>
    %cst_23 = arith.constant 0.000000e+00 : f32
    %36 = vector.broadcast %cst_23 : f32 to vector<8x128xf32>
    %37 = arith.select %35, %10, %36 : vector<8x128xi1>, vector<8x128xf32>
    %cst_24 = arith.constant dense<0.000000e+00> : vector<8xf32>
    %38 = vector.multi_reduction <add>, %37, %cst_24 [1] : vector<8x128xf32> to vector<8xf32>
    %39 = vector.shape_cast %38 : vector<8xf32> to vector<8x1xf32>
    %40 = arith.addf %33, %39 : vector<8x1xf32>
    %c0_25 = arith.constant 0 : index
    %c0_26 = arith.constant 0 : index
    %41 = vector.load %arg13[%c0_25, %c0_26] : memref<8x1xf32, #tpu.memory_space<vmem>>, vector<8x1xf32>
    tpu.vector_store %arg13[%c0_25, %c0_26], %40 {strides = array<i32>} : memref<8x1xf32, #tpu.memory_space<vmem>>, vector<8x1xf32>,
    %42 = vector.broadcast %17 : vector<8x1xf32> to vector<8x128xf32>
    %43 = arith.cmpf oeq, %10, %42 : vector<8x128xf32>
    %c256_i32 = arith.constant 256 : i32
    %44 = vector.broadcast %c256_i32 : i32 to vector<8x128xi32>
    %45 = arith.select %43, %15, %44 : vector<8x128xi1>, vector<8x128xi32>
    %cst_27 = arith.constant dense<2147483647> : vector<8xi32>
    %46 = vector.multi_reduction <minsi>, %45, %cst_27 [1] : vector<8x128xi32> to vector<8xi32>
    %47 = vector.shape_cast %46 : vector<8xi32> to vector<8x1xi32>
    %c0_28 = arith.constant 0 : index
    %c0_29 = arith.constant 0 : index
    %48 = vector.load %arg14[%c0_28, %c0_29] : memref<8x1xf32, #tpu.memory_space<vmem>>, vector<8x1xf32>
    %49 = arith.cmpf ogt, %17, %48 : vector<8x1xf32>
    %c0_30 = arith.constant 0 : index
    %c0_31 = arith.constant 0 : index
    %50 = vector.load %arg15[%c0_30, %c0_31] : memref<8x1xi32, #tpu.memory_space<vmem>>, vector<8x1xi32>
    %51 = arith.select %49, %47, %50 : vector<8x1xi1>, vector<8x1xi32>
    %c0_32 = arith.constant 0 : index
    %c0_33 = arith.constant 0 : index
    %52 = vector.load %arg15[%c0_32, %c0_33] : memref<8x1xi32, #tpu.memory_space<vmem>>, vector<8x1xi32>
    tpu.vector_store %arg15[%c0_32, %c0_33], %51 {strides = array<i32>} : memref<8x1xi32, #tpu.memory_space<vmem>>, vector<8x1xi32>,
    %c0_34 = arith.constant 0 : index
    %c0_35 = arith.constant 0 : index
    %53 = vector.load %arg14[%c0_34, %c0_35] : memref<8x1xf32, #tpu.memory_space<vmem>>, vector<8x1xf32>
    %54 = arith.maximumf %53, %17 : vector<8x1xf32>
    %c0_36 = arith.constant 0 : index
    %c0_37 = arith.constant 0 : index
    %55 = vector.load %arg14[%c0_36, %c0_37] : memref<8x1xf32, #tpu.memory_space<vmem>>, vector<8x1xf32>
    tpu.vector_store %arg14[%c0_36, %c0_37], %54 {strides = array<i32>} : memref<8x1xf32, #tpu.memory_space<vmem>>, vector<8x1xf32>,
    %c1_i32 = arith.constant 1 : i32
    %56 = arith.cmpi eq, %arg1, %c1_i32 : i32
    %57 = arith.extui %56 : i1 to i32
    %c0_i32_38 = arith.constant 0 : i32
    %58 = arith.cmpi ne, %57, %c0_i32_38 : i32
    scf.if %58 {
      %c0_42 = arith.constant 0 : index
      %c0_43 = arith.constant 0 : index
      %64 = vector.load %arg11[%c0_42, %c0_43] : memref<8x1xf32, #tpu.memory_space<vmem>>, vector<8x1xf32>
      %c0_44 = arith.constant 0 : index
      %c0_45 = arith.constant 0 : index
      %65 = vector.load %arg12[%c0_44, %c0_45] : memref<8x1xf32, #tpu.memory_space<vmem>>, vector<8x1xf32>
      %66 = math.log %65 : vector<8x1xf32>
      %67 = arith.addf %64, %66 : vector<8x1xf32>
      %c-100_i32 = arith.constant -100 : i32
      %68 = vector.broadcast %c-100_i32 : i32 to vector<8x1xi32>
      %69 = arith.cmpi ne, %11, %68 : vector<8x1xi32>
      %70 = arith.extui %69 : vector<8x1xi1> to vector<8x1xi32>
      %71 = arith.sitofp %70 : vector<8x1xi32> to vector<8x1xf32>
      %c0_46 = arith.constant 0 : index
      %72 = memref.load %arg16[%c0_46] : memref<1xf32, #tpu.memory_space<smem>>
      %c0_47 = arith.constant 0 : index
      %c0_48 = arith.constant 0 : index
      %73 = vector.load %arg13[%c0_47, %c0_48] : memref<8x1xf32, #tpu.memory_space<vmem>>, vector<8x1xf32>
      %74 = arith.subf %67, %73 : vector<8x1xf32>
      %75 = arith.mulf %74, %71 : vector<8x1xf32>
      %76 = vector.shape_cast %75 : vector<8x1xf32> to vector<1x8x1xf32>
      %cst_49 = arith.constant dense<0.000000e+00> : vector<1xf32>
      %77 = vector.multi_reduction <add>, %76, %cst_49 [1, 2] : vector<1x8x1xf32> to vector<1xf32>
      %78 = vector.shape_cast %77 : vector<1xf32> to vector<1x1x1xf32>
      %79 = vector.extract %78[0, 0, 0] : f32 from vector<1x1x1xf32>
      %80 = arith.addf %72, %79 : f32
      %c0_50 = arith.constant 0 : index
      %81 = memref.load %arg16[%c0_50] : memref<1xf32, #tpu.memory_space<smem>>
      memref.store %80, %arg16[%c0_50] : memref<1xf32, #tpu.memory_space<smem>>
      %c0_51 = arith.constant 0 : index
      %82 = memref.load %arg17[%c0_51] : memref<1xf32, #tpu.memory_space<smem>>
      %83 = vector.shape_cast %71 : vector<8x1xf32> to vector<1x8x1xf32>
      %cst_52 = arith.constant dense<0.000000e+00> : vector<1xf32>
      %84 = vector.multi_reduction <add>, %83, %cst_52 [1, 2] : vector<1x8x1xf32> to vector<1xf32>
      %85 = vector.shape_cast %84 : vector<1xf32> to vector<1x1x1xf32>
      %86 = vector.extract %85[0, 0, 0] : f32 from vector<1x1x1xf32>
      %87 = arith.addf %82, %86 : f32
      %c0_53 = arith.constant 0 : index
      %88 = memref.load %arg17[%c0_53] : memref<1xf32, #tpu.memory_space<smem>>
      memref.store %87, %arg17[%c0_53] : memref<1xf32, #tpu.memory_space<smem>>
      %c0_54 = arith.constant 0 : index
      %89 = memref.load %arg18[%c0_54] : memref<1xf32, #tpu.memory_space<smem>>
      %c0_55 = arith.constant 0 : index
      %c0_56 = arith.constant 0 : index
      %90 = vector.load %arg15[%c0_55, %c0_56] : memref<8x1xi32, #tpu.memory_space<vmem>>, vector<8x1xi32>
      %c0_57 = arith.constant 0 : index
      %c0_58 = arith.constant 0 : index
      %91 = vector.load %arg5[%c0_57, %c0_58] : memref<8x1xi32, #tpu.memory_space<vmem>>, vector<8x1xi32>
      %92 = arith.cmpi eq, %90, %91 : vector<8x1xi32>
      %93 = arith.extui %92 : vector<8x1xi1> to vector<8x1xi32>
      %94 = arith.sitofp %93 : vector<8x1xi32> to vector<8x1xf32>
      %95 = vector.shape_cast %94 : vector<8x1xf32> to vector<1x8x1xf32>
      %cst_59 = arith.constant dense<0.000000e+00> : vector<1xf32>
      %96 = vector.multi_reduction <add>, %95, %cst_59 [1, 2] : vector<1x8x1xf32> to vector<1xf32>
      %97 = vector.shape_cast %96 : vector<1xf32> to vector<1x1x1xf32>
      %98 = vector.extract %97[0, 0, 0] : f32 from vector<1x1x1xf32>
      %99 = arith.addf %89, %98 : f32
      %c0_60 = arith.constant 0 : index
      %100 = memref.load %arg18[%c0_60] : memref<1xf32, #tpu.memory_space<smem>>
      memref.store %99, %arg18[%c0_60] : memref<1xf32, #tpu.memory_space<smem>>
    } else {
    }
    %c1_i32_39 = arith.constant 1 : i32
    %59 = arith.cmpi eq, %arg0, %c1_i32_39 : i32
    %c1_i32_40 = arith.constant 1 : i32
    %60 = arith.cmpi eq, %arg1, %c1_i32_40 : i32
    %61 = arith.andi %59, %60 : i1
    %62 = arith.extui %61 : i1 to i32
    %c0_i32_41 = arith.constant 0 : i32
    %63 = arith.cmpi ne, %62, %c0_i32_41 : i32
    scf.if %63 {
      %c0_42 = arith.constant 0 : index
      %64 = memref.load %arg16[%c0_42] : memref<1xf32, #tpu.memory_space<smem>>
      %c0_43 = arith.constant 0 : index
      %65 = memref.load %arg17[%c0_43] : memref<1xf32, #tpu.memory_space<smem>>
      %cst_44 = arith.constant 1.000000e+00 : f32
      %66 = arith.maximumf %65, %cst_44 : f32
      %67 = arith.divf %64, %66 : f32
      %c0_45 = arith.constant 0 : index
      %c0_46 = arith.constant 0 : index
      %68 = memref.load %arg8[%c0_45, %c0_46] : memref<1x1xf32, #tpu.memory_space<smem>>
      memref.store %67, %arg8[%c0_45, %c0_46] : memref<1x1xf32, #tpu.memory_space<smem>>
      %c0_47 = arith.constant 0 : index
      %69 = memref.load %arg18[%c0_47] : memref<1xf32, #tpu.memory_space<smem>>
      %c0_48 = arith.constant 0 : index
      %c0_49 = arith.constant 0 : index
      %70 = memref.load %arg9[%c0_48, %c0_49] : memref<1x1xf32, #tpu.memory_space<smem>>
      memref.store %69, %arg9[%c0_48, %c0_49] : memref<1x1xf32, #tpu.memory_space<smem>>
    } else {
    }
    return
  }
  func.func @transform_0(%arg0: i32, %arg1: i32) -> (i32, i32) {
    %c0_i32 = arith.constant 0 : i32
    %c0_i32_0 = arith.constant 0 : i32
    return %arg0, %c0_i32 : i32, i32
  }
  func.func @transform_1(%arg0: i32, %arg1: i32) -> (i32, i32) {
    %c0_i32 = arith.constant 0 : i32
    %c0_i32_0 = arith.constant 0 : i32
    %c0_i32_1 = arith.constant 0 : i32
    return %c0_i32, %c0_i32_0 : i32, i32
  }
  func.func @transform_2(%arg0: i32, %arg1: i32) -> (i32, i32) {
    %c0_i32 = arith.constant 0 : i32
    %c0_i32_0 = arith.constant 0 : i32
    %c0_i32_1 = arith.constant 0 : i32
    return %c0_i32, %c0_i32_0 : i32, i32
  }
  func.func @transform_3(%arg0: i32, %arg1: i32) -> (i32, i32) {
    %c0_i32 = arith.constant 0 : i32
    %c0_i32_0 = arith.constant 0 : i32
    return %arg0, %c0_i32 : i32, i32
  }
  func.func @transform_4(%arg0: i32, %arg1: i32) -> (i32, i32) {
    %c0_i32 = arith.constant 0 : i32
    %c0_i32_0 = arith.constant 0 : i32
    return %arg0, %c0_i32 : i32, i32
  }
  func.func @transform_5(%arg0: i32, %arg1: i32) -> (i32, i32) {
    %c0_i32 = arith.constant 0 : i32
    %c0_i32_0 = arith.constant 0 : i32
    return %c0_i32, %arg1 : i32, i32
  }
  func.func @transform_6(%arg0: i32, %arg1: i32) -> (i32, i32) {
    %c0_i32 = arith.constant 0 : i32
    %c0_i32_0 = arith.constant 0 : i32
    %c0_i32_1 = arith.constant 0 : i32
    return %c0_i32, %c0_i32_0 : i32, i32
  }
  func.func @transform_7(%arg0: i32, %arg1: i32) -> (i32, i32) {
    %c0_i32 = arith.constant 0 : i32
    %c0_i32_0 = arith.constant 0 : i32
    %c0_i32_1 = arith.constant 0 : i32
    return %c0_i32, %c0_i32_0 : i32, i32
  }
}

</mosaic_0001>

<llo_original>
// kernel: _lambda_.3
$region0: #{_lambda_.3}
  #allocation0 [shape = 'u32[]', space=smem, size = 0x4, offset = 0x4, fixed_abs, tag = 'smem constant byte address 0x4 - core index']
  #allocation1 [shape = 'u32[144,128]{1,0:T(1,128)}', space=vmem, size = 0x12000, scoped, tag = 'internal scratch']
  #allocation2 [shape = 'bf16[8,128]{1,0:T(8,128)(2,1)}', space=vmem, size = 0x800, scoped, tag = 'scratch operand']
  #allocation3 [shape = 'f32[8,1]{1,0:T(8,128)}', space=vmem, size = 0x1000, scoped, tag = 'scratch operand']
  #allocation4 [shape = 'f32[8,1]{1,0:T(8,128)}', space=vmem, size = 0x1000, scoped, tag = 'scratch operand']
  #allocation5 [shape = 'f32[8,1]{1,0:T(8,128)}', space=vmem, size = 0x1000, scoped, tag = 'scratch operand']
  #allocation6 [shape = 'f32[8,1]{1,0:T(8,128)}', space=vmem, size = 0x1000, scoped, tag = 'scratch operand']
  #allocation7 [shape = 's32[8,1]{1,0:T(8,128)}', space=vmem, size = 0x1000, scoped, tag = 'scratch operand']
  #allocation8 [shape = 'f32[1]{0:T(128)}', space=smem, size = 0x200, scoped, tag = 'scratch operand']
  #allocation9 [shape = 'f32[1]{0:T(128)}', space=smem, size = 0x200, scoped, tag = 'scratch operand']
  #allocation10 [shape = 'f32[1]{0:T(128)}', space=smem, size = 0x200, scoped, tag = 'scratch operand']
  %s0 = inlined_call_operand.vmem [shape: f32[16,128], index: 0, kind: input, shape index: {}]
  %s1 = inlined_call_operand.vmem [shape: f32[1,128], index: 1, kind: input, shape index: {}]
  %s2 = inlined_call_operand.vmem [shape: f32[1,128], index: 2, kind: input, shape index: {}]
  %s3 = inlined_call_operand.vmem [shape: s32[16,1], index: 3, kind: input, shape index: {}]
  %s4 = inlined_call_operand.vmem [shape: s32[16,1], index: 4, kind: input, shape index: {}]
  %s5 = inlined_call_operand.vmem [shape: bf16[128,256], index: 5, kind: input, shape index: {}]
  %s6 = inlined_call_operand.hbm [shape: f32[1,1], index: 6, kind: output, shape index: {0}]
  %s7 = inlined_call_operand.hbm [shape: f32[1,1], index: 7, kind: output, shape index: {1}]
  %8 = xla_tuple %s6, %s7
  %s9 = sld [smem:[#allocation0]]
  $region122: #{_lambda_.3} parent=0
    _
  %s11 = ssub.s32 1, %s9
  %s12 = scalar_select 0, %s11, %s9
  $region1: #{_lambda_.3} parent=0
    #allocation11 [shape = 'u8[65536]{0}', space=vmem, size = 0x10000, scoped, tag = 'input window, operand 5']
    #allocation12 [shape = 'u8[512]{0}', space=smem, size = 0x200, scoped, tag = 'output window, operand 0, single buffered']
    #allocation13 [shape = 's32[2]{0}', space=sflag, size = 0x8, scoped, tag = 'scoped memory for _lambda_.3']
    #allocation14 [shape = 'u8[512]{0}', space=smem, size = 0x200, scoped, tag = 'output window, operand 1, single buffered']
    #allocation15 [shape = 's32[1]{0}', space=sflag, size = 0x4, scoped, tag = 'scoped memory for _lambda_.3']
    %13 = vsyncpa [#allocation13], 0
    %14 = vsyncpa [#allocation15], 0
    loop: start=0, step=1, limit=6
    $region2: #{_lambda_.3} parent=1 // loop_pre_header
      _
    $region3: #{_lambda_.3} parent=1 // loop_header
      %s16 = sphi 0, %s20
      %p17 = scmp.ge.s32.totalorder %s16, 6
      %s23 = sphi 0, %s35
      %s24 = sphi 0, %s31
      %s25 = sphi 0, %s23
      %s26 = sphi 0, %s24
      %s27 = sphi 0, %s25
      %s28 = sphi 0, %s26
      %s38 = sphi 0, %s40
      %s41 = sphi 0, %s38
      %s42 = sphi 0, %s41
      %s58 = sphi 0, %s42
      %s62 = sphi 0, %s62
      %s64 = sphi 0, %s62
      %s65 = sphi 0, %s64
      %s79 = sphi 0, %s65
      %s83 = sphi 0, %s83
      %s85 = sphi 0, %s83
      %s86 = sphi 0, %s85
      %s100 = sphi 0, %s86
      %s106 = sphi 0, %s108
      %s109 = sphi 0, %s106
      %s110 = sphi 0, %s109
      %s126 = sphi 0, %s110
      %s132 = sphi 0, %s134
      %s135 = sphi 0, %s132
      %s136 = sphi 0, %s135
      %s152 = sphi 0, %s136
      %s158 = sphi 0, %s160
      %s161 = sphi 0, %s158
      %s162 = sphi 0, %s161
      %s178 = sphi 0, %s162
      %s182 = sphi 0, %s182
      %s184 = sphi 0, %s182
      %s185 = sphi 0, %s184
      %s199 = sphi 0, %s185
      %s203 = sphi 0, %s203
      %s205 = sphi 0, %s203
      %s206 = sphi 0, %s205
      %s220 = sphi 0, %s206
    $region4: #{_lambda_.3} parent=1 // loop_header_branch
      %19 = sbr.rel (%p17) target = $region8
    $region5: #{_lambda_.3} parent=1 // loop_body
      %s21 = ssub.s32 %s16, 1
      %s22 = ssub.s32 %s16, 2
      %s29 = sadd.s32 1, %s24
      %p30 = scmp.ge.s32.totalorder %s29, 2
      %s31 = scalar_select %p30, 0, %s29
      %s32 = sadd.s32 1, %s23
      %s33 = scalar_select %p30, %s32, %s23
      %p34 = scmp.ge.s32.totalorder %s33, 2
      %s35 = scalar_select %p34, 0, %s33
      %s36 = ssub.s32 %s23, %s35
      %p37 = scmp.eq.s32.totalorder %s36, 0
      %s39 = sadd.s32 %s38, 1
      %s40 = scalar_select %p37, %s38, %s39
      %p43 = pneg %p37
      %p44 = scmp.eq.s32.totalorder %s16, 3
      %p45 = por %p43, %p44
      %p46 = scmp.ne.s32.totalorder %s38, %s41
      %p47 = scmp.eq.s32.totalorder %s16, 0
      %p48 = por %p46, %p47
      %p49 = scmp.ne.s32.totalorder %s38, %s41
      %p50 = scmp.eq.s32.totalorder %s21, 3
      %p51 = por %p49, %p50
      %p52 = scmp.ne.s32.totalorder %s41, %s42
      %p53 = scmp.eq.s32.totalorder %s21, 0
      %p54 = por %p52, %p53
      %p55 = scmp.ne.s32.totalorder %s41, %s42
      %p56 = scmp.eq.s32.totalorder %s22, 3
      %p57 = por %p55, %p56
      %p59 = scmp.ne.s32.totalorder %s42, %s58
      %p60 = scmp.eq.s32.totalorder %s22, 0
      %p61 = por %p59, %p60
      %s63 = sadd.s32 %s62, 1
      %p66 = scmp.eq.s32.totalorder %s16, 3
      %p67 = scmp.ne.s32.totalorder %s62, %s64
      %p68 = scmp.eq.s32.totalorder %s16, 0
      %p69 = por %p67, %p68
      %p70 = scmp.ne.s32.totalorder %s62, %s64
      %p71 = scmp.eq.s32.totalorder %s21, 3
      %p72 = por %p70, %p71
      %p73 = scmp.ne.s32.totalorder %s64, %s65
      %p74 = scmp.eq.s32.totalorder %s21, 0
      %p75 = por %p73, %p74
      %p76 = scmp.ne.s32.totalorder %s64, %s65
      %p77 = scmp.eq.s32.totalorder %s22, 3
      %p78 = por %p76, %p77
      %p80 = scmp.ne.s32.totalorder %s65, %s79
      %p81 = scmp.eq.s32.totalorder %s22, 0
      %p82 = por %p80, %p81
      %s84 = sadd.s32 %s83, 1
      %p87 = scmp.eq.s32.totalorder %s16, 3
      %p88 = scmp.ne.s32.totalorder %s83, %s85
      %p89 = scmp.eq.s32.totalorder %s16, 0
      %p90 = por %p88, %p89
      %p91 = scmp.ne.s32.totalorder %s83, %s85
      %p92 = scmp.eq.s32.totalorder %s21, 3
      %p93 = por %p91, %p92
      %p94 = scmp.ne.s32.totalorder %s85, %s86
      %p95 = scmp.eq.s32.totalorder %s21, 0
      %p96 = por %p94, %p95
      %p97 = scmp.ne.s32.totalorder %s85, %s86
      %p98 = scmp.eq.s32.totalorder %s22, 3
      %p99 = por %p97, %p98
      %p101 = scmp.ne.s32.totalorder %s86, %s100
      %p102 = scmp.eq.s32.totalorder %s22, 0
      %p103 = por %p101, %p102
      %s104 = ssub.s32 %s23, %s35
      %p105 = scmp.eq.s32.totalorder %s104, 0
      %s107 = sadd.s32 %s106, 1
      %s108 = scalar_select %p105, %s106, %s107
      %p111 = pneg %p105
      %p112 = scmp.eq.s32.totalorder %s16, 3
      %p113 = por %p111, %p112
      %p114 = scmp.ne.s32.totalorder %s106, %s109
      %p115 = scmp.eq.s32.totalorder %s16, 0
      %p116 = por %p114, %p115
      %p117 = scmp.ne.s32.totalorder %s106, %s109
      %p118 = scmp.eq.s32.totalorder %s21, 3
      %p119 = por %p117, %p118
      %p120 = scmp.ne.s32.totalorder %s109, %s110
      %p121 = scmp.eq.s32.totalorder %s21, 0
      %p122 = por %p120, %p121
      %p123 = scmp.ne.s32.totalorder %s109, %s110
      %p124 = scmp.eq.s32.totalorder %s22, 3
      %p125 = por %p123, %p124
      %p127 = scmp.ne.s32.totalorder %s110, %s126
      %p128 = scmp.eq.s32.totalorder %s22, 0
      %p129 = por %p127, %p128
      %s130 = ssub.s32 %s23, %s35
      %p131 = scmp.eq.s32.totalorder %s130, 0
      %s133 = sadd.s32 %s132, 1
      %s134 = scalar_select %p131, %s132, %s133
      %p137 = pneg %p131
      %p138 = scmp.eq.s32.totalorder %s16, 3
      %p139 = por %p137, %p138
      %p140 = scmp.ne.s32.totalorder %s132, %s135
      %p141 = scmp.eq.s32.totalorder %s16, 0
      %p142 = por %p140, %p141
      %p143 = scmp.ne.s32.totalorder %s132, %s135
      %p144 = scmp.eq.s32.totalorder %s21, 3
      %p145 = por %p143, %p144
      %p146 = scmp.ne.s32.totalorder %s135, %s136
      %p147 = scmp.eq.s32.totalorder %s21, 0
      %p148 = por %p146, %p147
      %p149 = scmp.ne.s32.totalorder %s135, %s136
      %p150 = scmp.eq.s32.totalorder %s22, 3
      %p151 = por %p149, %p150
      %p153 = scmp.ne.s32.totalorder %s136, %s152
      %p154 = scmp.eq.s32.totalorder %s22, 0
      %p155 = por %p153, %p154
      %s156 = ssub.s32 %s24, %s31
      %p157 = scmp.eq.s32.totalorder %s156, 0
      %s159 = sadd.s32 %s158, 1
      %s160 = scalar_select %p157, %s158, %s159
      %p163 = pneg %p157
      %p164 = scmp.eq.s32.totalorder %s16, 3
      %p165 = por %p163, %p164
      %p166 = scmp.ne.s32.totalorder %s158, %s161
      %p167 = scmp.eq.s32.totalorder %s16, 0
      %p168 = por %p166, %p167
      %p169 = scmp.ne.s32.totalorder %s158, %s161
      %p170 = scmp.eq.s32.totalorder %s21, 3
      %p171 = por %p169, %p170
      %p172 = scmp.ne.s32.totalorder %s161, %s162
      %p173 = scmp.eq.s32.totalorder %s21, 0
      %p174 = por %p172, %p173
      %p175 = scmp.ne.s32.totalorder %s161, %s162
      %p176 = scmp.eq.s32.totalorder %s22, 3
      %p177 = por %p175, %p176
      %p179 = scmp.ne.s32.totalorder %s162, %s178
      %p180 = scmp.eq.s32.totalorder %s22, 0
      %p181 = por %p179, %p180
      %s183 = sadd.s32 %s182, 1
      %p186 = scmp.eq.s32.totalorder %s16, 3
      %p187 = scmp.ne.s32.totalorder %s182, %s184
      %p188 = scmp.eq.s32.totalorder %s16, 0
      %p189 = por %p187, %p188
      %p190 = scmp.ne.s32.totalorder %s182, %s184
      %p191 = scmp.eq.s32.totalorder %s21, 3
      %p192 = por %p190, %p191
      %p193 = scmp.ne.s32.totalorder %s184, %s185
      %p194 = scmp.eq.s32.totalorder %s21, 0
      %p195 = por %p193, %p194
      %p196 = scmp.ne.s32.totalorder %s184, %s185
      %p197 = scmp.eq.s32.totalorder %s22, 3
      %p198 = por %p196, %p197
      %p200 = scmp.ne.s32.totalorder %s185, %s199
      %p201 = scmp.eq.s32.totalorder %s22, 0
      %p202 = por %p200, %p201
      %s204 = sadd.s32 %s203, 1
      %p207 = scmp.eq.s32.totalorder %s16, 3
      %p208 = scmp.ne.s32.totalorder %s203, %s205
      %p209 = scmp.eq.s32.totalorder %s16, 0
      %p210 = por %p208, %p209
      %p211 = scmp.ne.s32.totalorder %s203, %s205
      %p212 = scmp.eq.s32.totalorder %s21, 3
      %p213 = por %p211, %p212
      %p214 = scmp.ne.s32.totalorder %s205, %s206
      %p215 = scmp.eq.s32.totalorder %s21, 0
      %p216 = por %p214, %p215
      %p217 = scmp.ne.s32.totalorder %s205, %s206
      %p218 = scmp.eq.s32.totalorder %s22, 3
      %p219 = por %p217, %p218
      %p221 = scmp.ne.s32.totalorder %s206, %s220
      %p222 = scmp.eq.s32.totalorder %s22, 0
      %p223 = por %p221, %p222
      %p224 = scmp.le.s32.totalorder 1, %s16
      %p225 = scmp.lt.s32.totalorder %s16, 5
      %p226 = pnand %p224, %p225
      %p227 = pneg %p226
      // Predicated region
      $region9: #{_lambda_.3} parent=5 // pred_check
        _
      $region10: #{_lambda_.3} parent=5 // pred_check_branch
        %229 = sbr.rel (%p226) target = $region12
      $region11: #{_lambda_.3} parent=5 // pred_region
        %s230 = ssub.s32 %s16, 1
        // Predicated region
        $region13: #{_lambda_.3} parent=11 // pred_check
          %p231 = pneg %p75
        $region14: #{_lambda_.3} parent=11 // pred_check_branch
          %233 = sbr.rel (%p231) target = $region16
        $region15: #{_lambda_.3} parent=11 // pred_region
          _
        $region16: #{_lambda_.3} parent=11 // pred_fallthru
          _
        // Predicated region
        $region17: #{_lambda_.3} parent=11 // pred_check
          %p234 = pneg %p96
        $region18: #{_lambda_.3} parent=11 // pred_check_branch
          %236 = sbr.rel (%p234) target = $region20
        $region19: #{_lambda_.3} parent=11 // pred_region
          _
        $region20: #{_lambda_.3} parent=11 // pred_fallthru
          _
      $region12: #{_lambda_.3} parent=5 // pred_fallthru
        _
      %p237 = scmp.lt.s32.totalorder %s16, 4
      // Predicated region
      $region21: #{_lambda_.3} parent=5 // pred_check
        %p238 = pneg %p237
      $region22: #{_lambda_.3} parent=5 // pred_check_branch
        %240 = sbr.rel (%p238) target = $region24
      $region23: #{_lambda_.3} parent=5 // pred_region
        // Predicated region
        $region25: #{_lambda_.3} parent=23 // pred_check
          %p241 = pneg %p48
        $region26: #{_lambda_.3} parent=23 // pred_check_branch
          %243 = sbr.rel (%p241) target = $region28
        $region27: #{_lambda_.3} parent=23 // pred_region
          %p244 = scmp.lt.s32.totalorder %s23, 1
          %s245 = scalar_select %p244, %s23, 1
          %s246 = smul.addr %s245, 8
          %s247 = scalar_lea.vmem %s0, %s246
        $region28: #{_lambda_.3} parent=23 // pred_fallthru
          _
        // Predicated region
        $region29: #{_lambda_.3} parent=23 // pred_check
          %p248 = pneg %p116
        $region30: #{_lambda_.3} parent=23 // pred_check_branch
          %250 = sbr.rel (%p248) target = $region32
        $region31: #{_lambda_.3} parent=23 // pred_region
          %p251 = scmp.lt.s32.totalorder %s23, 1
          %s252 = scalar_select %p251, %s23, 1
          %s253 = smul.addr %s252, 8
          %s254 = scalar_lea.vmem %s3, %s253
        $region32: #{_lambda_.3} parent=23 // pred_fallthru
          _
        // Predicated region
        $region33: #{_lambda_.3} parent=23 // pred_check
          %p255 = pneg %p142
        $region34: #{_lambda_.3} parent=23 // pred_check_branch
          %257 = sbr.rel (%p255) target = $region36
        $region35: #{_lambda_.3} parent=23 // pred_region
          %p258 = scmp.lt.s32.totalorder %s23, 1
          %s259 = scalar_select %p258, %s23, 1
          %s260 = smul.addr %s259, 8
          %s261 = scalar_lea.vmem %s4, %s260
        $region36: #{_lambda_.3} parent=23 // pred_fallthru
          _
        // Predicated region
        $region37: #{_lambda_.3} parent=23 // pred_check
          %p262 = pneg %p168
        $region38: #{_lambda_.3} parent=23 // pred_check_branch
          %264 = sbr.rel (%p262) target = $region40
        $region39: #{_lambda_.3} parent=23 // pred_region
          %s265 = sand.u32 %s158, 1
          %s266 = sand.u32 %s158, 1
          %s267 = smul.addr %s266, 64
          %s268 = scalar_lea.vmem [#allocation11], %s267
          %s269 = smul.addr %s24, 4
          %s270 = scalar_lea.vmem %s5, %s269
          // Predicated region
          $region41: #{_lambda_.3} parent=39 // pred_check
            _
          $region42: #{_lambda_.3} parent=39 // pred_check_branch
            %272 = sbr.rel (0) target = $region44
          $region43: #{_lambda_.3} parent=39 // pred_region
            // Predicated region
            $region45: #{_lambda_.3} parent=43 // pred_check
              _
            $region46: #{_lambda_.3} parent=43 // pred_check_branch
              %274 = sbr.rel target = $region48
            $region47: #{_lambda_.3} parent=43 // pred_region
              // Predicated region
              $region60: #{_lambda_.3} parent=47 // pred_check
                _
              $region61: #{_lambda_.3} parent=47 // pred_check_branch
                %319 = sbr.rel (0) target = $region63
              $region62: #{_lambda_.3} parent=47 // pred_region
                loop: start=0, step=1, limit=1
                $region64: #{_lambda_.3} parent=62 // loop_pre_header
                  _
                $region65: #{_lambda_.3} parent=62 // loop_header
                  %s321 = sphi 0, %s325
                  %p322 = scmp.ge.s32.totalorder %s321, 1
                  %s326 = sphi %s270, %s270
                  %s327 = sphi %s268, %s268
                $region66: #{_lambda_.3} parent=62 // loop_header_branch
                  %324 = sbr.rel (%p322) target = $region70
                $region67: #{_lambda_.3} parent=62 // loop_body
                  _
                $region68: #{_lambda_.3} parent=62 // loop_footer
                  %s325 = sadd.s32 1, %s321
                $region69: #{_lambda_.3} parent=62 // loop_footer_branch
                  %320 = sbr.rel target = $region65
                $region70: #{_lambda_.3} parent=62 // loop_exit
                  _
                loop: start=0, step=1, limit=1
                $region71: #{_lambda_.3} parent=62 // loop_pre_header
                  _
                $region72: #{_lambda_.3} parent=62 // loop_header
                  %s330 = sphi 0, %s334
                  %p331 = scmp.ge.s32.totalorder %s330, 1
                  %s335 = sphi %s270, %s270
                  %s336 = sphi %s268, %s268
                $region73: #{_lambda_.3} parent=62 // loop_header_branch
                  %333 = sbr.rel (%p331) target = $region77
                $region74: #{_lambda_.3} parent=62 // loop_body
                  %v337 = vld [vmem:[%s335] sm:$0xf]
                  %338 = vst [vmem:[%s336] sm:$0xf] %v337
                  %v339 = vld [vmem:[%s335 + $0x8] sm:$0xf]
                  %340 = vst [vmem:[%s336 + $0x4] sm:$0xf] %v339
                  %v341 = vld [vmem:[%s335 + $0x10] sm:$0xf]
                  %342 = vst [vmem:[%s336 + $0x8] sm:$0xf] %v341
                  %v343 = vld [vmem:[%s335 + $0x18] sm:$0xf]
                  %344 = vst [vmem:[%s336 + $0xc] sm:$0xf] %v343
                  %v345 = vld [vmem:[%s335 + $0x20] sm:$0xf]
                  %346 = vst [vmem:[%s336 + $0x10] sm:$0xf] %v345
                  %v347 = vld [vmem:[%s335 + $0x28] sm:$0xf]
                  %348 = vst [vmem:[%s336 + $0x14] sm:$0xf] %v347
                  %v349 = vld [vmem:[%s335 + $0x30] sm:$0xf]
                  %350 = vst [vmem:[%s336 + $0x18] sm:$0xf] %v349
                  %v351 = vld [vmem:[%s335 + $0x38] sm:$0xf]
                  %352 = vst [vmem:[%s336 + $0x1c] sm:$0xf] %v351
                  %v353 = vld [vmem:[%s335 + $0x40] sm:$0xf]
                  %354 = vst [vmem:[%s336 + $0x20] sm:$0xf] %v353
                  %v355 = vld [vmem:[%s335 + $0x48] sm:$0xf]
                  %356 = vst [vmem:[%s336 + $0x24] sm:$0xf] %v355
                  %v357 = vld [vmem:[%s335 + $0x50] sm:$0xf]
                  %358 = vst [vmem:[%s336 + $0x28] sm:$0xf] %v357
                  %v359 = vld [vmem:[%s335 + $0x58] sm:$0xf]
                  %360 = vst [vmem:[%s336 + $0x2c] sm:$0xf] %v359
                  %v361 = vld [vmem:[%s335 + $0x60] sm:$0xf]
                  %362 = vst [vmem:[%s336 + $0x30] sm:$0xf] %v361
                  %v363 = vld [vmem:[%s335 + $0x68] sm:$0xf]
                  %364 = vst [vmem:[%s336 + $0x34] sm:$0xf] %v363
                  %v365 = vld [vmem:[%s335 + $0x70] sm:$0xf]
                  %366 = vst [vmem:[%s336 + $0x38] sm:$0xf] %v365
                  %v367 = vld [vmem:[%s335 + $0x78] sm:$0xf]
                  %368 = vst [vmem:[%s336 + $0x3c] sm:$0xf] %v367
                $region75: #{_lambda_.3} parent=62 // loop_footer
                  %s334 = sadd.s32 1, %s330
                $region76: #{_lambda_.3} parent=62 // loop_footer_branch
                  %329 = sbr.rel target = $region72
                $region77: #{_lambda_.3} parent=62 // loop_exit
                  _
              $region63: #{_lambda_.3} parent=47 // pred_fallthru
                _
            $region48: #{_lambda_.3} parent=43 // pred_fallthru
              _
            // Predicated region
            $region49: #{_lambda_.3} parent=43 // pred_check
              _
            $region50: #{_lambda_.3} parent=43 // pred_check_branch
              %276 = sbr.rel (0) target = $region52
            $region51: #{_lambda_.3} parent=43 // pred_region
              loop: start=0, step=1, limit=1
              $region53: #{_lambda_.3} parent=51 // loop_pre_header
                _
              $region54: #{_lambda_.3} parent=51 // loop_header
                %s279 = sphi 0, %s283
                %p280 = scmp.ge.s32.totalorder %s279, 1
                %s284 = sphi %s270, %s270
                %s285 = sphi %s268, %s268
              $region55: #{_lambda_.3} parent=51 // loop_header_branch
                %282 = sbr.rel (%p280) target = $region59
              $region56: #{_lambda_.3} parent=51 // loop_body
                %v286 = vld [vmem:[%s284] sm:$0xf]
                %287 = vst [vmem:[%s285] sm:$0xf] %v286
                %v288 = vld [vmem:[%s284 + $0x8] sm:$0xf]
                %289 = vst [vmem:[%s285 + $0x4] sm:$0xf] %v288
                %v290 = vld [vmem:[%s284 + $0x10] sm:$0xf]
                %291 = vst [vmem:[%s285 + $0x8] sm:$0xf] %v290
                %v292 = vld [vmem:[%s284 + $0x18] sm:$0xf]
                %293 = vst [vmem:[%s285 + $0xc] sm:$0xf] %v292
                %v294 = vld [vmem:[%s284 + $0x20] sm:$0xf]
                %295 = vst [vmem:[%s285 + $0x10] sm:$0xf] %v294
                %v296 = vld [vmem:[%s284 + $0x28] sm:$0xf]
                %297 = vst [vmem:[%s285 + $0x14] sm:$0xf] %v296
                %v298 = vld [vmem:[%s284 + $0x30] sm:$0xf]
                %299 = vst [vmem:[%s285 + $0x18] sm:$0xf] %v298
                %v300 = vld [vmem:[%s284 + $0x38] sm:$0xf]
                %301 = vst [vmem:[%s285 + $0x1c] sm:$0xf] %v300
                %v302 = vld [vmem:[%s284 + $0x40] sm:$0xf]
                %303 = vst [vmem:[%s285 + $0x20] sm:$0xf] %v302
                %v304 = vld [vmem:[%s284 + $0x48] sm:$0xf]
                %305 = vst [vmem:[%s285 + $0x24] sm:$0xf] %v304
                %v306 = vld [vmem:[%s284 + $0x50] sm:$0xf]
                %307 = vst [vmem:[%s285 + $0x28] sm:$0xf] %v306
                %v308 = vld [vmem:[%s284 + $0x58] sm:$0xf]
                %309 = vst [vmem:[%s285 + $0x2c] sm:$0xf] %v308
                %v310 = vld [vmem:[%s284 + $0x60] sm:$0xf]
                %311 = vst [vmem:[%s285 + $0x30] sm:$0xf] %v310
                %v312 = vld [vmem:[%s284 + $0x68] sm:$0xf]
                %313 = vst [vmem:[%s285 + $0x34] sm:$0xf] %v312
                %v314 = vld [vmem:[%s284 + $0x70] sm:$0xf]
                %315 = vst [vmem:[%s285 + $0x38] sm:$0xf] %v314
                %v316 = vld [vmem:[%s284 + $0x78] sm:$0xf]
                %317 = vst [vmem:[%s285 + $0x3c] sm:$0xf] %v316
              $region57: #{_lambda_.3} parent=51 // loop_footer
                %s283 = sadd.s32 1, %s279
              $region58: #{_lambda_.3} parent=51 // loop_footer_branch
                %278 = sbr.rel target = $region54
              $region59: #{_lambda_.3} parent=51 // loop_exit
                _
            $region52: #{_lambda_.3} parent=43 // pred_fallthru
              _
          $region44: #{_lambda_.3} parent=39 // pred_fallthru
            _
          %369 = vnop
        $region40: #{_lambda_.3} parent=23 // pred_fallthru
          _
      $region24: #{_lambda_.3} parent=5 // pred_fallthru
        _
      %p370 = scmp.le.s32.totalorder 1, %s16
      %p371 = scmp.lt.s32.totalorder %s16, 5
      %p372 = pnand %p370, %p371
      %p373 = pneg %p372
      // Predicated region
      $region78: #{_lambda_.3} parent=5 // pred_check
        _
      $region79: #{_lambda_.3} parent=5 // pred_check_branch
        %375 = sbr.rel (%p372) target = $region81
      $region80: #{_lambda_.3} parent=5 // pred_region
        %s376 = ssub.s32 %s16, 1
        %s377 = sand.u32 %s161, 1
        %s378 = sand.u32 %s161, 1
        %s379 = smul.addr %s378, 64
        %s380 = scalar_lea.vmem [#allocation11], %s379
        // Predicated region
        $region82: #{_lambda_.3} parent=80 // pred_check
          %p381 = pneg %p174
        $region83: #{_lambda_.3} parent=80 // pred_check_branch
          %383 = sbr.rel (%p381) target = $region85
        $region84: #{_lambda_.3} parent=80 // pred_region
          _
        $region85: #{_lambda_.3} parent=80 // pred_fallthru
          _
        %p384 = scmp.lt.s32.totalorder %s25, 1
        %s385 = scalar_select %p384, %s25, 1
        %s386 = smul.addr %s385, 8
        %s387 = scalar_lea.vmem %s0, %s386
        %p388 = pneg %p54
        %p389 = pneg %p51
        %p390 = pneg %p75
        %p391 = pneg %p72
        %p392 = pneg %p96
        %p393 = pneg %p93
        %p394 = scmp.lt.s32.totalorder %s25, 1
        %s395 = scalar_select %p394, %s25, 1
        %s396 = smul.addr %s395, 8
        %s397 = scalar_lea.vmem %s3, %s396
        %p398 = pneg %p122
        %p399 = pneg %p119
        %p400 = scmp.lt.s32.totalorder %s25, 1
        %s401 = scalar_select %p400, %s25, 1
        %s402 = smul.addr %s401, 8
        %s403 = scalar_lea.vmem %s4, %s402
        %p404 = pneg %p148
        %p405 = pneg %p145
        %s406 = sand.u32 %s161, 1
        %s407 = sand.u32 %s161, 1
        %s408 = smul.addr %s407, 64
        %s409 = scalar_lea.vmem [#allocation11], %s408
        %p410 = pneg %p174
        %p411 = pneg %p171
        %p412 = pneg %p195
        %p413 = pneg %p192
        %p414 = pneg %p216
        %p415 = pneg %p213
        %p416 = scmp.lt.s32.totalorder %s25, 1
        %s417 = scalar_select %p416, %s25, 1
        %s418 = smul.addr %s417, 8
        %s419 = scalar_lea.vmem %s0, %s418
        %p420 = scmp.lt.s32.totalorder %s25, 1
        %s421 = scalar_select %p420, %s25, 1
        %s422 = smul.addr %s421, 8
        %s423 = scalar_lea.vmem %s3, %s422
        %p424 = scmp.lt.s32.totalorder %s25, 1
        %s425 = scalar_select %p424, %s25, 1
        %s426 = smul.addr %s425, 8
        %s427 = scalar_lea.vmem %s4, %s426
        %p429 = scmp.eq.s32.totalorder %s25, 0
        %p430 = scmp.eq.s32.totalorder %s26, 0
        %p431 = pnand %p429, %p430
        %p432 = pneg %p431
        // Predicated region
        $region86: #{_lambda_.3} parent=80 // pred_check
          _
        $region87: #{_lambda_.3} parent=80 // pred_check_branch
          %434 = sbr.rel (%p431) target = $region89
        $region88: #{_lambda_.3} parent=80 // pred_region
          %s435 = scalar_lea.smem [#allocation8], 0
          %436 = sst [smem:[%s435]] 0.0
          %s437 = scalar_lea.smem [#allocation9], 0
          %438 = sst [smem:[%s437]] 0.0
          %s439 = scalar_lea.smem [#allocation10], 0
          %440 = sst [smem:[%s439]] 0.0
        $region89: #{_lambda_.3} parent=80 // pred_fallthru
          _
        // Predicated region
        $region90: #{_lambda_.3} parent=80 // pred_check
          %p441 = pneg %p430
        $region91: #{_lambda_.3} parent=80 // pred_check_branch
          %443 = sbr.rel (%p441) target = $region93
        $region92: #{_lambda_.3} parent=80 // pred_region
          %v444 = vld [vmem:[%s419] sm:$0xff]
          %v445 = vld [vmem:[%s1] sm:$0x1]
          %v446 = vld [vmem:[%s2] sm:$0x1]
          %447 = vadd.xlane.f32.xlu0 %v444
          %v448 = vpop.xlane.xlu0 %447
          %v449 = vrcp.pop 128.0
          %v450 = vmul.f32 %v448, %v449
          %v451 = vsub.f32 %v444, %v450
          %v452 = vmul.f32 %v451, %v451
          %453 = vadd.xlane.f32.xlu0 %v452
          %v454 = vpop.xlane.xlu0 %453
          %v455 = vmul.f32 %v454, %v449
          %v456 = vadd.f32 %v455, 1e-05
          %v457 = vrsqrt.pop %v456
          %v458 = vmul.f32 %v451, %v457
          %v460 = vlaneseq
          %v461 = vshrl.u32 %v460, 7
          %v462 = vsub.s32 0, %v461
          %v463 = vrot.slane %v445, %v462
          %v465 = vmul.f32 %v458, %v463
          %v467 = vlaneseq
          %v468 = vshrl.u32 %v467, 7
          %v469 = vsub.s32 0, %v468
          %v470 = vrot.slane %v446, %v469
          %v472 = vadd.f32 %v465, %v470
          %v473 = vpack.c.bf16 %v472, %v472
          %474 = vst [vmem:[#allocation2] sm:$0xf] %v473
          %vm475 = vcmask 7168
          %476 = vst.msk [vmem:[#allocation3] sm:$0xff] %vm475, -1e+30
          %477 = vst.msk [vmem:[#allocation4] sm:$0xff] %vm475, 0.0
          %478 = vst.msk [vmem:[#allocation5] sm:$0xff] %vm475, 0.0
          %479 = vst.msk [vmem:[#allocation6] sm:$0xff] %vm475, -1e+30
          %480 = vst.msk [vmem:[#allocation7] sm:$0xff] %vm475, 0
        $region93: #{_lambda_.3} parent=80 // pred_fallthru
          _
        %v481 = vld [vmem:[#allocation2] sm:$0xf]
        %v482 = vld [vmem:[%s380] sm:$0xf]
        %v483 = vld [vmem:[%s380 + $0x4] sm:$0xf]
        %v484 = vld [vmem:[%s380 + $0x8] sm:$0xf]
        %v485 = vld [vmem:[%s380 + $0xc] sm:$0xf]
        %v486 = vld [vmem:[%s380 + $0x10] sm:$0xf]
        %v487 = vld [vmem:[%s380 + $0x14] sm:$0xf]
        %v488 = vld [vmem:[%s380 + $0x18] sm:$0xf]
        %v489 = vld [vmem:[%s380 + $0x1c] sm:$0xf]
        %v490 = vld [vmem:[%s380 + $0x20] sm:$0xf]
        %v491 = vld [vmem:[%s380 + $0x24] sm:$0xf]
        %v492 = vld [vmem:[%s380 + $0x28] sm:$0xf]
        %v493 = vld [vmem:[%s380 + $0x2c] sm:$0xf]
        %v494 = vld [vmem:[%s380 + $0x30] sm:$0xf]
        %v495 = vld [vmem:[%s380 + $0x34] sm:$0xf]
        %v496 = vld [vmem:[%s380 + $0x38] sm:$0xf]
        %v497 = vld [vmem:[%s380 + $0x3c] sm:$0xf]
        %v514 = vunpack.c.l.b16 %v482
        %v515 = vunpack.c.l.b16 %v483
        %v516 = vunpack.c.l.b16 %v484
        %v517 = vunpack.c.l.b16 %v485
        %v518 = vunpack.c.l.b16 %v486
        %v519 = vunpack.c.l.b16 %v487
        %v520 = vunpack.c.l.b16 %v488
        %v521 = vunpack.c.l.b16 %v489
        %v522 = vunpack.c.l.b16 %v490
        %v523 = vunpack.c.l.b16 %v491
        %v524 = vunpack.c.l.b16 %v492
        %v525 = vunpack.c.l.b16 %v493
        %v526 = vunpack.c.l.b16 %v494
        %v527 = vunpack.c.l.b16 %v495
        %v528 = vunpack.c.l.b16 %v496
        %v529 = vunpack.c.l.b16 %v497
        %v530 = vpack.c.b16 %v515, %v514
        %v531 = vpack.c.b16 %v517, %v516
        %v532 = vpack.c.b16 %v519, %v518
        %v533 = vpack.c.b16 %v521, %v520
        %v534 = vpack.c.b16 %v523, %v522
        %v535 = vpack.c.b16 %v525, %v524
        %v536 = vpack.c.b16 %v527, %v526
        %v537 = vpack.c.b16 %v529, %v528
        %546 = vmatprep.subr.bf16.mxu0 0
        %547 = vmatpush1.bf16.msra.mxu0 %v530
        %548 = vmatprep.subr.bf16.mxu0 0
        %549 = vmatpush1.bf16.msra.mxu0 %v531
        %550 = vmatprep.subr.bf16.mxu0 0
        %551 = vmatpush1.bf16.msra.mxu0 %v532
        %552 = vmatprep.subr.bf16.mxu0 0
        %553 = vmatpush1.bf16.msra.mxu0 %v533
        %554 = vmatprep.subr.bf16.mxu0 0
        %555 = vmatpush1.bf16.msra.mxu0 %v534
        %556 = vmatprep.subr.bf16.mxu0 0
        %557 = vmatpush1.bf16.msra.mxu0 %v535
        %558 = vmatprep.subr.bf16.mxu0 0
        %559 = vmatpush1.bf16.msra.mxu0 %v536
        %560 = vmatprep.subr.bf16.mxu0 0
        %561 = vmatpush1.bf16.msra.mxu0 %v537
        %562 = vmatprep.subr.bf16.mxu0 0
        %563 = vmatpush1.bf16.msra.mxu0 0
        %564 = vmatprep.subr.bf16.mxu0 0
        %565 = vmatpush1.bf16.msra.mxu0 0
        %566 = vmatprep.subr.bf16.mxu0 0
        %567 = vmatpush1.bf16.msra.mxu0 0
        %568 = vmatprep.subr.bf16.mxu0 0
        %569 = vmatpush1.bf16.msra.mxu0 0
        %570 = vmatprep.subr.bf16.mxu0 0
        %571 = vmatpush1.bf16.msra.mxu0 0
        %572 = vmatprep.subr.bf16.mxu0 0
        %573 = vmatpush1.bf16.msra.mxu0 0
        %574 = vmatprep.subr.bf16.mxu0 0
        %575 = vmatpush1.bf16.msra.mxu0 0
        %576 = vmatprep.subr.bf16.mxu0 0
        %577 = vmatpush1.bf16.msra.mxu0 0
        %578 = vmatprep.mubr.bf16.mxu0 0
        %579 = vmatmul.mubr.bf16.gmra.mrb[0].mxu0 %v481
        %v580 = vpop.f32.mrb[0].mxu0
        %v581 = vadd.f32 0.0, %v580
        %v582 = vpop.f32.mrb[0].mxu0
        %v583 = vpop.f32.mrb[0].mxu0
        %v584 = vpop.f32.mrb[0].mxu0
        %585 = vdwg.mxu0
        %v586 = vld [vmem:[%s427] sm:$0xff]
        %s587 = smul.u32 %s26, 128
        %v588 = vlaneseq
        %v589 = vand.u32 %v588, 127
        %v590 = vstv %s587
        %v591 = vadd.s32 %v590, %v589
        %592 = vmax.xlane.f32.xlu0 %v581
        %v593 = vpop.xlane.xlu0 %592
        %v594 = vld [vmem:[#allocation3] sm:$0xff]
        %v595 = vmax.f32 %v594, %v593
        %v596 = vld [vmem:[#allocation4] sm:$0xff]
        %v597 = vsub.f32 %v594, %v595
        %v598 = vmul.f32 %v597, 1.442695
        %v599 = vpow.pop %v598
        %v600 = vmul.f32 %v596, %v599
        %602 = vset.pattern.permute.xlu0 0
        %603 = vperm.xlu0 %602, %v595
        %v604 = vpop.permute.xlu0 %603
        %v606 = vsub.f32 %v581, %v604
        %v607 = vmul.f32 %v606, 1.442695
        %v608 = vpow.pop %v607
        %609 = vadd.xlane.f32.xlu0 %v608
        %v610 = vpop.xlane.xlu0 %609
        %v611 = vadd.f32 %v600, %v610
        %vm612 = vcmask 7168
        %613 = vst.msk [vmem:[#allocation4] sm:$0xff] %vm612, %v611
        %614 = vst.msk [vmem:[#allocation3] sm:$0xff] %vm612, %v595
        %v615 = vld [vmem:[#allocation5] sm:$0xff]
        %616 = vset.pattern.permute.xlu0 0
        %617 = vperm.xlu0 %616, %v586
        %v618 = vpop.permute.xlu0 %617
        %vm619 = vcmp.eq.s32.totalorder %v591, %v618
        %v620 = vsel %vm619, %v581, 0.0
        %621 = vadd.xlane.f32.xlu0 %v620
        %v622 = vpop.xlane.xlu0 %621
        %v623 = vadd.f32 %v615, %v622
        %624 = vst.msk [vmem:[#allocation5] sm:$0xff] %vm612, %v623
        %vm625 = vcmp.eq.f32.partialorder %v581, %v593
        %v626 = vsel %vm625, %v591, 256
        %v627 = vand.u32 %v626, 65535
        %v628 = vshra.s32 %v626, 16
        %v629 = vcvt.s32.f32 %v627
        %v630 = vcvt.s32.f32 %v628
        %631 = vmin.xlane.f32.xlu0 %v630
        %v632 = vpop.xlane.xlu0 %631
        %vm633 = vcmp.eq.f32.partialorder %v630, %v632
        %v634 = vsel %vm633, %v629, inf
        %635 = vmin.xlane.f32.xlu0 %v634
        %v636 = vpop.xlane.xlu0 %635
        %v637 = vcvt.f32.s32 %v636
        %v638 = vcvt.f32.s32 %v632
        %v639 = vshll.u32 %v638, 16
        %v640 = vadd.s32 %v639, %v637
        %v641 = vld [vmem:[#allocation6] sm:$0xff]
        %vm642 = vcmp.gt.f32.partialorder %v593, %v641
        %v643 = vld [vmem:[#allocation7] sm:$0xff]
        %v644 = vsel %vm642, %v640, %v643
        %645 = vst.msk [vmem:[#allocation7] sm:$0xff] %vm612, %v644
        %v646 = vld [vmem:[#allocation6] sm:$0xff]
        %v647 = vmax.f32 %v646, %v593
        %648 = vst.msk [vmem:[#allocation6] sm:$0xff] %vm612, %v647
        %p649 = scmp.eq.s32.totalorder %s26, 1
        // Predicated region
        $region94: #{_lambda_.3} parent=80 // pred_check
          %p650 = pneg %p649
        $region95: #{_lambda_.3} parent=80 // pred_check_branch
          %652 = sbr.rel (%p650) target = $region97
        $region96: #{_lambda_.3} parent=80 // pred_region
          %v653 = vld [vmem:[#allocation3] sm:$0xff]
          %v654 = vld [vmem:[#allocation4] sm:$0xff]
          %v655 = vlog2.pop %v654
          %v656 = vmul.f32 %v655, 0.6931472
          %v657 = vadd.f32 %v653, %v656
          %vm658 = vcmp.ne.s32.totalorder %v586, 4294967196
          %v659 = vsel %vm658, 1, 0
          %v660 = vcvt.s32.f32 %v659
          %s661 = sld [smem:[#allocation8]]
          %v662 = vld [vmem:[#allocation5] sm:$0xff]
          %v663 = vsub.f32 %v657, %v662
          %v664 = vmul.f32 %v663, %v660
          %v665 = vsel %vm612, %v664, 0.0
          %666 = vadd.xlane.f32.xlu0 %v665
          %v667 = vpop.xlane.xlu0 %666
          %v668 = vrot.slane %v667, 4
          %v669 = vadd.f32 %v667, %v668
          %v670 = vrot.slane %v669, 2
          %v671 = vadd.f32 %v669, %v670
          %v672 = vrot.slane %v671, 1
          %v673 = vadd.f32 %v671, %v672
          %s674 = vtos %v673
          %s675 = sadd.f32 %s661, %s674
          %s676 = scalar_lea.smem [#allocation8], 0
          %677 = sst [smem:[%s676]] %s675
          %s678 = sld [smem:[#allocation9]]
          %v679 = vsel %vm612, %v660, 0.0
          %680 = vadd.xlane.f32.xlu0 %v679
          %v681 = vpop.xlane.xlu0 %680
          %v682 = vrot.slane %v681, 4
          %v683 = vadd.f32 %v681, %v682
          %v684 = vrot.slane %v683, 2
          %v685 = vadd.f32 %v683, %v684
          %v686 = vrot.slane %v685, 1
          %v687 = vadd.f32 %v685, %v686
          %s688 = vtos %v687
          %s689 = sadd.f32 %s678, %s688
          %s690 = scalar_lea.smem [#allocation9], 0
          %691 = sst [smem:[%s690]] %s689
          %s692 = sld [smem:[#allocation10]]
          %v693 = vld [vmem:[#allocation7] sm:$0xff]
          %v694 = vld [vmem:[%s423] sm:$0xff]
          %vm695 = vcmp.eq.s32.totalorder %v693, %v694
          %v696 = vsel %vm695, 1, 0
          %v697 = vcvt.s32.f32 %v696
          %v698 = vsel %vm612, %v697, 0.0
          %699 = vadd.xlane.f32.xlu0 %v698
          %v700 = vpop.xlane.xlu0 %699
          %v701 = vrot.slane %v700, 4
          %v702 = vadd.f32 %v700, %v701
          %v703 = vrot.slane %v702, 2
          %v704 = vadd.f32 %v702, %v703
          %v705 = vrot.slane %v704, 1
          %v706 = vadd.f32 %v704, %v705
          %s707 = vtos %v706
          %s708 = sadd.f32 %s692, %s707
          %s709 = scalar_lea.smem [#allocation10], 0
          %710 = sst [smem:[%s709]] %s708
        $region97: #{_lambda_.3} parent=80 // pred_fallthru
          _
        %p711 = scmp.eq.s32.totalorder %s25, 1
        %p712 = pnand %p711, %p649
        %p713 = pneg %p712
        // Predicated region
        $region98: #{_lambda_.3} parent=80 // pred_check
          _
        $region99: #{_lambda_.3} parent=80 // pred_check_branch
          %715 = sbr.rel (%p712) target = $region101
        $region100: #{_lambda_.3} parent=80 // pred_region
          %s716 = sld [smem:[#allocation8]]
          %s717 = sld [smem:[#allocation9]]
          %s718 = smax.f32 %s717, 1.0
          %v719 = vstv %s718
          %v720 = vrcp.pop %v719
          %s721 = vtos %v720
          %s722 = smul.f32 %s716, %s721
          %s723 = scalar_lea.smem [#allocation12], 0
          %724 = sst [smem:[%s723]] %s722
          %s725 = sld [smem:[#allocation10]]
          %s726 = scalar_lea.smem [#allocation14], 0
          %727 = sst [smem:[%s726]] %s725
        $region101: #{_lambda_.3} parent=80 // pred_fallthru
          _
        // Predicated region
        $region102: #{_lambda_.3} parent=80 // pred_check
          %p728 = pneg %p192
        $region103: #{_lambda_.3} parent=80 // pred_check_branch
          %730 = sbr.rel (%p728) target = $region105
        $region104: #{_lambda_.3} parent=80 // pred_region
          %s732 = ssub.s32 16, 16
          %733 = vsyncadd [#allocation13], %s732
          %736 = dma.smem_to_hbm [#allocation12], 16, %s6, [#allocation13]
        $region105: #{_lambda_.3} parent=80 // pred_fallthru
          _
        // Predicated region
        $region106: #{_lambda_.3} parent=80 // pred_check
          %p737 = pneg %p213
        $region107: #{_lambda_.3} parent=80 // pred_check_branch
          %739 = sbr.rel (%p737) target = $region109
        $region108: #{_lambda_.3} parent=80 // pred_region
          %s741 = ssub.s32 16, 16
          %742 = vsyncadd [#allocation15], %s741
          %745 = dma.smem_to_hbm [#allocation14], 16, %s7, [#allocation15]
        $region109: #{_lambda_.3} parent=80 // pred_fallthru
          _
        // Predicated region
        $region110: #{_lambda_.3} parent=80 // pred_check
          %p746 = pneg %p192
        $region111: #{_lambda_.3} parent=80 // pred_check_branch
          %748 = sbr.rel (%p746) target = $region113
        $region112: #{_lambda_.3} parent=80 // pred_region
          %749 = dma.done [#allocation13], 16
        $region113: #{_lambda_.3} parent=80 // pred_fallthru
          _
        // Predicated region
        $region114: #{_lambda_.3} parent=80 // pred_check
          %p750 = pneg %p213
        $region115: #{_lambda_.3} parent=80 // pred_check_branch
          %752 = sbr.rel (%p750) target = $region117
        $region116: #{_lambda_.3} parent=80 // pred_region
          %753 = dma.done [#allocation15], 16
        $region117: #{_lambda_.3} parent=80 // pred_fallthru
          _
        %754 = sfence
      $region81: #{_lambda_.3} parent=5 // pred_fallthru
        _
      %p755 = scmp.le.s32.totalorder 2, %s16
      // Predicated region
      $region118: #{_lambda_.3} parent=5 // pred_check
        %p756 = pneg %p755
      $region119: #{_lambda_.3} parent=5 // pred_check_branch
        %758 = sbr.rel (%p756) target = $region121
      $region120: #{_lambda_.3} parent=5 // pred_region
        %s759 = ssub.s32 %s16, 2
      $region121: #{_lambda_.3} parent=5 // pred_fallthru
        _
    $region6: #{_lambda_.3} parent=1 // loop_footer
      %s20 = sadd.s32 1, %s16
    $region7: #{_lambda_.3} parent=1 // loop_footer_branch
      %15 = sbr.rel target = $region3
    $region8: #{_lambda_.3} parent=1 // loop_exit
      _
    %760 = vsyncpa [#allocation13], 1
    %s761 = scalar_lea.sflag [#allocation13], 1
    %762 = vsyncpa %s761, 1
    %763 = vsyncpa [#allocation15], 1

// kernel: _lambda_.2
$region0: #{_lambda_.2}
  #allocation0 [shape = 'u32[]', space=smem, size = 0x4, offset = 0x4, fixed_abs, tag = 'smem constant byte address 0x4 - core index']
  #allocation1 [shape = 'u32[144,128]{1,0:T(1,128)}', space=vmem, size = 0x12000, scoped, tag = 'internal scratch']
  %s0 = inlined_call_operand.vmem [shape: f32[2,8,128], index: 0, kind: input, shape index: {}]
  %s1 = inlined_call_operand.vmem [shape: f32[2,1,128], index: 1, kind: input, shape index: {}]
  %s2 = inlined_call_operand.vmem [shape: f32[2,1,128], index: 2, kind: input, shape index: {}]
  %s3 = inlined_call_operand.hbm [shape: bf16[2,128,384], index: 3, kind: input, shape index: {}]
  %s4 = inlined_call_operand.vmem [shape: f32[2,1,384], index: 4, kind: input, shape index: {}]
  %s5 = inlined_call_operand.vmem [shape: bf16[2,128,128], index: 5, kind: input, shape index: {}]
  %s6 = inlined_call_operand.vmem [shape: f32[2,1,128], index: 6, kind: input, shape index: {}]
  %s7 = inlined_call_operand.vmem [shape: f32[2,1,128], index: 7, kind: input, shape index: {}]
  %s8 = inlined_call_operand.vmem [shape: f32[2,1,128], index: 8, kind: input, shape index: {}]
  %s9 = inlined_call_operand.hbm [shape: bf16[2,128,512], index: 9, kind: input, shape index: {}]
  %s10 = inlined_call_operand.vmem [shape: f32[2,1,512], index: 10, kind: input, shape index: {}]
  %s11 = inlined_call_operand.hbm [shape: bf16[2,512,128], index: 11, kind: input, shape index: {}]
  %s12 = inlined_call_operand.vmem [shape: f32[2,1,128], index: 12, kind: input, shape index: {}]
  %s13 = inlined_call_operand.vmem [shape: f32[2,8,128], index: 13, kind: output, shape index: {}]
  %s14 = sld [smem:[#allocation0]]
  $region101: #{_lambda_.2} parent=0
    _
  %s16 = ssub.s32 1, %s14
  %s17 = scalar_select 0, %s16, %s14
  $region1: #{_lambda_.2} parent=0
    #allocation2 [shape = 'u8[196608]{0}', space=vmem, size = 0x30000, scoped, tag = 'input window, operand 3']
    #allocation3 [shape = 's32[2]{0}', space=sflag, size = 0x8, scoped, tag = 'scoped memory for _lambda_.2']
    #allocation4 [shape = 'u8[262144]{0}', space=vmem, size = 0x40000, scoped, tag = 'input window, operand 9']
    #allocation5 [shape = 's32[2]{0}', space=sflag, size = 0x8, scoped, tag = 'scoped memory for _lambda_.2']
    #allocation6 [shape = 'u8[262144]{0}', space=vmem, size = 0x40000, scoped, tag = 'input window, operand 11']
    %18 = vsyncpa [#allocation3], 0
    %s19 = scalar_lea.sflag [#allocation3], 1
    %20 = vsyncpa %s19, 0
    %21 = vsyncpa [#allocation5], 0
    %s22 = scalar_lea.sflag [#allocation5], 1
    %23 = vsyncpa %s22, 0
    loop: start=0, step=1, limit=6
    $region2: #{_lambda_.2} parent=1 // loop_pre_header
      _
    $region3: #{_lambda_.2} parent=1 // loop_header
      %s25 = sphi 0, %s29
      %p26 = scmp.ge.s32.totalorder %s25, 6
      %s32 = sphi 0, %s44
      %s33 = sphi 0, %s40
      %s34 = sphi 0, %s32
      %s35 = sphi 0, %s33
      %s36 = sphi 0, %s34
      %s37 = sphi 0, %s35
      %s47 = sphi 0, %s49
      %s50 = sphi 0, %s47
      %s51 = sphi 0, %s50
      %s67 = sphi 0, %s51
      %s73 = sphi 0, %s75
      %s76 = sphi 0, %s73
      %s77 = sphi 0, %s76
      %s93 = sphi 0, %s77
      %s99 = sphi 0, %s101
      %s102 = sphi 0, %s99
      %s103 = sphi 0, %s102
      %s119 = sphi 0, %s103
      %s125 = sphi 0, %s127
      %s128 = sphi 0, %s125
      %s129 = sphi 0, %s128
      %s145 = sphi 0, %s129
      %s151 = sphi 0, %s153
      %s154 = sphi 0, %s151
      %s155 = sphi 0, %s154
      %s171 = sphi 0, %s155
      %s177 = sphi 0, %s179
      %s180 = sphi 0, %s177
      %s181 = sphi 0, %s180
      %s197 = sphi 0, %s181
      %s203 = sphi 0, %s205
      %s206 = sphi 0, %s203
      %s207 = sphi 0, %s206
      %s223 = sphi 0, %s207
      %s229 = sphi 0, %s231
      %s232 = sphi 0, %s229
      %s233 = sphi 0, %s232
      %s249 = sphi 0, %s233
      %s255 = sphi 0, %s257
      %s258 = sphi 0, %s255
      %s259 = sphi 0, %s258
      %s275 = sphi 0, %s259
      %s281 = sphi 0, %s283
      %s284 = sphi 0, %s281
      %s285 = sphi 0, %s284
      %s301 = sphi 0, %s285
      %s307 = sphi 0, %s309
      %s310 = sphi 0, %s307
      %s311 = sphi 0, %s310
      %s327 = sphi 0, %s311
      %s333 = sphi 0, %s335
      %s336 = sphi 0, %s333
      %s337 = sphi 0, %s336
      %s353 = sphi 0, %s337
      %s359 = sphi 0, %s361
      %s362 = sphi 0, %s359
      %s363 = sphi 0, %s362
      %s379 = sphi 0, %s363
      %s385 = sphi 0, %s387
      %s388 = sphi 0, %s385
      %s389 = sphi 0, %s388
      %s405 = sphi 0, %s389
    $region4: #{_lambda_.2} parent=1 // loop_header_branch
      %28 = sbr.rel (%p26) target = $region8
    $region5: #{_lambda_.2} parent=1 // loop_body
      %s30 = ssub.s32 %s25, 1
      %s31 = ssub.s32 %s25, 2
      %s38 = sadd.s32 1, %s33
      %p39 = scmp.ge.s32.totalorder %s38, 2
      %s40 = scalar_select %p39, 0, %s38
      %s41 = sadd.s32 1, %s32
      %s42 = scalar_select %p39, %s41, %s32
      %p43 = scmp.ge.s32.totalorder %s42, 2
      %s44 = scalar_select %p43, 0, %s42
      %s45 = ssub.s32 %s32, %s44
      %p46 = scmp.eq.s32.totalorder %s45, 0
      %s48 = sadd.s32 %s47, 1
      %s49 = scalar_select %p46, %s47, %s48
      %p52 = pneg %p46
      %p53 = scmp.eq.s32.totalorder %s25, 3
      %p54 = por %p52, %p53
      %p55 = scmp.ne.s32.totalorder %s47, %s50
      %p56 = scmp.eq.s32.totalorder %s25, 0
      %p57 = por %p55, %p56
      %p58 = scmp.ne.s32.totalorder %s47, %s50
      %p59 = scmp.eq.s32.totalorder %s30, 3
      %p60 = por %p58, %p59
      %p61 = scmp.ne.s32.totalorder %s50, %s51
      %p62 = scmp.eq.s32.totalorder %s30, 0
      %p63 = por %p61, %p62
      %p64 = scmp.ne.s32.totalorder %s50, %s51
      %p65 = scmp.eq.s32.totalorder %s31, 3
      %p66 = por %p64, %p65
      %p68 = scmp.ne.s32.totalorder %s51, %s67
      %p69 = scmp.eq.s32.totalorder %s31, 0
      %p70 = por %p68, %p69
      %s71 = ssub.s32 %s33, %s40
      %p72 = scmp.eq.s32.totalorder %s71, 0
      %s74 = sadd.s32 %s73, 1
      %s75 = scalar_select %p72, %s73, %s74
      %p78 = pneg %p72
      %p79 = scmp.eq.s32.totalorder %s25, 3
      %p80 = por %p78, %p79
      %p81 = scmp.ne.s32.totalorder %s73, %s76
      %p82 = scmp.eq.s32.totalorder %s25, 0
      %p83 = por %p81, %p82
      %p84 = scmp.ne.s32.totalorder %s73, %s76
      %p85 = scmp.eq.s32.totalorder %s30, 3
      %p86 = por %p84, %p85
      %p87 = scmp.ne.s32.totalorder %s76, %s77
      %p88 = scmp.eq.s32.totalorder %s30, 0
      %p89 = por %p87, %p88
      %p90 = scmp.ne.s32.totalorder %s76, %s77
      %p91 = scmp.eq.s32.totalorder %s31, 3
      %p92 = por %p90, %p91
      %p94 = scmp.ne.s32.totalorder %s77, %s93
      %p95 = scmp.eq.s32.totalorder %s31, 0
      %p96 = por %p94, %p95
      %s97 = ssub.s32 %s33, %s40
      %p98 = scmp.eq.s32.totalorder %s97, 0
      %s100 = sadd.s32 %s99, 1
      %s101 = scalar_select %p98, %s99, %s100
      %p104 = pneg %p98
      %p105 = scmp.eq.s32.totalorder %s25, 3
      %p106 = por %p104, %p105
      %p107 = scmp.ne.s32.totalorder %s99, %s102
      %p108 = scmp.eq.s32.totalorder %s25, 0
      %p109 = por %p107, %p108
      %p110 = scmp.ne.s32.totalorder %s99, %s102
      %p111 = scmp.eq.s32.totalorder %s30, 3
      %p112 = por %p110, %p111
      %p113 = scmp.ne.s32.totalorder %s102, %s103
      %p114 = scmp.eq.s32.totalorder %s30, 0
      %p115 = por %p113, %p114
      %p116 = scmp.ne.s32.totalorder %s102, %s103
      %p117 = scmp.eq.s32.totalorder %s31, 3
      %p118 = por %p116, %p117
      %p120 = scmp.ne.s32.totalorder %s103, %s119
      %p121 = scmp.eq.s32.totalorder %s31, 0
      %p122 = por %p120, %p121
      %s123 = ssub.s32 %s33, %s40
      %p124 = scmp.eq.s32.totalorder %s123, 0
      %s126 = sadd.s32 %s125, 1
      %s127 = scalar_select %p124, %s125, %s126
      %p130 = pneg %p124
      %p131 = scmp.eq.s32.totalorder %s25, 3
      %p132 = por %p130, %p131
      %p133 = scmp.ne.s32.totalorder %s125, %s128
      %p134 = scmp.eq.s32.totalorder %s25, 0
      %p135 = por %p133, %p134
      %p136 = scmp.ne.s32.totalorder %s125, %s128
      %p137 = scmp.eq.s32.totalorder %s30, 3
      %p138 = por %p136, %p137
      %p139 = scmp.ne.s32.totalorder %s128, %s129
      %p140 = scmp.eq.s32.totalorder %s30, 0
      %p141 = por %p139, %p140
      %p142 = scmp.ne.s32.totalorder %s128, %s129
      %p143 = scmp.eq.s32.totalorder %s31, 3
      %p144 = por %p142, %p143
      %p146 = scmp.ne.s32.totalorder %s129, %s145
      %p147 = scmp.eq.s32.totalorder %s31, 0
      %p148 = por %p146, %p147
      %s149 = ssub.s32 %s33, %s40
      %p150 = scmp.eq.s32.totalorder %s149, 0
      %s152 = sadd.s32 %s151, 1
      %s153 = scalar_select %p150, %s151, %s152
      %p156 = pneg %p150
      %p157 = scmp.eq.s32.totalorder %s25, 3
      %p158 = por %p156, %p157
      %p159 = scmp.ne.s32.totalorder %s151, %s154
      %p160 = scmp.eq.s32.totalorder %s25, 0
      %p161 = por %p159, %p160
      %p162 = scmp.ne.s32.totalorder %s151, %s154
      %p163 = scmp.eq.s32.totalorder %s30, 3
      %p164 = por %p162, %p163
      %p165 = scmp.ne.s32.totalorder %s154, %s155
      %p166 = scmp.eq.s32.totalorder %s30, 0
      %p167 = por %p165, %p166
      %p168 = scmp.ne.s32.totalorder %s154, %s155
      %p169 = scmp.eq.s32.totalorder %s31, 3
      %p170 = por %p168, %p169
      %p172 = scmp.ne.s32.totalorder %s155, %s171
      %p173 = scmp.eq.s32.totalorder %s31, 0
      %p174 = por %p172, %p173
      %s175 = ssub.s32 %s33, %s40
      %p176 = scmp.eq.s32.totalorder %s175, 0
      %s178 = sadd.s32 %s177, 1
      %s179 = scalar_select %p176, %s177, %s178
      %p182 = pneg %p176
      %p183 = scmp.eq.s32.totalorder %s25, 3
      %p184 = por %p182, %p183
      %p185 = scmp.ne.s32.totalorder %s177, %s180
      %p186 = scmp.eq.s32.totalorder %s25, 0
      %p187 = por %p185, %p186
      %p188 = scmp.ne.s32.totalorder %s177, %s180
      %p189 = scmp.eq.s32.totalorder %s30, 3
      %p190 = por %p188, %p189
      %p191 = scmp.ne.s32.totalorder %s180, %s181
      %p192 = scmp.eq.s32.totalorder %s30, 0
      %p193 = por %p191, %p192
      %p194 = scmp.ne.s32.totalorder %s180, %s181
      %p195 = scmp.eq.s32.totalorder %s31, 3
      %p196 = por %p194, %p195
      %p198 = scmp.ne.s32.totalorder %s181, %s197
      %p199 = scmp.eq.s32.totalorder %s31, 0
      %p200 = por %p198, %p199
      %s201 = ssub.s32 %s33, %s40
      %p202 = scmp.eq.s32.totalorder %s201, 0
      %s204 = sadd.s32 %s203, 1
      %s205 = scalar_select %p202, %s203, %s204
      %p208 = pneg %p202
      %p209 = scmp.eq.s32.totalorder %s25, 3
      %p210 = por %p208, %p209
      %p211 = scmp.ne.s32.totalorder %s203, %s206
      %p212 = scmp.eq.s32.totalorder %s25, 0
      %p213 = por %p211, %p212
      %p214 = scmp.ne.s32.totalorder %s203, %s206
      %p215 = scmp.eq.s32.totalorder %s30, 3
      %p216 = por %p214, %p215
      %p217 = scmp.ne.s32.totalorder %s206, %s207
      %p218 = scmp.eq.s32.totalorder %s30, 0
      %p219 = por %p217, %p218
      %p220 = scmp.ne.s32.totalorder %s206, %s207
      %p221 = scmp.eq.s32.totalorder %s31, 3
      %p222 = por %p220, %p221
      %p224 = scmp.ne.s32.totalorder %s207, %s223
      %p225 = scmp.eq.s32.totalorder %s31, 0
      %p226 = por %p224, %p225
      %s227 = ssub.s32 %s33, %s40
      %p228 = scmp.eq.s32.totalorder %s227, 0
      %s230 = sadd.s32 %s229, 1
      %s231 = scalar_select %p228, %s229, %s230
      %p234 = pneg %p228
      %p235 = scmp.eq.s32.totalorder %s25, 3
      %p236 = por %p234, %p235
      %p237 = scmp.ne.s32.totalorder %s229, %s232
      %p238 = scmp.eq.s32.totalorder %s25, 0
      %p239 = por %p237, %p238
      %p240 = scmp.ne.s32.totalorder %s229, %s232
      %p241 = scmp.eq.s32.totalorder %s30, 3
      %p242 = por %p240, %p241
      %p243 = scmp.ne.s32.totalorder %s232, %s233
      %p244 = scmp.eq.s32.totalorder %s30, 0
      %p245 = por %p243, %p244
      %p246 = scmp.ne.s32.totalorder %s232, %s233
      %p247 = scmp.eq.s32.totalorder %s31, 3
      %p248 = por %p246, %p247
      %p250 = scmp.ne.s32.totalorder %s233, %s249
      %p251 = scmp.eq.s32.totalorder %s31, 0
      %p252 = por %p250, %p251
      %s253 = ssub.s32 %s33, %s40
      %p254 = scmp.eq.s32.totalorder %s253, 0
      %s256 = sadd.s32 %s255, 1
      %s257 = scalar_select %p254, %s255, %s256
      %p260 = pneg %p254
      %p261 = scmp.eq.s32.totalorder %s25, 3
      %p262 = por %p260, %p261
      %p263 = scmp.ne.s32.totalorder %s255, %s258
      %p264 = scmp.eq.s32.totalorder %s25, 0
      %p265 = por %p263, %p264
      %p266 = scmp.ne.s32.totalorder %s255, %s258
      %p267 = scmp.eq.s32.totalorder %s30, 3
      %p268 = por %p266, %p267
      %p269 = scmp.ne.s32.totalorder %s258, %s259
      %p270 = scmp.eq.s32.totalorder %s30, 0
      %p271 = por %p269, %p270
      %p272 = scmp.ne.s32.totalorder %s258, %s259
      %p273 = scmp.eq.s32.totalorder %s31, 3
      %p274 = por %p272, %p273
      %p276 = scmp.ne.s32.totalorder %s259, %s275
      %p277 = scmp.eq.s32.totalorder %s31, 0
      %p278 = por %p276, %p277
      %s279 = ssub.s32 %s33, %s40
      %p280 = scmp.eq.s32.totalorder %s279, 0
      %s282 = sadd.s32 %s281, 1
      %s283 = scalar_select %p280, %s281, %s282
      %p286 = pneg %p280
      %p287 = scmp.eq.s32.totalorder %s25, 3
      %p288 = por %p286, %p287
      %p289 = scmp.ne.s32.totalorder %s281, %s284
      %p290 = scmp.eq.s32.totalorder %s25, 0
      %p291 = por %p289, %p290
      %p292 = scmp.ne.s32.totalorder %s281, %s284
      %p293 = scmp.eq.s32.totalorder %s30, 3
      %p294 = por %p292, %p293
      %p295 = scmp.ne.s32.totalorder %s284, %s285
      %p296 = scmp.eq.s32.totalorder %s30, 0
      %p297 = por %p295, %p296
      %p298 = scmp.ne.s32.totalorder %s284, %s285
      %p299 = scmp.eq.s32.totalorder %s31, 3
      %p300 = por %p298, %p299
      %p302 = scmp.ne.s32.totalorder %s285, %s301
      %p303 = scmp.eq.s32.totalorder %s31, 0
      %p304 = por %p302, %p303
      %s305 = ssub.s32 %s33, %s40
      %p306 = scmp.eq.s32.totalorder %s305, 0
      %s308 = sadd.s32 %s307, 1
      %s309 = scalar_select %p306, %s307, %s308
      %p312 = pneg %p306
      %p313 = scmp.eq.s32.totalorder %s25, 3
      %p314 = por %p312, %p313
      %p315 = scmp.ne.s32.totalorder %s307, %s310
      %p316 = scmp.eq.s32.totalorder %s25, 0
      %p317 = por %p315, %p316
      %p318 = scmp.ne.s32.totalorder %s307, %s310
      %p319 = scmp.eq.s32.totalorder %s30, 3
      %p320 = por %p318, %p319
      %p321 = scmp.ne.s32.totalorder %s310, %s311
      %p322 = scmp.eq.s32.totalorder %s30, 0
      %p323 = por %p321, %p322
      %p324 = scmp.ne.s32.totalorder %s310, %s311
      %p325 = scmp.eq.s32.totalorder %s31, 3
      %p326 = por %p324, %p325
      %p328 = scmp.ne.s32.totalorder %s311, %s327
      %p329 = scmp.eq.s32.totalorder %s31, 0
      %p330 = por %p328, %p329
      %s331 = ssub.s32 %s33, %s40
      %p332 = scmp.eq.s32.totalorder %s331, 0
      %s334 = sadd.s32 %s333, 1
      %s335 = scalar_select %p332, %s333, %s334
      %p338 = pneg %p332
      %p339 = scmp.eq.s32.totalorder %s25, 3
      %p340 = por %p338, %p339
      %p341 = scmp.ne.s32.totalorder %s333, %s336
      %p342 = scmp.eq.s32.totalorder %s25, 0
      %p343 = por %p341, %p342
      %p344 = scmp.ne.s32.totalorder %s333, %s336
      %p345 = scmp.eq.s32.totalorder %s30, 3
      %p346 = por %p344, %p345
      %p347 = scmp.ne.s32.totalorder %s336, %s337
      %p348 = scmp.eq.s32.totalorder %s30, 0
      %p349 = por %p347, %p348
      %p350 = scmp.ne.s32.totalorder %s336, %s337
      %p351 = scmp.eq.s32.totalorder %s31, 3
      %p352 = por %p350, %p351
      %p354 = scmp.ne.s32.totalorder %s337, %s353
      %p355 = scmp.eq.s32.totalorder %s31, 0
      %p356 = por %p354, %p355
      %s357 = ssub.s32 %s33, %s40
      %p358 = scmp.eq.s32.totalorder %s357, 0
      %s360 = sadd.s32 %s359, 1
      %s361 = scalar_select %p358, %s359, %s360
      %p364 = pneg %p358
      %p365 = scmp.eq.s32.totalorder %s25, 3
      %p366 = por %p364, %p365
      %p367 = scmp.ne.s32.totalorder %s359, %s362
      %p368 = scmp.eq.s32.totalorder %s25, 0
      %p369 = por %p367, %p368
      %p370 = scmp.ne.s32.totalorder %s359, %s362
      %p371 = scmp.eq.s32.totalorder %s30, 3
      %p372 = por %p370, %p371
      %p373 = scmp.ne.s32.totalorder %s362, %s363
      %p374 = scmp.eq.s32.totalorder %s30, 0
      %p375 = por %p373, %p374
      %p376 = scmp.ne.s32.totalorder %s362, %s363
      %p377 = scmp.eq.s32.totalorder %s31, 3
      %p378 = por %p376, %p377
      %p380 = scmp.ne.s32.totalorder %s363, %s379
      %p381 = scmp.eq.s32.totalorder %s31, 0
      %p382 = por %p380, %p381
      %s383 = ssub.s32 %s32, %s44
      %p384 = scmp.eq.s32.totalorder %s383, 0
      %s386 = sadd.s32 %s385, 1
      %s387 = scalar_select %p384, %s385, %s386
      %p390 = pneg %p384
      %p391 = scmp.eq.s32.totalorder %s25, 3
      %p392 = por %p390, %p391
      %p393 = scmp.ne.s32.totalorder %s385, %s388
      %p394 = scmp.eq.s32.totalorder %s25, 0
      %p395 = por %p393, %p394
      %p396 = scmp.ne.s32.totalorder %s385, %s388
      %p397 = scmp.eq.s32.totalorder %s30, 3
      %p398 = por %p396, %p397
      %p399 = scmp.ne.s32.totalorder %s388, %s389
      %p400 = scmp.eq.s32.totalorder %s30, 0
      %p401 = por %p399, %p400
      %p402 = scmp.ne.s32.totalorder %s388, %s389
      %p403 = scmp.eq.s32.totalorder %s31, 3
      %p404 = por %p402, %p403
      %p406 = scmp.ne.s32.totalorder %s389, %s405
      %p407 = scmp.eq.s32.totalorder %s31, 0
      %p408 = por %p406, %p407
      %p409 = scmp.le.s32.totalorder 1, %s25
      %p410 = scmp.lt.s32.totalorder %s25, 5
      %p411 = pnand %p409, %p410
      %p412 = pneg %p411
      // Predicated region
      $region9: #{_lambda_.2} parent=5 // pred_check
        _
      $region10: #{_lambda_.2} parent=5 // pred_check_branch
        %414 = sbr.rel (%p411) target = $region12
      $region11: #{_lambda_.2} parent=5 // pred_region
        %s415 = ssub.s32 %s25, 1
      $region12: #{_lambda_.2} parent=5 // pred_fallthru
        _
      %p416 = scmp.lt.s32.totalorder %s25, 4
      // Predicated region
      $region13: #{_lambda_.2} parent=5 // pred_check
        %p417 = pneg %p416
      $region14: #{_lambda_.2} parent=5 // pred_check_branch
        %419 = sbr.rel (%p417) target = $region16
      $region15: #{_lambda_.2} parent=5 // pred_region
        // Predicated region
        $region17: #{_lambda_.2} parent=15 // pred_check
          %p420 = pneg %p57
        $region18: #{_lambda_.2} parent=15 // pred_check_branch
          %422 = sbr.rel (%p420) target = $region20
        $region19: #{_lambda_.2} parent=15 // pred_region
          %p423 = scmp.lt.s32.totalorder %s32, 1
          %s424 = scalar_select %p423, %s32, 1
          %s425 = smul.addr %s424, 8
          %s426 = scalar_lea.vmem %s0, %s425
        $region20: #{_lambda_.2} parent=15 // pred_fallthru
          _
        // Predicated region
        $region21: #{_lambda_.2} parent=15 // pred_check
          %p427 = pneg %p83
        $region22: #{_lambda_.2} parent=15 // pred_check_branch
          %429 = sbr.rel (%p427) target = $region24
        $region23: #{_lambda_.2} parent=15 // pred_region
          %p430 = scmp.lt.s32.totalorder %s33, 1
          %s431 = scalar_select %p430, %s33, 1
          %s432 = scalar_lea.vmem %s1, %s431
        $region24: #{_lambda_.2} parent=15 // pred_fallthru
          _
        // Predicated region
        $region25: #{_lambda_.2} parent=15 // pred_check
          %p433 = pneg %p109
        $region26: #{_lambda_.2} parent=15 // pred_check_branch
          %435 = sbr.rel (%p433) target = $region28
        $region27: #{_lambda_.2} parent=15 // pred_region
          %p436 = scmp.lt.s32.totalorder %s33, 1
          %s437 = scalar_select %p436, %s33, 1
          %s438 = scalar_lea.vmem %s2, %s437
        $region28: #{_lambda_.2} parent=15 // pred_fallthru
          _
        // Predicated region
        $region29: #{_lambda_.2} parent=15 // pred_check
          %p439 = pneg %p135
        $region30: #{_lambda_.2} parent=15 // pred_check_branch
          %441 = sbr.rel (%p439) target = $region32
        $region31: #{_lambda_.2} parent=15 // pred_region
          %s442 = sand.u32 %s125, 1
          %s443 = scalar_lea.sflag [#allocation3], %s442
          %s444 = sand.u32 %s125, 1
          %s445 = smul.addr %s444, 192
          %s446 = scalar_lea.vmem [#allocation2], %s445
          %s448 = ssub.s32 3072, 3072
          %449 = vsyncadd %s443, %s448
          %s450 = smul.addr %s33, 48
          %s451 = smul.addr %s450, 64
          %s452 = scalar_lea.hbm %s3, %s451
          %s453 = sshll.u32 %s446, 4
          %s454 = int_to_ptr.vmem [resolvable:$true] %s453
          %459 = dma.hbm_to_vmem [thread:$0]  %s452, 3072, %s454, %s443, 192, 192, 12
        $region32: #{_lambda_.2} parent=15 // pred_fallthru
          _
        // Predicated region
        $region33: #{_lambda_.2} parent=15 // pred_check
          %p460 = pneg %p161
        $region34: #{_lambda_.2} parent=15 // pred_check_branch
          %462 = sbr.rel (%p460) target = $region36
        $region35: #{_lambda_.2} parent=15 // pred_region
          %p463 = scmp.lt.s32.totalorder %s33, 1
          %s464 = scalar_select %p463, %s33, 1
          %s465 = smul.addr %s464, 3
          %s466 = scalar_lea.vmem %s4, %s465
        $region36: #{_lambda_.2} parent=15 // pred_fallthru
          _
        // Predicated region
        $region37: #{_lambda_.2} parent=15 // pred_check
          %p467 = pneg %p187
        $region38: #{_lambda_.2} parent=15 // pred_check_branch
          %469 = sbr.rel (%p467) target = $region40
        $region39: #{_lambda_.2} parent=15 // pred_region
          %p470 = scmp.lt.s32.totalorder %s33, 1
          %s471 = scalar_select %p470, %s33, 1
          %s472 = smul.addr %s471, 16
          %s473 = smul.addr %s472, 4
          %s474 = scalar_lea.vmem %s5, %s473
        $region40: #{_lambda_.2} parent=15 // pred_fallthru
          _
        // Predicated region
        $region41: #{_lambda_.2} parent=15 // pred_check
          %p475 = pneg %p213
        $region42: #{_lambda_.2} parent=15 // pred_check_branch
          %477 = sbr.rel (%p475) target = $region44
        $region43: #{_lambda_.2} parent=15 // pred_region
          %p478 = scmp.lt.s32.totalorder %s33, 1
          %s479 = scalar_select %p478, %s33, 1
          %s480 = scalar_lea.vmem %s6, %s479
        $region44: #{_lambda_.2} parent=15 // pred_fallthru
          _
        // Predicated region
        $region45: #{_lambda_.2} parent=15 // pred_check
          %p481 = pneg %p239
        $region46: #{_lambda_.2} parent=15 // pred_check_branch
          %483 = sbr.rel (%p481) target = $region48
        $region47: #{_lambda_.2} parent=15 // pred_region
          %p484 = scmp.lt.s32.totalorder %s33, 1
          %s485 = scalar_select %p484, %s33, 1
          %s486 = scalar_lea.vmem %s7, %s485
        $region48: #{_lambda_.2} parent=15 // pred_fallthru
          _
        // Predicated region
        $region49: #{_lambda_.2} parent=15 // pred_check
          %p487 = pneg %p265
        $region50: #{_lambda_.2} parent=15 // pred_check_branch
          %489 = sbr.rel (%p487) target = $region52
        $region51: #{_lambda_.2} parent=15 // pred_region
          %p490 = scmp.lt.s32.totalorder %s33, 1
          %s491 = scalar_select %p490, %s33, 1
          %s492 = scalar_lea.vmem %s8, %s491
        $region52: #{_lambda_.2} parent=15 // pred_fallthru
          _
        // Predicated region
        $region53: #{_lambda_.2} parent=15 // pred_check
          %p493 = pneg %p291
        $region54: #{_lambda_.2} parent=15 // pred_check_branch
          %495 = sbr.rel (%p493) target = $region56
        $region55: #{_lambda_.2} parent=15 // pred_region
          %s496 = sand.u32 %s25, 1
          %s497 = scalar_lea.sflag [#allocation5], %s496
          %s498 = sand.u32 %s281, 1
          %s499 = smul.addr %s498, 256
          %s500 = scalar_lea.vmem [#allocation4], %s499
          %s502 = ssub.s32 4096, 4096
          %503 = vsyncadd %s497, %s502
          %s504 = smul.addr %s33, 64
          %s505 = smul.addr %s504, 64
          %s506 = scalar_lea.hbm %s9, %s505
          %s507 = sshll.u32 %s500, 4
          %s508 = int_to_ptr.vmem [resolvable:$true] %s507
          %513 = dma.hbm_to_vmem [thread:$0]  %s506, 4096, %s508, %s497, 256, 256, 16
        $region56: #{_lambda_.2} parent=15 // pred_fallthru
          _
        // Predicated region
        $region57: #{_lambda_.2} parent=15 // pred_check
          %p514 = pneg %p317
        $region58: #{_lambda_.2} parent=15 // pred_check_branch
          %516 = sbr.rel (%p514) target = $region60
        $region59: #{_lambda_.2} parent=15 // pred_region
          %p517 = scmp.lt.s32.totalorder %s33, 1
          %s518 = scalar_select %p517, %s33, 1
          %s519 = smul.addr %s518, 4
          %s520 = scalar_lea.vmem %s10, %s519
        $region60: #{_lambda_.2} parent=15 // pred_fallthru
          _
        // Predicated region
        $region61: #{_lambda_.2} parent=15 // pred_check
          %p521 = pneg %p343
        $region62: #{_lambda_.2} parent=15 // pred_check_branch
          %523 = sbr.rel (%p521) target = $region64
        $region63: #{_lambda_.2} parent=15 // pred_region
          %s524 = sand.u32 %s25, 1
          %s525 = scalar_lea.sflag [#allocation5], %s524
          %s526 = sand.u32 %s333, 1
          %s527 = smul.addr %s526, 256
          %s528 = scalar_lea.vmem [#allocation6], %s527
          %s530 = ssub.s32 4096, 4096
          %531 = vsyncadd %s525, %s530
          %s532 = smul.addr %s33, 64
          %s533 = smul.addr %s532, 64
          %s534 = scalar_lea.hbm %s11, %s533
          %s535 = sshll.u32 %s528, 4
          %s536 = int_to_ptr.vmem [resolvable:$true] %s535
          %541 = dma.hbm_to_vmem [thread:$0]  %s534, 4096, %s536, %s525, 64, 64, 4
        $region64: #{_lambda_.2} parent=15 // pred_fallthru
          _
        // Predicated region
        $region65: #{_lambda_.2} parent=15 // pred_check
          %p542 = pneg %p369
        $region66: #{_lambda_.2} parent=15 // pred_check_branch
          %544 = sbr.rel (%p542) target = $region68
        $region67: #{_lambda_.2} parent=15 // pred_region
          %p545 = scmp.lt.s32.totalorder %s33, 1
          %s546 = scalar_select %p545, %s33, 1
          %s547 = scalar_lea.vmem %s12, %s546
        $region68: #{_lambda_.2} parent=15 // pred_fallthru
          _
      $region16: #{_lambda_.2} parent=5 // pred_fallthru
        _
      %p548 = scmp.le.s32.totalorder 1, %s25
      %p549 = scmp.lt.s32.totalorder %s25, 5
      %p550 = pnand %p548, %p549
      %p551 = pneg %p550
      // Predicated region
      $region69: #{_lambda_.2} parent=5 // pred_check
        _
      $region70: #{_lambda_.2} parent=5 // pred_check_branch
        %553 = sbr.rel (%p550) target = $region72
      $region71: #{_lambda_.2} parent=5 // pred_region
        %s554 = ssub.s32 %s25, 1
        %s555 = sand.u32 %s128, 1
        %s556 = scalar_lea.sflag [#allocation3], %s555
        %s557 = sand.u32 %s128, 1
        %s558 = smul.addr %s557, 192
        %s559 = scalar_lea.vmem [#allocation2], %s558
        // Predicated region
        $region73: #{_lambda_.2} parent=71 // pred_check
          %p560 = pneg %p141
        $region74: #{_lambda_.2} parent=71 // pred_check_branch
          %562 = sbr.rel (%p560) target = $region76
        $region75: #{_lambda_.2} parent=71 // pred_region
          %563 = dma.done %s556, 3072
        $region76: #{_lambda_.2} parent=71 // pred_fallthru
          _
        %s564 = sand.u32 %s30, 1
        %s565 = scalar_lea.sflag [#allocation5], %s564
        %s566 = sand.u32 %s284, 1
        %s567 = smul.addr %s566, 256
        %s568 = scalar_lea.vmem [#allocation4], %s567
        // Predicated region
        $region77: #{_lambda_.2} parent=71 // pred_check
          %p569 = pneg %p297
        $region78: #{_lambda_.2} parent=71 // pred_check_branch
          %571 = sbr.rel (%p569) target = $region80
        $region79: #{_lambda_.2} parent=71 // pred_region
          %572 = dma.done %s565, 4096
        $region80: #{_lambda_.2} parent=71 // pred_fallthru
          _
        %s573 = sand.u32 %s30, 1
        %s574 = scalar_lea.sflag [#allocation5], %s573
        %s575 = sand.u32 %s336, 1
        %s576 = smul.addr %s575, 256
        %s577 = scalar_lea.vmem [#allocation6], %s576
        // Predicated region
        $region81: #{_lambda_.2} parent=71 // pred_check
          %p578 = pneg %p349
        $region82: #{_lambda_.2} parent=71 // pred_check_branch
          %580 = sbr.rel (%p578) target = $region84
        $region83: #{_lambda_.2} parent=71 // pred_region
          %581 = dma.done %s574, 4096
        $region84: #{_lambda_.2} parent=71 // pred_fallthru
          _
        %p582 = scmp.lt.s32.totalorder %s34, 1
        %s583 = scalar_select %p582, %s34, 1
        %s584 = smul.addr %s583, 8
        %s585 = scalar_lea.vmem %s0, %s584
        %p586 = pneg %p63
        %p587 = pneg %p60
        %p588 = scmp.lt.s32.totalorder %s35, 1
        %s589 = scalar_select %p588, %s35, 1
        %s590 = scalar_lea.vmem %s1, %s589
        %p591 = pneg %p89
        %p592 = pneg %p86
        %p593 = scmp.lt.s32.totalorder %s35, 1
        %s594 = scalar_select %p593, %s35, 1
        %s595 = scalar_lea.vmem %s2, %s594
        %p596 = pneg %p115
        %p597 = pneg %p112
        %s598 = sand.u32 %s128, 1
        %s599 = scalar_lea.sflag [#allocation3], %s598
        %s600 = sand.u32 %s128, 1
        %s601 = smul.addr %s600, 192
        %s602 = scalar_lea.vmem [#allocation2], %s601
        %p603 = pneg %p141
        %p604 = pneg %p138
        %p605 = scmp.lt.s32.totalorder %s35, 1
        %s606 = scalar_select %p605, %s35, 1
        %s607 = smul.addr %s606, 3
        %s608 = scalar_lea.vmem %s4, %s607
        %p609 = pneg %p167
        %p610 = pneg %p164
        %p611 = scmp.lt.s32.totalorder %s35, 1
        %s612 = scalar_select %p611, %s35, 1
        %s613 = smul.addr %s612, 16
        %s614 = smul.addr %s613, 4
        %s615 = scalar_lea.vmem %s5, %s614
        %p616 = pneg %p193
        %p617 = pneg %p190
        %p618 = scmp.lt.s32.totalorder %s35, 1
        %s619 = scalar_select %p618, %s35, 1
        %s620 = scalar_lea.vmem %s6, %s619
        %p621 = pneg %p219
        %p622 = pneg %p216
        %p623 = scmp.lt.s32.totalorder %s35, 1
        %s624 = scalar_select %p623, %s35, 1
        %s625 = scalar_lea.vmem %s7, %s624
        %p626 = pneg %p245
        %p627 = pneg %p242
        %p628 = scmp.lt.s32.totalorder %s35, 1
        %s629 = scalar_select %p628, %s35, 1
        %s630 = scalar_lea.vmem %s8, %s629
        %p631 = pneg %p271
        %p632 = pneg %p268
        %s633 = sand.u32 %s30, 1
        %s634 = scalar_lea.sflag [#allocation5], %s633
        %s635 = sand.u32 %s284, 1
        %s636 = smul.addr %s635, 256
        %s637 = scalar_lea.vmem [#allocation4], %s636
        %p638 = pneg %p297
        %p639 = pneg %p294
        %p640 = scmp.lt.s32.totalorder %s35, 1
        %s641 = scalar_select %p640, %s35, 1
        %s642 = smul.addr %s641, 4
        %s643 = scalar_lea.vmem %s10, %s642
        %p644 = pneg %p323
        %p645 = pneg %p320
        %s646 = sand.u32 %s30, 1
        %s647 = scalar_lea.sflag [#allocation5], %s646
        %s648 = sand.u32 %s336, 1
        %s649 = smul.addr %s648, 256
        %s650 = scalar_lea.vmem [#allocation6], %s649
        %p651 = pneg %p349
        %p652 = pneg %p346
        %p653 = scmp.lt.s32.totalorder %s35, 1
        %s654 = scalar_select %p653, %s35, 1
        %s655 = scalar_lea.vmem %s12, %s654
        %p656 = pneg %p375
        %p657 = pneg %p372
        %p658 = pneg %p401
        %p659 = pneg %p398
        %p660 = scmp.lt.s32.totalorder %s34, 1
        %s661 = scalar_select %p660, %s34, 1
        %s662 = smul.addr %s661, 8
        %s663 = scalar_lea.vmem %s13, %s662
        %p664 = scmp.lt.s32.totalorder %s34, 1
        %s665 = scalar_select %p664, %s34, 1
        %s666 = smul.addr %s665, 8
        %s667 = scalar_lea.vmem %s0, %s666
        %p668 = scmp.lt.s32.totalorder %s35, 1
        %s669 = scalar_select %p668, %s35, 1
        %s670 = scalar_lea.vmem %s1, %s669
        %p671 = scmp.lt.s32.totalorder %s35, 1
        %s672 = scalar_select %p671, %s35, 1
        %s673 = scalar_lea.vmem %s2, %s672
        %p674 = scmp.lt.s32.totalorder %s35, 1
        %s675 = scalar_select %p674, %s35, 1
        %s676 = smul.addr %s675, 3
        %s677 = scalar_lea.vmem %s4, %s676
        %p678 = scmp.lt.s32.totalorder %s35, 1
        %s679 = scalar_select %p678, %s35, 1
        %s680 = smul.addr %s679, 16
        %s681 = smul.addr %s680, 4
        %s682 = scalar_lea.vmem %s5, %s681
        %p683 = scmp.lt.s32.totalorder %s35, 1
        %s684 = scalar_select %p683, %s35, 1
        %s685 = scalar_lea.vmem %s6, %s684
        %p686 = scmp.lt.s32.totalorder %s35, 1
        %s687 = scalar_select %p686, %s35, 1
        %s688 = scalar_lea.vmem %s7, %s687
        %p689 = scmp.lt.s32.totalorder %s35, 1
        %s690 = scalar_select %p689, %s35, 1
        %s691 = scalar_lea.vmem %s8, %s690
        %p692 = scmp.lt.s32.totalorder %s35, 1
        %s693 = scalar_select %p692, %s35, 1
        %s694 = smul.addr %s693, 4
        %s695 = scalar_lea.vmem %s10, %s694
        %p696 = scmp.lt.s32.totalorder %s35, 1
        %s697 = scalar_select %p696, %s35, 1
        %s698 = scalar_lea.vmem %s12, %s697
        %p699 = scmp.lt.s32.totalorder %s34, 1
        %s700 = scalar_select %p699, %s34, 1
        %s701 = smul.addr %s700, 8
        %s702 = scalar_lea.vmem %s13, %s701
        %p704 = scmp.eq.s32.totalorder %s35, 0
        // Predicated region
        $region85: #{_lambda_.2} parent=71 // pred_check
          %p705 = pneg %p704
        $region86: #{_lambda_.2} parent=71 // pred_check_branch
          %707 = sbr.rel (%p705) target = $region88
        $region87: #{_lambda_.2} parent=71 // pred_region
          %v708 = vld [vmem:[%s667] sm:$0xff]
          %709 = vst [vmem:[%s702] sm:$0xff] %v708
        $region88: #{_lambda_.2} parent=71 // pred_fallthru
          _
        %v710 = vld [vmem:[%s702] sm:$0xff]
        %v711 = vld [vmem:[%s670] sm:$0x1]
        %v712 = vld [vmem:[%s673] sm:$0x1]
        %713 = vadd.xlane.f32.xlu0 %v710
        %v714 = vpop.xlane.xlu0 %713
        %v715 = vrcp.pop 128.0
        %v716 = vmul.f32 %v714, %v715
        %v717 = vsub.f32 %v710, %v716
        %v718 = vmul.f32 %v717, %v717
        %719 = vadd.xlane.f32.xlu0 %v718
        %v720 = vpop.xlane.xlu0 %719
        %v721 = vmul.f32 %v720, %v715
        %v722 = vadd.f32 %v721, 1e-05
        %v723 = vrsqrt.pop %v722
        %v724 = vmul.f32 %v717, %v723
        %v726 = vlaneseq
        %v727 = vshrl.u32 %v726, 7
        %v728 = vsub.s32 0, %v727
        %v729 = vrot.slane %v711, %v728
        %v731 = vmul.f32 %v724, %v729
        %v733 = vlaneseq
        %v734 = vshrl.u32 %v733, 7
        %v735 = vsub.s32 0, %v734
        %v736 = vrot.slane %v712, %v735
        %v738 = vadd.f32 %v731, %v736
        %v739 = vpack.c.bf16 %v738, %v738
        %v740 = vld [vmem:[%s559] sm:$0xff]
        %v741 = vld [vmem:[%s559 + $0x8] sm:$0xf]
        %v742 = vld [vmem:[%s559 + $0xc] sm:$0xff]
        %v743 = vld [vmem:[%s559 + $0x14] sm:$0xf]
        %v744 = vld [vmem:[%s559 + $0x18] sm:$0xff]
        %v745 = vld [vmem:[%s559 + $0x20] sm:$0xf]
        %v746 = vld [vmem:[%s559 + $0x24] sm:$0xff]
        %v747 = vld [vmem:[%s559 + $0x2c] sm:$0xf]
        %v748 = vld [vmem:[%s559 + $0x30] sm:$0xff]
        %v749 = vld [vmem:[%s559 + $0x38] sm:$0xf]
        %v750 = vld [vmem:[%s559 + $0x3c] sm:$0xff]
        %v751 = vld [vmem:[%s559 + $0x44] sm:$0xf]
        %v752 = vld [vmem:[%s559 + $0x48] sm:$0xff]
        %v753 = vld [vmem:[%s559 + $0x50] sm:$0xf]
        %v754 = vld [vmem:[%s559 + $0x54] sm:$0xff]
        %v755 = vld [vmem:[%s559 + $0x5c] sm:$0xf]
        %v756 = vld [vmem:[%s559 + $0x60] sm:$0xff]
        %v757 = vld [vmem:[%s559 + $0x68] sm:$0xf]
        %v758 = vld [vmem:[%s559 + $0x6c] sm:$0xff]
        %v759 = vld [vmem:[%s559 + $0x74] sm:$0xf]
        %v760 = vld [vmem:[%s559 + $0x78] sm:$0xff]
        %v761 = vld [vmem:[%s559 + $0x80] sm:$0xf]
        %v762 = vld [vmem:[%s559 + $0x84] sm:$0xff]
        %v763 = vld [vmem:[%s559 + $0x8c] sm:$0xf]
        %v764 = vld [vmem:[%s559 + $0x90] sm:$0xff]
        %v765 = vld [vmem:[%s559 + $0x98] sm:$0xf]
        %v766 = vld [vmem:[%s559 + $0x9c] sm:$0xff]
        %v767 = vld [vmem:[%s559 + $0xa4] sm:$0xf]
        %v768 = vld [vmem:[%s559 + $0xa8] sm:$0xff]
        %v769 = vld [vmem:[%s559 + $0xb0] sm:$0xf]
        %v770 = vld [vmem:[%s559 + $0xb4] sm:$0xff]
        %v771 = vld [vmem:[%s559 + $0xbc] sm:$0xf]
        %v772 = vld [vmem:[%s677] sm:$0x7]
        %v774 = vlaneseq
        %v775 = vshrl.u32 %v774, 7
        %v776 = vsub.s32 0, %v775
        %v777 = vrot.slane %v772, %v776
        %v778 = vlaneseq
        %v779 = vshrl.u32 %v778, 7
        %v780 = vsub.s32 1, %v779
        %v781 = vrot.slane %v772, %v780
        %v782 = vlaneseq
        %v783 = vshrl.u32 %v782, 7
        %v784 = vsub.s32 2, %v783
        %v785 = vrot.slane %v772, %v784
        %v821 = vunpack.c.l.b16 %v740
        %v822 = vunpack.c.h.b16 %v740
        %v823 = vunpack.c.l.b16 %v741
        %v824 = vunpack.c.l.b16 %v742
        %v825 = vunpack.c.h.b16 %v742
        %v826 = vunpack.c.l.b16 %v743
        %v827 = vunpack.c.l.b16 %v744
        %v828 = vunpack.c.h.b16 %v744
        %v829 = vunpack.c.l.b16 %v745
        %v830 = vunpack.c.l.b16 %v746
        %v831 = vunpack.c.h.b16 %v746
        %v832 = vunpack.c.l.b16 %v747
        %v833 = vunpack.c.l.b16 %v748
        %v834 = vunpack.c.h.b16 %v748
        %v835 = vunpack.c.l.b16 %v749
        %v836 = vunpack.c.l.b16 %v750
        %v837 = vunpack.c.h.b16 %v750
        %v838 = vunpack.c.l.b16 %v751
        %v839 = vunpack.c.l.b16 %v752
        %v840 = vunpack.c.h.b16 %v752
        %v841 = vunpack.c.l.b16 %v753
        %v842 = vunpack.c.l.b16 %v754
        %v843 = vunpack.c.h.b16 %v754
        %v844 = vunpack.c.l.b16 %v755
        %v845 = vunpack.c.l.b16 %v756
        %v846 = vunpack.c.h.b16 %v756
        %v847 = vunpack.c.l.b16 %v757
        %v848 = vunpack.c.l.b16 %v758
        %v849 = vunpack.c.h.b16 %v758
        %v850 = vunpack.c.l.b16 %v759
        %v851 = vunpack.c.l.b16 %v760
        %v852 = vunpack.c.h.b16 %v760
        %v853 = vunpack.c.l.b16 %v761
        %v854 = vunpack.c.l.b16 %v762
        %v855 = vunpack.c.h.b16 %v762
        %v856 = vunpack.c.l.b16 %v763
        %v857 = vunpack.c.l.b16 %v764
        %v858 = vunpack.c.h.b16 %v764
        %v859 = vunpack.c.l.b16 %v765
        %v860 = vunpack.c.l.b16 %v766
        %v861 = vunpack.c.h.b16 %v766
        %v862 = vunpack.c.l.b16 %v767
        %v863 = vunpack.c.l.b16 %v768
        %v864 = vunpack.c.h.b16 %v768
        %v865 = vunpack.c.l.b16 %v769
        %v866 = vunpack.c.l.b16 %v770
        %v867 = vunpack.c.h.b16 %v770
        %v868 = vunpack.c.l.b16 %v771
        %v869 = vpack.c.b16 %v824, %v821
        %v870 = vpack.c.b16 %v825, %v822
        %v871 = vpack.c.b16 %v826, %v823
        %v872 = vpack.c.b16 %v830, %v827
        %v873 = vpack.c.b16 %v831, %v828
        %v874 = vpack.c.b16 %v832, %v829
        %v875 = vpack.c.b16 %v836, %v833
        %v876 = vpack.c.b16 %v837, %v834
        %v877 = vpack.c.b16 %v838, %v835
        %v878 = vpack.c.b16 %v842, %v839
        %v879 = vpack.c.b16 %v843, %v840
        %v880 = vpack.c.b16 %v844, %v841
        %v881 = vpack.c.b16 %v848, %v845
        %v882 = vpack.c.b16 %v849, %v846
        %v883 = vpack.c.b16 %v850, %v847
        %v884 = vpack.c.b16 %v854, %v851
        %v885 = vpack.c.b16 %v855, %v852
        %v886 = vpack.c.b16 %v856, %v853
        %v887 = vpack.c.b16 %v860, %v857
        %v888 = vpack.c.b16 %v861, %v858
        %v889 = vpack.c.b16 %v862, %v859
        %v890 = vpack.c.b16 %v866, %v863
        %v891 = vpack.c.b16 %v867, %v864
        %v892 = vpack.c.b16 %v868, %v865
        %917 = vmatprep.subr.bf16.mxu0 %v870
        %918 = vmatpush1.bf16.msra.mxu0 %v869
        %919 = vmatprep.subr.bf16.mxu0 %v873
        %920 = vmatpush1.bf16.msra.mxu0 %v872
        %921 = vmatprep.subr.bf16.mxu0 %v876
        %922 = vmatpush1.bf16.msra.mxu0 %v875
        %923 = vmatprep.subr.bf16.mxu0 %v879
        %924 = vmatpush1.bf16.msra.mxu0 %v878
        %925 = vmatprep.subr.bf16.mxu0 %v882
        %926 = vmatpush1.bf16.msra.mxu0 %v881
        %927 = vmatprep.subr.bf16.mxu0 %v885
        %928 = vmatpush1.bf16.msra.mxu0 %v884
        %929 = vmatprep.subr.bf16.mxu0 %v888
        %930 = vmatpush1.bf16.msra.mxu0 %v887
        %931 = vmatprep.subr.bf16.mxu0 %v891
        %932 = vmatpush1.bf16.msra.mxu0 %v890
        %933 = vmatprep.subr.bf16.mxu0 0
        %934 = vmatpush1.bf16.msra.mxu0 0
        %935 = vmatprep.subr.bf16.mxu0 0
        %936 = vmatpush1.bf16.msra.mxu0 0
        %937 = vmatprep.subr.bf16.mxu0 0
        %938 = vmatpush1.bf16.msra.mxu0 0
        %939 = vmatprep.subr.bf16.mxu0 0
        %940 = vmatpush1.bf16.msra.mxu0 0
        %941 = vmatprep.subr.bf16.mxu0 0
        %942 = vmatpush1.bf16.msra.mxu0 0
        %943 = vmatprep.subr.bf16.mxu0 0
        %944 = vmatpush1.bf16.msra.mxu0 0
        %945 = vmatprep.subr.bf16.mxu0 0
        %946 = vmatpush1.bf16.msra.mxu0 0
        %947 = vmatprep.subr.bf16.mxu0 0
        %948 = vmatpush1.bf16.msra.mxu0 0
        %949 = vmatprep.mubr.bf16.mxu0 0
        %950 = vmatmul.mubr.bf16.gmra.mrb[0].mxu0 %v739
        %v951 = vpop.f32.mrb[0].mxu0
        %v952 = vadd.f32 %v777, %v951
        %v953 = vpop.f32.mrb[0].mxu0
        %v954 = vadd.f32 %v781, %v953
        %v955 = vpop.f32.mrb[0].mxu0
        %v956 = vpop.f32.mrb[0].mxu0
        %957 = vdwg.mxu0
        %958 = vmatprep.subr.bf16.mxu0 0
        %959 = vmatpush1.bf16.msra.mxu0 %v871
        %960 = vmatprep.subr.bf16.mxu0 0
        %961 = vmatpush1.bf16.msra.mxu0 %v874
        %962 = vmatprep.subr.bf16.mxu0 0
        %963 = vmatpush1.bf16.msra.mxu0 %v877
        %964 = vmatprep.subr.bf16.mxu0 0
        %965 = vmatpush1.bf16.msra.mxu0 %v880
        %966 = vmatprep.subr.bf16.mxu0 0
        %967 = vmatpush1.bf16.msra.mxu0 %v883
        %968 = vmatprep.subr.bf16.mxu0 0
        %969 = vmatpush1.bf16.msra.mxu0 %v886
        %970 = vmatprep.subr.bf16.mxu0 0
        %971 = vmatpush1.bf16.msra.mxu0 %v889
        %972 = vmatprep.subr.bf16.mxu0 0
        %973 = vmatpush1.bf16.msra.mxu0 %v892
        %974 = vmatprep.subr.bf16.mxu0 0
        %975 = vmatpush1.bf16.msra.mxu0 0
        %976 = vmatprep.subr.bf16.mxu0 0
        %977 = vmatpush1.bf16.msra.mxu0 0
        %978 = vmatprep.subr.bf16.mxu0 0
        %979 = vmatpush1.bf16.msra.mxu0 0
        %980 = vmatprep.subr.bf16.mxu0 0
        %981 = vmatpush1.bf16.msra.mxu0 0
        %982 = vmatprep.subr.bf16.mxu0 0
        %983 = vmatpush1.bf16.msra.mxu0 0
        %984 = vmatprep.subr.bf16.mxu0 0
        %985 = vmatpush1.bf16.msra.mxu0 0
        %986 = vmatprep.subr.bf16.mxu0 0
        %987 = vmatpush1.bf16.msra.mxu0 0
        %988 = vmatprep.subr.bf16.mxu0 0
        %989 = vmatpush1.bf16.msra.mxu0 0
        %990 = vmatprep.mubr.bf16.mxu0 0
        %991 = vmatmul.mubr.bf16.gmra.mrb[0].mxu0 %v739
        %v992 = vpop.f32.mrb[0].mxu0
        %v993 = vadd.f32 %v785, %v992
        %v994 = vpop.f32.mrb[0].mxu0
        %v995 = vpop.f32.mrb[0].mxu0
        %v996 = vpop.f32.mrb[0].mxu0
        %997 = vdwg.mxu0
        %v998 = vlaneseq
        %v999 = vshrl.u32 %v998, 7
        %v1000 = vlaneseq
        %v1001 = vand.u32 %v1000, 127
        %vm1002 = vcmp.le.s32.totalorder %v1001, %v999
        %vm1003 = vcmask 523264
        %v1005 = vsel %vm1003, %v952, 0
        %v1008 = vsel %vm1003, %v954, 0
        %1010 = vmatprep.subr.mxu0 0.0
        %1011 = vmatpush1.xpose.msra.mxu0 %v1008
        %1012 = vmatprep.subr.mxu0 0.0
        %1013 = vmatpush1.xpose.msra.mxu0 0.0
        %1014 = vmatprep.subr.mxu0 0.0
        %1015 = vmatpush1.xpose.msra.mxu0 0.0
        %1016 = vmatprep.subr.mxu0 0.0
        %1017 = vmatpush1.xpose.msra.mxu0 0.0
        %1018 = vmatprep.subr.mxu0 0.0
        %1019 = vmatpush1.xpose.msra.mxu0 0.0
        %1020 = vmatprep.subr.mxu0 0.0
        %1021 = vmatpush1.xpose.msra.mxu0 0.0
        %1022 = vmatprep.subr.mxu0 0.0
        %1023 = vmatpush1.xpose.msra.mxu0 0.0
        %1024 = vmatprep.subr.mxu0 0.0
        %1025 = vmatpush1.xpose.msra.mxu0 0.0
        %1026 = vmatprep.subr.mxu0 0.0
        %1027 = vmatpush1.xpose.msra.mxu0 0.0
        %1028 = vmatprep.subr.mxu0 0.0
        %1029 = vmatpush1.xpose.msra.mxu0 0.0
        %1030 = vmatprep.subr.mxu0 0.0
        %1031 = vmatpush1.xpose.msra.mxu0 0.0
        %1032 = vmatprep.subr.mxu0 0.0
        %1033 = vmatpush1.xpose.msra.mxu0 0.0
        %1034 = vmatprep.subr.mxu0 0.0
        %1035 = vmatpush1.xpose.msra.mxu0 0.0
        %1036 = vmatprep.subr.mxu0 0.0
        %1037 = vmatpush1.xpose.msra.mxu0 0.0
        %1038 = vmatprep.subr.mxu0 0.0
        %1039 = vmatpush1.xpose.msra.mxu0 0.0
        %1040 = vmatprep.subr.mxu0 0.0
        %1041 = vmatpush1.xpose.msra.mxu0 0.0
        %1042 = vmatprep.subr.mxu0 0.0
        %1043 = vmatpush1.xpose.msra.mxu0 0.0
        %1044 = vmatprep.subr.mxu0 0.0
        %1045 = vmatpush1.xpose.msra.mxu0 0.0
        %1046 = vmatprep.subr.mxu0 0.0
        %1047 = vmatpush1.xpose.msra.mxu0 0.0
        %1048 = vmatprep.subr.mxu0 0.0
        %1049 = vmatpush1.xpose.msra.mxu0 0.0
        %1050 = vmatprep.subr.mxu0 0.0
        %1051 = vmatpush1.xpose.msra.mxu0 0.0
        %1052 = vmatprep.subr.mxu0 0.0
        %1053 = vmatpush1.xpose.msra.mxu0 0.0
        %1054 = vmatprep.subr.mxu0 0.0
        %1055 = vmatpush1.xpose.msra.mxu0 0.0
        %1056 = vmatprep.subr.mxu0 0.0
        %1057 = vmatpush1.xpose.msra.mxu0 0.0
        %1058 = vmatprep.subr.mxu0 0.0
        %1059 = vmatpush1.xpose.msra.mxu0 0.0
        %1060 = vmatprep.subr.mxu0 0.0
        %1061 = vmatpush1.xpose.msra.mxu0 0.0
        %1062 = vmatprep.subr.mxu0 0.0
        %1063 = vmatpush1.xpose.msra.mxu0 0.0
        %1064 = vmatprep.subr.mxu0 0.0
        %1065 = vmatpush1.xpose.msra.mxu0 0.0
        %1066 = vmatprep.subr.mxu0 0.0
        %1067 = vmatpush1.xpose.msra.mxu0 0.0
        %1068 = vmatprep.subr.mxu0 0.0
        %1069 = vmatpush1.xpose.msra.mxu0 0.0
        %1070 = vmatprep.subr.mxu0 0.0
        %1071 = vmatpush1.xpose.msra.mxu0 0.0
        %1072 = vmatprep.subr.mxu0 0.0
        %1073 = vmatpush1.xpose.msra.mxu0 0.0
        %1074 = vmatprep.mubr.f32.mxu0 0.0
        %1075 = vmatmul.mubr.f32.gmra.mrb[0].mxu0 %v1005
        %v1076 = vpop.f32.mrb[0].mxu0
        %v1077 = vadd.f32 0.0, %v1076
        %v1078 = vpop.f32.mrb[0].mxu0
        %1079 = vdwg.mxu0
        %v1080 = vmul.f32 %v1077, 0.125
        %v1081 = vsel %vm1002, %v1080, -1e+30
        %vm1082 = vcmask 64512
        %v1083 = vsel %vm1082, %v1081, -inf
        %1084 = vmax.xlane.f32.xlu0 %v1083
        %v1085 = vpop.xlane.xlu0 %1084
        %v1086 = vsub.f32 %v1081, %v1085
        %v1087 = vmul.f32 %v1086, 1.442695
        %v1088 = vpow.pop %v1087
        %v1089 = vsel %vm1082, %v1088, 0.0
        %1090 = vadd.xlane.f32.xlu0 %v1089
        %v1091 = vpop.xlane.xlu0 %1090
        %v1092 = vrcp.pop %v1091
        %v1093 = vmul.f32 %v1088, %v1092
        %v1095 = vsel %vm1082, %v1093, 0
        %1097 = vmatprep.subr.mxu0 0.0
        %1098 = vmatpush1.msra.mxu0 %v993
        %1099 = vmatprep.subr.mxu0 0.0
        %1100 = vmatpush1.msra.mxu0 0.0
        %1101 = vmatprep.subr.mxu0 0.0
        %1102 = vmatpush1.msra.mxu0 0.0
        %1103 = vmatprep.subr.mxu0 0.0
        %1104 = vmatpush1.msra.mxu0 0.0
        %1105 = vmatprep.subr.mxu0 0.0
        %1106 = vmatpush1.msra.mxu0 0.0
        %1107 = vmatprep.subr.mxu0 0.0
        %1108 = vmatpush1.msra.mxu0 0.0
        %1109 = vmatprep.subr.mxu0 0.0
        %1110 = vmatpush1.msra.mxu0 0.0
        %1111 = vmatprep.subr.mxu0 0.0
        %1112 = vmatpush1.msra.mxu0 0.0
        %1113 = vmatprep.subr.mxu0 0.0
        %1114 = vmatpush1.msra.mxu0 0.0
        %1115 = vmatprep.subr.mxu0 0.0
        %1116 = vmatpush1.msra.mxu0 0.0
        %1117 = vmatprep.subr.mxu0 0.0
        %1118 = vmatpush1.msra.mxu0 0.0
        %1119 = vmatprep.subr.mxu0 0.0
        %1120 = vmatpush1.msra.mxu0 0.0
        %1121 = vmatprep.subr.mxu0 0.0
        %1122 = vmatpush1.msra.mxu0 0.0
        %1123 = vmatprep.subr.mxu0 0.0
        %1124 = vmatpush1.msra.mxu0 0.0
        %1125 = vmatprep.subr.mxu0 0.0
        %1126 = vmatpush1.msra.mxu0 0.0
        %1127 = vmatprep.subr.mxu0 0.0
        %1128 = vmatpush1.msra.mxu0 0.0
        %1129 = vmatprep.subr.mxu0 0.0
        %1130 = vmatpush1.msra.mxu0 0.0
        %1131 = vmatprep.subr.mxu0 0.0
        %1132 = vmatpush1.msra.mxu0 0.0
        %1133 = vmatprep.subr.mxu0 0.0
        %1134 = vmatpush1.msra.mxu0 0.0
        %1135 = vmatprep.subr.mxu0 0.0
        %1136 = vmatpush1.msra.mxu0 0.0
        %1137 = vmatprep.subr.mxu0 0.0
        %1138 = vmatpush1.msra.mxu0 0.0
        %1139 = vmatprep.subr.mxu0 0.0
        %1140 = vmatpush1.msra.mxu0 0.0
        %1141 = vmatprep.subr.mxu0 0.0
        %1142 = vmatpush1.msra.mxu0 0.0
        %1143 = vmatprep.subr.mxu0 0.0
        %1144 = vmatpush1.msra.mxu0 0.0
        %1145 = vmatprep.subr.mxu0 0.0
        %1146 = vmatpush1.msra.mxu0 0.0
        %1147 = vmatprep.subr.mxu0 0.0
        %1148 = vmatpush1.msra.mxu0 0.0
        %1149 = vmatprep.subr.mxu0 0.0
        %1150 = vmatpush1.msra.mxu0 0.0
        %1151 = vmatprep.subr.mxu0 0.0
        %1152 = vmatpush1.msra.mxu0 0.0
        %1153 = vmatprep.subr.mxu0 0.0
        %1154 = vmatpush1.msra.mxu0 0.0
        %1155 = vmatprep.subr.mxu0 0.0
        %1156 = vmatpush1.msra.mxu0 0.0
        %1157 = vmatprep.subr.mxu0 0.0
        %1158 = vmatpush1.msra.mxu0 0.0
        %1159 = vmatprep.subr.mxu0 0.0
        %1160 = vmatpush1.msra.mxu0 0.0
        %1161 = vmatprep.mubr.f32.mxu0 0.0
        %1162 = vmatmul.mubr.f32.gmra.mrb[0].mxu0 %v1095
        %v1163 = vpop.f32.mrb[0].mxu0
        %v1164 = vadd.f32 0.0, %v1163
        %v1165 = vpop.f32.mrb[0].mxu0
        %1166 = vdwg.mxu0
        %1167 = vrot.lane.b32.xlu0 %v952, 64
        %v1168 = vpop.permute.xlu0 %1167
        %1169 = vrot.lane.b32.xlu0 %v954, 64
        %v1170 = vpop.permute.xlu0 %1169
        %v1171 = vsel %vm1003, %v1168, 0
        %v1173 = vsel %vm1003, %v1170, 0
        %1175 = vmatprep.subr.mxu0 0.0
        %1176 = vmatpush1.xpose.msra.mxu0 %v1173
        %1177 = vmatprep.subr.mxu0 0.0
        %1178 = vmatpush1.xpose.msra.mxu0 0.0
        %1179 = vmatprep.subr.mxu0 0.0
        %1180 = vmatpush1.xpose.msra.mxu0 0.0
        %1181 = vmatprep.subr.mxu0 0.0
        %1182 = vmatpush1.xpose.msra.mxu0 0.0
        %1183 = vmatprep.subr.mxu0 0.0
        %1184 = vmatpush1.xpose.msra.mxu0 0.0
        %1185 = vmatprep.subr.mxu0 0.0
        %1186 = vmatpush1.xpose.msra.mxu0 0.0
        %1187 = vmatprep.subr.mxu0 0.0
        %1188 = vmatpush1.xpose.msra.mxu0 0.0
        %1189 = vmatprep.subr.mxu0 0.0
        %1190 = vmatpush1.xpose.msra.mxu0 0.0
        %1191 = vmatprep.subr.mxu0 0.0
        %1192 = vmatpush1.xpose.msra.mxu0 0.0
        %1193 = vmatprep.subr.mxu0 0.0
        %1194 = vmatpush1.xpose.msra.mxu0 0.0
        %1195 = vmatprep.subr.mxu0 0.0
        %1196 = vmatpush1.xpose.msra.mxu0 0.0
        %1197 = vmatprep.subr.mxu0 0.0
        %1198 = vmatpush1.xpose.msra.mxu0 0.0
        %1199 = vmatprep.subr.mxu0 0.0
        %1200 = vmatpush1.xpose.msra.mxu0 0.0
        %1201 = vmatprep.subr.mxu0 0.0
        %1202 = vmatpush1.xpose.msra.mxu0 0.0
        %1203 = vmatprep.subr.mxu0 0.0
        %1204 = vmatpush1.xpose.msra.mxu0 0.0
        %1205 = vmatprep.subr.mxu0 0.0
        %1206 = vmatpush1.xpose.msra.mxu0 0.0
        %1207 = vmatprep.subr.mxu0 0.0
        %1208 = vmatpush1.xpose.msra.mxu0 0.0
        %1209 = vmatprep.subr.mxu0 0.0
        %1210 = vmatpush1.xpose.msra.mxu0 0.0
        %1211 = vmatprep.subr.mxu0 0.0
        %1212 = vmatpush1.xpose.msra.mxu0 0.0
        %1213 = vmatprep.subr.mxu0 0.0
        %1214 = vmatpush1.xpose.msra.mxu0 0.0
        %1215 = vmatprep.subr.mxu0 0.0
        %1216 = vmatpush1.xpose.msra.mxu0 0.0
        %1217 = vmatprep.subr.mxu0 0.0
        %1218 = vmatpush1.xpose.msra.mxu0 0.0
        %1219 = vmatprep.subr.mxu0 0.0
        %1220 = vmatpush1.xpose.msra.mxu0 0.0
        %1221 = vmatprep.subr.mxu0 0.0
        %1222 = vmatpush1.xpose.msra.mxu0 0.0
        %1223 = vmatprep.subr.mxu0 0.0
        %1224 = vmatpush1.xpose.msra.mxu0 0.0
        %1225 = vmatprep.subr.mxu0 0.0
        %1226 = vmatpush1.xpose.msra.mxu0 0.0
        %1227 = vmatprep.subr.mxu0 0.0
        %1228 = vmatpush1.xpose.msra.mxu0 0.0
        %1229 = vmatprep.subr.mxu0 0.0
        %1230 = vmatpush1.xpose.msra.mxu0 0.0
        %1231 = vmatprep.subr.mxu0 0.0
        %1232 = vmatpush1.xpose.msra.mxu0 0.0
        %1233 = vmatprep.subr.mxu0 0.0
        %1234 = vmatpush1.xpose.msra.mxu0 0.0
        %1235 = vmatprep.subr.mxu0 0.0
        %1236 = vmatpush1.xpose.msra.mxu0 0.0
        %1237 = vmatprep.subr.mxu0 0.0
        %1238 = vmatpush1.xpose.msra.mxu0 0.0
        %1239 = vmatprep.mubr.f32.mxu0 0.0
        %1240 = vmatmul.mubr.f32.gmra.mrb[0].mxu0 %v1171
        %v1241 = vpop.f32.mrb[0].mxu0
        %v1242 = vadd.f32 0.0, %v1241
        %v1243 = vpop.f32.mrb[0].mxu0
        %1244 = vdwg.mxu0
        %v1245 = vmul.f32 %v1242, 0.125
        %v1246 = vsel %vm1002, %v1245, -1e+30
        %v1247 = vsel %vm1082, %v1246, -inf
        %1248 = vmax.xlane.f32.xlu0 %v1247
        %v1249 = vpop.xlane.xlu0 %1248
        %v1250 = vsub.f32 %v1246, %v1249
        %v1251 = vmul.f32 %v1250, 1.442695
        %v1252 = vpow.pop %v1251
        %v1253 = vsel %vm1082, %v1252, 0.0
        %1254 = vadd.xlane.f32.xlu0 %v1253
        %v1255 = vpop.xlane.xlu0 %1254
        %v1256 = vrcp.pop %v1255
        %v1257 = vmul.f32 %v1252, %v1256
        %1259 = vrot.lane.b32.xlu0 %v993, 64
        %v1260 = vpop.permute.xlu0 %1259
        %v1263 = vsel %vm1082, %v1257, 0
        %1265 = vmatprep.subr.mxu0 0.0
        %1266 = vmatpush1.msra.mxu0 %v1260
        %1267 = vmatprep.subr.mxu0 0.0
        %1268 = vmatpush1.msra.mxu0 0.0
        %1269 = vmatprep.subr.mxu0 0.0
        %1270 = vmatpush1.msra.mxu0 0.0
        %1271 = vmatprep.subr.mxu0 0.0
        %1272 = vmatpush1.msra.mxu0 0.0
        %1273 = vmatprep.subr.mxu0 0.0
        %1274 = vmatpush1.msra.mxu0 0.0
        %1275 = vmatprep.subr.mxu0 0.0
        %1276 = vmatpush1.msra.mxu0 0.0
        %1277 = vmatprep.subr.mxu0 0.0
        %1278 = vmatpush1.msra.mxu0 0.0
        %1279 = vmatprep.subr.mxu0 0.0
        %1280 = vmatpush1.msra.mxu0 0.0
        %1281 = vmatprep.subr.mxu0 0.0
        %1282 = vmatpush1.msra.mxu0 0.0
        %1283 = vmatprep.subr.mxu0 0.0
        %1284 = vmatpush1.msra.mxu0 0.0
        %1285 = vmatprep.subr.mxu0 0.0
        %1286 = vmatpush1.msra.mxu0 0.0
        %1287 = vmatprep.subr.mxu0 0.0
        %1288 = vmatpush1.msra.mxu0 0.0
        %1289 = vmatprep.subr.mxu0 0.0
        %1290 = vmatpush1.msra.mxu0 0.0
        %1291 = vmatprep.subr.mxu0 0.0
        %1292 = vmatpush1.msra.mxu0 0.0
        %1293 = vmatprep.subr.mxu0 0.0
        %1294 = vmatpush1.msra.mxu0 0.0
        %1295 = vmatprep.subr.mxu0 0.0
        %1296 = vmatpush1.msra.mxu0 0.0
        %1297 = vmatprep.subr.mxu0 0.0
        %1298 = vmatpush1.msra.mxu0 0.0
        %1299 = vmatprep.subr.mxu0 0.0
        %1300 = vmatpush1.msra.mxu0 0.0
        %1301 = vmatprep.subr.mxu0 0.0
        %1302 = vmatpush1.msra.mxu0 0.0
        %1303 = vmatprep.subr.mxu0 0.0
        %1304 = vmatpush1.msra.mxu0 0.0
        %1305 = vmatprep.subr.mxu0 0.0
        %1306 = vmatpush1.msra.mxu0 0.0
        %1307 = vmatprep.subr.mxu0 0.0
        %1308 = vmatpush1.msra.mxu0 0.0
        %1309 = vmatprep.subr.mxu0 0.0
        %1310 = vmatpush1.msra.mxu0 0.0
        %1311 = vmatprep.subr.mxu0 0.0
        %1312 = vmatpush1.msra.mxu0 0.0
        %1313 = vmatprep.subr.mxu0 0.0
        %1314 = vmatpush1.msra.mxu0 0.0
        %1315 = vmatprep.subr.mxu0 0.0
        %1316 = vmatpush1.msra.mxu0 0.0
        %1317 = vmatprep.subr.mxu0 0.0
        %1318 = vmatpush1.msra.mxu0 0.0
        %1319 = vmatprep.subr.mxu0 0.0
        %1320 = vmatpush1.msra.mxu0 0.0
        %1321 = vmatprep.subr.mxu0 0.0
        %1322 = vmatpush1.msra.mxu0 0.0
        %1323 = vmatprep.subr.mxu0 0.0
        %1324 = vmatpush1.msra.mxu0 0.0
        %1325 = vmatprep.subr.mxu0 0.0
        %1326 = vmatpush1.msra.mxu0 0.0
        %1327 = vmatprep.subr.mxu0 0.0
        %1328 = vmatpush1.msra.mxu0 0.0
        %1329 = vmatprep.mubr.f32.mxu0 0.0
        %1330 = vmatmul.mubr.f32.gmra.mrb[0].mxu0 %v1263
        %v1331 = vpop.f32.mrb[0].mxu0
        %v1332 = vadd.f32 0.0, %v1331
        %v1333 = vpop.f32.mrb[0].mxu0
        %1334 = vdwg.mxu0
        %1336 = vrot.lane.b32.xlu0 %v1332, 64
        %v1337 = vpop.permute.xlu0 %1336
        %v1339 = vsel %vm1003, %v1164, %v1337
        %v1340 = vpack.c.bf16 %v1339, %v1339
        %v1341 = vld [vmem:[%s682] sm:$0xf]
        %v1342 = vld [vmem:[%s682 + $0x4] sm:$0xf]
        %v1343 = vld [vmem:[%s682 + $0x8] sm:$0xf]
        %v1344 = vld [vmem:[%s682 + $0xc] sm:$0xf]
        %v1345 = vld [vmem:[%s682 + $0x10] sm:$0xf]
        %v1346 = vld [vmem:[%s682 + $0x14] sm:$0xf]
        %v1347 = vld [vmem:[%s682 + $0x18] sm:$0xf]
        %v1348 = vld [vmem:[%s682 + $0x1c] sm:$0xf]
        %v1349 = vld [vmem:[%s682 + $0x20] sm:$0xf]
        %v1350 = vld [vmem:[%s682 + $0x24] sm:$0xf]
        %v1351 = vld [vmem:[%s682 + $0x28] sm:$0xf]
        %v1352 = vld [vmem:[%s682 + $0x2c] sm:$0xf]
        %v1353 = vld [vmem:[%s682 + $0x30] sm:$0xf]
        %v1354 = vld [vmem:[%s682 + $0x34] sm:$0xf]
        %v1355 = vld [vmem:[%s682 + $0x38] sm:$0xf]
        %v1356 = vld [vmem:[%s682 + $0x3c] sm:$0xf]
        %v1357 = vld [vmem:[%s685] sm:$0x1]
        %v1359 = vlaneseq
        %v1360 = vshrl.u32 %v1359, 7
        %v1361 = vsub.s32 0, %v1360
        %v1362 = vrot.slane %v1357, %v1361
        %v1380 = vunpack.c.l.b16 %v1341
        %v1381 = vunpack.c.l.b16 %v1342
        %v1382 = vunpack.c.l.b16 %v1343
        %v1383 = vunpack.c.l.b16 %v1344
        %v1384 = vunpack.c.l.b16 %v1345
        %v1385 = vunpack.c.l.b16 %v1346
        %v1386 = vunpack.c.l.b16 %v1347
        %v1387 = vunpack.c.l.b16 %v1348
        %v1388 = vunpack.c.l.b16 %v1349
        %v1389 = vunpack.c.l.b16 %v1350
        %v1390 = vunpack.c.l.b16 %v1351
        %v1391 = vunpack.c.l.b16 %v1352
        %v1392 = vunpack.c.l.b16 %v1353
        %v1393 = vunpack.c.l.b16 %v1354
        %v1394 = vunpack.c.l.b16 %v1355
        %v1395 = vunpack.c.l.b16 %v1356
        %v1396 = vpack.c.b16 %v1381, %v1380
        %v1397 = vpack.c.b16 %v1383, %v1382
        %v1398 = vpack.c.b16 %v1385, %v1384
        %v1399 = vpack.c.b16 %v1387, %v1386
        %v1400 = vpack.c.b16 %v1389, %v1388
        %v1401 = vpack.c.b16 %v1391, %v1390
        %v1402 = vpack.c.b16 %v1393, %v1392
        %v1403 = vpack.c.b16 %v1395, %v1394
        %1412 = vmatprep.subr.bf16.mxu0 0
        %1413 = vmatpush1.bf16.msra.mxu0 %v1396
        %1414 = vmatprep.subr.bf16.mxu0 0
        %1415 = vmatpush1.bf16.msra.mxu0 %v1397
        %1416 = vmatprep.subr.bf16.mxu0 0
        %1417 = vmatpush1.bf16.msra.mxu0 %v1398
        %1418 = vmatprep.subr.bf16.mxu0 0
        %1419 = vmatpush1.bf16.msra.mxu0 %v1399
        %1420 = vmatprep.subr.bf16.mxu0 0
        %1421 = vmatpush1.bf16.msra.mxu0 %v1400
        %1422 = vmatprep.subr.bf16.mxu0 0
        %1423 = vmatpush1.bf16.msra.mxu0 %v1401
        %1424 = vmatprep.subr.bf16.mxu0 0
        %1425 = vmatpush1.bf16.msra.mxu0 %v1402
        %1426 = vmatprep.subr.bf16.mxu0 0
        %1427 = vmatpush1.bf16.msra.mxu0 %v1403
        %1428 = vmatprep.subr.bf16.mxu0 0
        %1429 = vmatpush1.bf16.msra.mxu0 0
        %1430 = vmatprep.subr.bf16.mxu0 0
        %1431 = vmatpush1.bf16.msra.mxu0 0
        %1432 = vmatprep.subr.bf16.mxu0 0
        %1433 = vmatpush1.bf16.msra.mxu0 0
        %1434 = vmatprep.subr.bf16.mxu0 0
        %1435 = vmatpush1.bf16.msra.mxu0 0
        %1436 = vmatprep.subr.bf16.mxu0 0
        %1437 = vmatpush1.bf16.msra.mxu0 0
        %1438 = vmatprep.subr.bf16.mxu0 0
        %1439 = vmatpush1.bf16.msra.mxu0 0
        %1440 = vmatprep.subr.bf16.mxu0 0
        %1441 = vmatpush1.bf16.msra.mxu0 0
        %1442 = vmatprep.subr.bf16.mxu0 0
        %1443 = vmatpush1.bf16.msra.mxu0 0
        %1444 = vmatprep.mubr.bf16.mxu0 0
        %1445 = vmatmul.mubr.bf16.gmra.mrb[0].mxu0 %v1340
        %v1446 = vpop.f32.mrb[0].mxu0
        %v1447 = vadd.f32 %v1362, %v1446
        %v1448 = vpop.f32.mrb[0].mxu0
        %v1449 = vpop.f32.mrb[0].mxu0
        %v1450 = vpop.f32.mrb[0].mxu0
        %1451 = vdwg.mxu0
        %v1452 = vadd.f32 %v710, %v1447
        %v1453 = vld [vmem:[%s688] sm:$0x1]
        %v1454 = vld [vmem:[%s691] sm:$0x1]
        %1455 = vadd.xlane.f32.xlu0 %v1452
        %v1456 = vpop.xlane.xlu0 %1455
        %v1457 = vmul.f32 %v1456, %v715
        %v1458 = vsub.f32 %v1452, %v1457
        %v1459 = vmul.f32 %v1458, %v1458
        %1460 = vadd.xlane.f32.xlu0 %v1459
        %v1461 = vpop.xlane.xlu0 %1460
        %v1462 = vmul.f32 %v1461, %v715
        %v1463 = vadd.f32 %v1462, 1e-05
        %v1464 = vrsqrt.pop %v1463
        %v1465 = vmul.f32 %v1458, %v1464
        %v1467 = vlaneseq
        %v1468 = vshrl.u32 %v1467, 7
        %v1469 = vsub.s32 0, %v1468
        %v1470 = vrot.slane %v1453, %v1469
        %v1472 = vmul.f32 %v1465, %v1470
        %v1474 = vlaneseq
        %v1475 = vshrl.u32 %v1474, 7
        %v1476 = vsub.s32 0, %v1475
        %v1477 = vrot.slane %v1454, %v1476
        %v1479 = vadd.f32 %v1472, %v1477
        %v1480 = vpack.c.bf16 %v1479, %v1479
        %v1481 = vld [vmem:[%s568] sm:$0xff]
        %v1482 = vld [vmem:[%s568 + $0x8] sm:$0xff]
        %v1483 = vld [vmem:[%s568 + $0x10] sm:$0xff]
        %v1484 = vld [vmem:[%s568 + $0x18] sm:$0xff]
        %v1485 = vld [vmem:[%s568 + $0x20] sm:$0xff]
        %v1486 = vld [vmem:[%s568 + $0x28] sm:$0xff]
        %v1487 = vld [vmem:[%s568 + $0x30] sm:$0xff]
        %v1488 = vld [vmem:[%s568 + $0x38] sm:$0xff]
        %v1489 = vld [vmem:[%s568 + $0x40] sm:$0xff]
        %v1490 = vld [vmem:[%s568 + $0x48] sm:$0xff]
        %v1491 = vld [vmem:[%s568 + $0x50] sm:$0xff]
        %v1492 = vld [vmem:[%s568 + $0x58] sm:$0xff]
        %v1493 = vld [vmem:[%s568 + $0x60] sm:$0xff]
        %v1494 = vld [vmem:[%s568 + $0x68] sm:$0xff]
        %v1495 = vld [vmem:[%s568 + $0x70] sm:$0xff]
        %v1496 = vld [vmem:[%s568 + $0x78] sm:$0xff]
        %v1497 = vld [vmem:[%s568 + $0x80] sm:$0xff]
        %v1498 = vld [vmem:[%s568 + $0x88] sm:$0xff]
        %v1499 = vld [vmem:[%s568 + $0x90] sm:$0xff]
        %v1500 = vld [vmem:[%s568 + $0x98] sm:$0xff]
        %v1501 = vld [vmem:[%s568 + $0xa0] sm:$0xff]
        %v1502 = vld [vmem:[%s568 + $0xa8] sm:$0xff]
        %v1503 = vld [vmem:[%s568 + $0xb0] sm:$0xff]
        %v1504 = vld [vmem:[%s568 + $0xb8] sm:$0xff]
        %v1505 = vld [vmem:[%s568 + $0xc0] sm:$0xff]
        %v1506 = vld [vmem:[%s568 + $0xc8] sm:$0xff]
        %v1507 = vld [vmem:[%s568 + $0xd0] sm:$0xff]
        %v1508 = vld [vmem:[%s568 + $0xd8] sm:$0xff]
        %v1509 = vld [vmem:[%s568 + $0xe0] sm:$0xff]
        %v1510 = vld [vmem:[%s568 + $0xe8] sm:$0xff]
        %v1511 = vld [vmem:[%s568 + $0xf0] sm:$0xff]
        %v1512 = vld [vmem:[%s568 + $0xf8] sm:$0xff]
        %v1513 = vld [vmem:[%s695] sm:$0xf]
        %v1515 = vlaneseq
        %v1516 = vshrl.u32 %v1515, 7
        %v1517 = vsub.s32 0, %v1516
        %v1518 = vrot.slane %v1513, %v1517
        %v1519 = vlaneseq
        %v1520 = vshrl.u32 %v1519, 7
        %v1521 = vsub.s32 1, %v1520
        %v1522 = vrot.slane %v1513, %v1521
        %v1523 = vlaneseq
        %v1524 = vshrl.u32 %v1523, 7
        %v1525 = vsub.s32 2, %v1524
        %v1526 = vrot.slane %v1513, %v1525
        %v1527 = vlaneseq
        %v1528 = vshrl.u32 %v1527, 7
        %v1529 = vsub.s32 3, %v1528
        %v1530 = vrot.slane %v1513, %v1529
        %v1567 = vunpack.c.l.b16 %v1481
        %v1568 = vunpack.c.h.b16 %v1481
        %v1569 = vunpack.c.l.b16 %v1482
        %v1570 = vunpack.c.h.b16 %v1482
        %v1571 = vunpack.c.l.b16 %v1483
        %v1572 = vunpack.c.h.b16 %v1483
        %v1573 = vunpack.c.l.b16 %v1484
        %v1574 = vunpack.c.h.b16 %v1484
        %v1575 = vunpack.c.l.b16 %v1485
        %v1576 = vunpack.c.h.b16 %v1485
        %v1577 = vunpack.c.l.b16 %v1486
        %v1578 = vunpack.c.h.b16 %v1486
        %v1579 = vunpack.c.l.b16 %v1487
        %v1580 = vunpack.c.h.b16 %v1487
        %v1581 = vunpack.c.l.b16 %v1488
        %v1582 = vunpack.c.h.b16 %v1488
        %v1583 = vunpack.c.l.b16 %v1489
        %v1584 = vunpack.c.h.b16 %v1489
        %v1585 = vunpack.c.l.b16 %v1490
        %v1586 = vunpack.c.h.b16 %v1490
        %v1587 = vunpack.c.l.b16 %v1491
        %v1588 = vunpack.c.h.b16 %v1491
        %v1589 = vunpack.c.l.b16 %v1492
        %v1590 = vunpack.c.h.b16 %v1492
        %v1591 = vunpack.c.l.b16 %v1493
        %v1592 = vunpack.c.h.b16 %v1493
        %v1593 = vunpack.c.l.b16 %v1494
        %v1594 = vunpack.c.h.b16 %v1494
        %v1595 = vunpack.c.l.b16 %v1495
        %v1596 = vunpack.c.h.b16 %v1495
        %v1597 = vunpack.c.l.b16 %v1496
        %v1598 = vunpack.c.h.b16 %v1496
        %v1599 = vunpack.c.l.b16 %v1497
        %v1600 = vunpack.c.h.b16 %v1497
        %v1601 = vunpack.c.l.b16 %v1498
        %v1602 = vunpack.c.h.b16 %v1498
        %v1603 = vunpack.c.l.b16 %v1499
        %v1604 = vunpack.c.h.b16 %v1499
        %v1605 = vunpack.c.l.b16 %v1500
        %v1606 = vunpack.c.h.b16 %v1500
        %v1607 = vunpack.c.l.b16 %v1501
        %v1608 = vunpack.c.h.b16 %v1501
        %v1609 = vunpack.c.l.b16 %v1502
        %v1610 = vunpack.c.h.b16 %v1502
        %v1611 = vunpack.c.l.b16 %v1503
        %v1612 = vunpack.c.h.b16 %v1503
        %v1613 = vunpack.c.l.b16 %v1504
        %v1614 = vunpack.c.h.b16 %v1504
        %v1615 = vunpack.c.l.b16 %v1505
        %v1616 = vunpack.c.h.b16 %v1505
        %v1617 = vunpack.c.l.b16 %v1506
        %v1618 = vunpack.c.h.b16 %v1506
        %v1619 = vunpack.c.l.b16 %v1507
        %v1620 = vunpack.c.h.b16 %v1507
        %v1621 = vunpack.c.l.b16 %v1508
        %v1622 = vunpack.c.h.b16 %v1508
        %v1623 = vunpack.c.l.b16 %v1509
        %v1624 = vunpack.c.h.b16 %v1509
        %v1625 = vunpack.c.l.b16 %v1510
        %v1626 = vunpack.c.h.b16 %v1510
        %v1627 = vunpack.c.l.b16 %v1511
        %v1628 = vunpack.c.h.b16 %v1511
        %v1629 = vunpack.c.l.b16 %v1512
        %v1630 = vunpack.c.h.b16 %v1512
        %v1631 = vpack.c.b16 %v1571, %v1567
        %v1632 = vpack.c.b16 %v1572, %v1568
        %v1633 = vpack.c.b16 %v1573, %v1569
        %v1634 = vpack.c.b16 %v1574, %v1570
        %v1635 = vpack.c.b16 %v1579, %v1575
        %v1636 = vpack.c.b16 %v1580, %v1576
        %v1637 = vpack.c.b16 %v1581, %v1577
        %v1638 = vpack.c.b16 %v1582, %v1578
        %v1639 = vpack.c.b16 %v1587, %v1583
        %v1640 = vpack.c.b16 %v1588, %v1584
        %v1641 = vpack.c.b16 %v1589, %v1585
        %v1642 = vpack.c.b16 %v1590, %v1586
        %v1643 = vpack.c.b16 %v1595, %v1591
        %v1644 = vpack.c.b16 %v1596, %v1592
        %v1645 = vpack.c.b16 %v1597, %v1593
        %v1646 = vpack.c.b16 %v1598, %v1594
        %v1647 = vpack.c.b16 %v1603, %v1599
        %v1648 = vpack.c.b16 %v1604, %v1600
        %v1649 = vpack.c.b16 %v1605, %v1601
        %v1650 = vpack.c.b16 %v1606, %v1602
        %v1651 = vpack.c.b16 %v1611, %v1607
        %v1652 = vpack.c.b16 %v1612, %v1608
        %v1653 = vpack.c.b16 %v1613, %v1609
        %v1654 = vpack.c.b16 %v1614, %v1610
        %v1655 = vpack.c.b16 %v1619, %v1615
        %v1656 = vpack.c.b16 %v1620, %v1616
        %v1657 = vpack.c.b16 %v1621, %v1617
        %v1658 = vpack.c.b16 %v1622, %v1618
        %v1659 = vpack.c.b16 %v1627, %v1623
        %v1660 = vpack.c.b16 %v1628, %v1624
        %v1661 = vpack.c.b16 %v1629, %v1625
        %v1662 = vpack.c.b16 %v1630, %v1626
        %1695 = vmatprep.subr.bf16.mxu0 %v1632
        %1696 = vmatpush1.bf16.msra.mxu0 %v1631
        %1697 = vmatprep.subr.bf16.mxu0 %v1636
        %1698 = vmatpush1.bf16.msra.mxu0 %v1635
        %1699 = vmatprep.subr.bf16.mxu0 %v1640
        %1700 = vmatpush1.bf16.msra.mxu0 %v1639
        %1701 = vmatprep.subr.bf16.mxu0 %v1644
        %1702 = vmatpush1.bf16.msra.mxu0 %v1643
        %1703 = vmatprep.subr.bf16.mxu0 %v1648
        %1704 = vmatpush1.bf16.msra.mxu0 %v1647
        %1705 = vmatprep.subr.bf16.mxu0 %v1652
        %1706 = vmatpush1.bf16.msra.mxu0 %v1651
        %1707 = vmatprep.subr.bf16.mxu0 %v1656
        %1708 = vmatpush1.bf16.msra.mxu0 %v1655
        %1709 = vmatprep.subr.bf16.mxu0 %v1660
        %1710 = vmatpush1.bf16.msra.mxu0 %v1659
        %1711 = vmatprep.subr.bf16.mxu0 0
        %1712 = vmatpush1.bf16.msra.mxu0 0
        %1713 = vmatprep.subr.bf16.mxu0 0
        %1714 = vmatpush1.bf16.msra.mxu0 0
        %1715 = vmatprep.subr.bf16.mxu0 0
        %1716 = vmatpush1.bf16.msra.mxu0 0
        %1717 = vmatprep.subr.bf16.mxu0 0
        %1718 = vmatpush1.bf16.msra.mxu0 0
        %1719 = vmatprep.subr.bf16.mxu0 0
        %1720 = vmatpush1.bf16.msra.mxu0 0
        %1721 = vmatprep.subr.bf16.mxu0 0
        %1722 = vmatpush1.bf16.msra.mxu0 0
        %1723 = vmatprep.subr.bf16.mxu0 0
        %1724 = vmatpush1.bf16.msra.mxu0 0
        %1725 = vmatprep.subr.bf16.mxu0 0
        %1726 = vmatpush1.bf16.msra.mxu0 0
        %1727 = vmatprep.mubr.bf16.mxu0 0
        %1728 = vmatmul.mubr.bf16.gmra.mrb[0].mxu0 %v1480
        %v1729 = vpop.f32.mrb[0].mxu0
        %v1730 = vadd.f32 %v1518, %v1729
        %v1731 = vpop.f32.mrb[0].mxu0
        %v1732 = vadd.f32 %v1522, %v1731
        %v1733 = vpop.f32.mrb[0].mxu0
        %v1734 = vpop.f32.mrb[0].mxu0
        %1735 = vdwg.mxu0
        %1736 = vmatprep.subr.bf16.mxu0 %v1634
        %1737 = vmatpush1.bf16.msra.mxu0 %v1633
        %1738 = vmatprep.subr.bf16.mxu0 %v1638
        %1739 = vmatpush1.bf16.msra.mxu0 %v1637
        %1740 = vmatprep.subr.bf16.mxu0 %v1642
        %1741 = vmatpush1.bf16.msra.mxu0 %v1641
        %1742 = vmatprep.subr.bf16.mxu0 %v1646
        %1743 = vmatpush1.bf16.msra.mxu0 %v1645
        %1744 = vmatprep.subr.bf16.mxu0 %v1650
        %1745 = vmatpush1.bf16.msra.mxu0 %v1649
        %1746 = vmatprep.subr.bf16.mxu0 %v1654
        %1747 = vmatpush1.bf16.msra.mxu0 %v1653
        %1748 = vmatprep.subr.bf16.mxu0 %v1658
        %1749 = vmatpush1.bf16.msra.mxu0 %v1657
        %1750 = vmatprep.subr.bf16.mxu0 %v1662
        %1751 = vmatpush1.bf16.msra.mxu0 %v1661
        %1752 = vmatprep.subr.bf16.mxu0 0
        %1753 = vmatpush1.bf16.msra.mxu0 0
        %1754 = vmatprep.subr.bf16.mxu0 0
        %1755 = vmatpush1.bf16.msra.mxu0 0
        %1756 = vmatprep.subr.bf16.mxu0 0
        %1757 = vmatpush1.bf16.msra.mxu0 0
        %1758 = vmatprep.subr.bf16.mxu0 0
        %1759 = vmatpush1.bf16.msra.mxu0 0
        %1760 = vmatprep.subr.bf16.mxu0 0
        %1761 = vmatpush1.bf16.msra.mxu0 0
        %1762 = vmatprep.subr.bf16.mxu0 0
        %1763 = vmatpush1.bf16.msra.mxu0 0
        %1764 = vmatprep.subr.bf16.mxu0 0
        %1765 = vmatpush1.bf16.msra.mxu0 0
        %1766 = vmatprep.subr.bf16.mxu0 0
        %1767 = vmatpush1.bf16.msra.mxu0 0
        %1768 = vmatprep.mubr.bf16.mxu0 0
        %1769 = vmatmul.mubr.bf16.gmra.mrb[0].mxu0 %v1480
        %v1770 = vpop.f32.mrb[0].mxu0
        %v1771 = vadd.f32 %v1526, %v1770
        %v1772 = vpop.f32.mrb[0].mxu0
        %v1773 = vadd.f32 %v1530, %v1772
        %v1774 = vpop.f32.mrb[0].mxu0
        %v1775 = vpop.f32.mrb[0].mxu0
        %1776 = vdwg.mxu0
        %v1777 = vmul.f32 %v1730, 0.5
        %v1778 = vmul.f32 %v1732, 0.5
        %v1779 = vmul.f32 %v1771, 0.5
        %v1780 = vmul.f32 %v1773, 0.5
        %v1781 = vmul.f32 %v1730, %v1730
        %v1782 = vmul.f32 %v1732, %v1732
        %v1783 = vmul.f32 %v1771, %v1771
        %v1784 = vmul.f32 %v1773, %v1773
        %v1785 = vmul.f32 %v1730, %v1781
        %v1786 = vmul.f32 %v1732, %v1782
        %v1787 = vmul.f32 %v1771, %v1783
        %v1788 = vmul.f32 %v1773, %v1784
        %v1789 = vmul.f32 %v1785, 0.044715
        %v1790 = vmul.f32 %v1786, 0.044715
        %v1791 = vmul.f32 %v1787, 0.044715
        %v1792 = vmul.f32 %v1788, 0.044715
        %v1793 = vadd.f32 %v1730, %v1789
        %v1794 = vadd.f32 %v1732, %v1790
        %v1795 = vadd.f32 %v1771, %v1791
        %v1796 = vadd.f32 %v1773, %v1792
        %v1797 = vmul.f32 %v1793, 0.7978846
        %v1798 = vmul.f32 %v1794, 0.7978846
        %v1799 = vmul.f32 %v1795, 0.7978846
        %v1800 = vmul.f32 %v1796, 0.7978846
        %v1801 = vtanh.pop %v1797
        %v1802 = vtanh.pop %v1798
        %v1803 = vtanh.pop %v1799
        %v1804 = vtanh.pop %v1800
        %v1805 = vadd.f32 %v1801, 1.0
        %v1806 = vadd.f32 %v1802, 1.0
        %v1807 = vadd.f32 %v1803, 1.0
        %v1808 = vadd.f32 %v1804, 1.0
        %v1809 = vmul.f32 %v1777, %v1805
        %v1810 = vmul.f32 %v1778, %v1806
        %v1811 = vmul.f32 %v1779, %v1807
        %v1812 = vmul.f32 %v1780, %v1808
        %v1813 = vpack.c.bf16 %v1809, %v1809
        %v1814 = vpack.c.bf16 %v1810, %v1810
        %v1815 = vpack.c.bf16 %v1811, %v1811
        %v1816 = vpack.c.bf16 %v1812, %v1812
        %v1817 = vld [vmem:[%s577] sm:$0xf]
        %v1818 = vld [vmem:[%s577 + $0x4] sm:$0xf]
        %v1819 = vld [vmem:[%s577 + $0x8] sm:$0xf]
        %v1820 = vld [vmem:[%s577 + $0xc] sm:$0xf]
        %v1821 = vld [vmem:[%s577 + $0x10] sm:$0xf]
        %v1822 = vld [vmem:[%s577 + $0x14] sm:$0xf]
        %v1823 = vld [vmem:[%s577 + $0x18] sm:$0xf]
        %v1824 = vld [vmem:[%s577 + $0x1c] sm:$0xf]
        %v1825 = vld [vmem:[%s577 + $0x20] sm:$0xf]
        %v1826 = vld [vmem:[%s577 + $0x24] sm:$0xf]
        %v1827 = vld [vmem:[%s577 + $0x28] sm:$0xf]
        %v1828 = vld [vmem:[%s577 + $0x2c] sm:$0xf]
        %v1829 = vld [vmem:[%s577 + $0x30] sm:$0xf]
        %v1830 = vld [vmem:[%s577 + $0x34] sm:$0xf]
        %v1831 = vld [vmem:[%s577 + $0x38] sm:$0xf]
        %v1832 = vld [vmem:[%s577 + $0x3c] sm:$0xf]
        %v1833 = vld [vmem:[%s577 + $0x40] sm:$0xf]
        %v1834 = vld [vmem:[%s577 + $0x44] sm:$0xf]
        %v1835 = vld [vmem:[%s577 + $0x48] sm:$0xf]
        %v1836 = vld [vmem:[%s577 + $0x4c] sm:$0xf]
        %v1837 = vld [vmem:[%s577 + $0x50] sm:$0xf]
        %v1838 = vld [vmem:[%s577 + $0x54] sm:$0xf]
        %v1839 = vld [vmem:[%s577 + $0x58] sm:$0xf]
        %v1840 = vld [vmem:[%s577 + $0x5c] sm:$0xf]
        %v1841 = vld [vmem:[%s577 + $0x60] sm:$0xf]
        %v1842 = vld [vmem:[%s577 + $0x64] sm:$0xf]
        %v1843 = vld [vmem:[%s577 + $0x68] sm:$0xf]
        %v1844 = vld [vmem:[%s577 + $0x6c] sm:$0xf]
        %v1845 = vld [vmem:[%s577 + $0x70] sm:$0xf]
        %v1846 = vld [vmem:[%s577 + $0x74] sm:$0xf]
        %v1847 = vld [vmem:[%s577 + $0x78] sm:$0xf]
        %v1848 = vld [vmem:[%s577 + $0x7c] sm:$0xf]
        %v1849 = vld [vmem:[%s577 + $0x80] sm:$0xf]
        %v1850 = vld [vmem:[%s577 + $0x84] sm:$0xf]
        %v1851 = vld [vmem:[%s577 + $0x88] sm:$0xf]
        %v1852 = vld [vmem:[%s577 + $0x8c] sm:$0xf]
        %v1853 = vld [vmem:[%s577 + $0x90] sm:$0xf]
        %v1854 = vld [vmem:[%s577 + $0x94] sm:$0xf]
        %v1855 = vld [vmem:[%s577 + $0x98] sm:$0xf]
        %v1856 = vld [vmem:[%s577 + $0x9c] sm:$0xf]
        %v1857 = vld [vmem:[%s577 + $0xa0] sm:$0xf]
        %v1858 = vld [vmem:[%s577 + $0xa4] sm:$0xf]
        %v1859 = vld [vmem:[%s577 + $0xa8] sm:$0xf]
        %v1860 = vld [vmem:[%s577 + $0xac] sm:$0xf]
        %v1861 = vld [vmem:[%s577 + $0xb0] sm:$0xf]
        %v1862 = vld [vmem:[%s577 + $0xb4] sm:$0xf]
        %v1863 = vld [vmem:[%s577 + $0xb8] sm:$0xf]
        %v1864 = vld [vmem:[%s577 + $0xbc] sm:$0xf]
        %v1865 = vld [vmem:[%s577 + $0xc0] sm:$0xf]
        %v1866 = vld [vmem:[%s577 + $0xc4] sm:$0xf]
        %v1867 = vld [vmem:[%s577 + $0xc8] sm:$0xf]
        %v1868 = vld [vmem:[%s577 + $0xcc] sm:$0xf]
        %v1869 = vld [vmem:[%s577 + $0xd0] sm:$0xf]
        %v1870 = vld [vmem:[%s577 + $0xd4] sm:$0xf]
        %v1871 = vld [vmem:[%s577 + $0xd8] sm:$0xf]
        %v1872 = vld [vmem:[%s577 + $0xdc] sm:$0xf]
        %v1873 = vld [vmem:[%s577 + $0xe0] sm:$0xf]
        %v1874 = vld [vmem:[%s577 + $0xe4] sm:$0xf]
        %v1875 = vld [vmem:[%s577 + $0xe8] sm:$0xf]
        %v1876 = vld [vmem:[%s577 + $0xec] sm:$0xf]
        %v1877 = vld [vmem:[%s577 + $0xf0] sm:$0xf]
        %v1878 = vld [vmem:[%s577 + $0xf4] sm:$0xf]
        %v1879 = vld [vmem:[%s577 + $0xf8] sm:$0xf]
        %v1880 = vld [vmem:[%s577 + $0xfc] sm:$0xf]
        %v1881 = vld [vmem:[%s698] sm:$0x1]
        %v1883 = vlaneseq
        %v1884 = vshrl.u32 %v1883, 7
        %v1885 = vsub.s32 0, %v1884
        %v1886 = vrot.slane %v1881, %v1885
        %v1952 = vunpack.c.l.b16 %v1817
        %v1953 = vunpack.c.l.b16 %v1818
        %v1954 = vunpack.c.l.b16 %v1819
        %v1955 = vunpack.c.l.b16 %v1820
        %v1956 = vunpack.c.l.b16 %v1821
        %v1957 = vunpack.c.l.b16 %v1822
        %v1958 = vunpack.c.l.b16 %v1823
        %v1959 = vunpack.c.l.b16 %v1824
        %v1960 = vunpack.c.l.b16 %v1825
        %v1961 = vunpack.c.l.b16 %v1826
        %v1962 = vunpack.c.l.b16 %v1827
        %v1963 = vunpack.c.l.b16 %v1828
        %v1964 = vunpack.c.l.b16 %v1829
        %v1965 = vunpack.c.l.b16 %v1830
        %v1966 = vunpack.c.l.b16 %v1831
        %v1967 = vunpack.c.l.b16 %v1832
        %v1968 = vunpack.c.l.b16 %v1833
        %v1969 = vunpack.c.l.b16 %v1834
        %v1970 = vunpack.c.l.b16 %v1835
        %v1971 = vunpack.c.l.b16 %v1836
        %v1972 = vunpack.c.l.b16 %v1837
        %v1973 = vunpack.c.l.b16 %v1838
        %v1974 = vunpack.c.l.b16 %v1839
        %v1975 = vunpack.c.l.b16 %v1840
        %v1976 = vunpack.c.l.b16 %v1841
        %v1977 = vunpack.c.l.b16 %v1842
        %v1978 = vunpack.c.l.b16 %v1843
        %v1979 = vunpack.c.l.b16 %v1844
        %v1980 = vunpack.c.l.b16 %v1845
        %v1981 = vunpack.c.l.b16 %v1846
        %v1982 = vunpack.c.l.b16 %v1847
        %v1983 = vunpack.c.l.b16 %v1848
        %v1984 = vunpack.c.l.b16 %v1849
        %v1985 = vunpack.c.l.b16 %v1850
        %v1986 = vunpack.c.l.b16 %v1851
        %v1987 = vunpack.c.l.b16 %v1852
        %v1988 = vunpack.c.l.b16 %v1853
        %v1989 = vunpack.c.l.b16 %v1854
        %v1990 = vunpack.c.l.b16 %v1855
        %v1991 = vunpack.c.l.b16 %v1856
        %v1992 = vunpack.c.l.b16 %v1857
        %v1993 = vunpack.c.l.b16 %v1858
        %v1994 = vunpack.c.l.b16 %v1859
        %v1995 = vunpack.c.l.b16 %v1860
        %v1996 = vunpack.c.l.b16 %v1861
        %v1997 = vunpack.c.l.b16 %v1862
        %v1998 = vunpack.c.l.b16 %v1863
        %v1999 = vunpack.c.l.b16 %v1864
        %v2000 = vunpack.c.l.b16 %v1865
        %v2001 = vunpack.c.l.b16 %v1866
        %v2002 = vunpack.c.l.b16 %v1867
        %v2003 = vunpack.c.l.b16 %v1868
        %v2004 = vunpack.c.l.b16 %v1869
        %v2005 = vunpack.c.l.b16 %v1870
        %v2006 = vunpack.c.l.b16 %v1871
        %v2007 = vunpack.c.l.b16 %v1872
        %v2008 = vunpack.c.l.b16 %v1873
        %v2009 = vunpack.c.l.b16 %v1874
        %v2010 = vunpack.c.l.b16 %v1875
        %v2011 = vunpack.c.l.b16 %v1876
        %v2012 = vunpack.c.l.b16 %v1877
        %v2013 = vunpack.c.l.b16 %v1878
        %v2014 = vunpack.c.l.b16 %v1879
        %v2015 = vunpack.c.l.b16 %v1880
        %v2016 = vpack.c.b16 %v1953, %v1952
        %v2017 = vpack.c.b16 %v1955, %v1954
        %v2018 = vpack.c.b16 %v1957, %v1956
        %v2019 = vpack.c.b16 %v1959, %v1958
        %v2020 = vpack.c.b16 %v1961, %v1960
        %v2021 = vpack.c.b16 %v1963, %v1962
        %v2022 = vpack.c.b16 %v1965, %v1964
        %v2023 = vpack.c.b16 %v1967, %v1966
        %v2024 = vpack.c.b16 %v1969, %v1968
        %v2025 = vpack.c.b16 %v1971, %v1970
        %v2026 = vpack.c.b16 %v1973, %v1972
        %v2027 = vpack.c.b16 %v1975, %v1974
        %v2028 = vpack.c.b16 %v1977, %v1976
        %v2029 = vpack.c.b16 %v1979, %v1978
        %v2030 = vpack.c.b16 %v1981, %v1980
        %v2031 = vpack.c.b16 %v1983, %v1982
        %v2032 = vpack.c.b16 %v1985, %v1984
        %v2033 = vpack.c.b16 %v1987, %v1986
        %v2034 = vpack.c.b16 %v1989, %v1988
        %v2035 = vpack.c.b16 %v1991, %v1990
        %v2036 = vpack.c.b16 %v1993, %v1992
        %v2037 = vpack.c.b16 %v1995, %v1994
        %v2038 = vpack.c.b16 %v1997, %v1996
        %v2039 = vpack.c.b16 %v1999, %v1998
        %v2040 = vpack.c.b16 %v2001, %v2000
        %v2041 = vpack.c.b16 %v2003, %v2002
        %v2042 = vpack.c.b16 %v2005, %v2004
        %v2043 = vpack.c.b16 %v2007, %v2006
        %v2044 = vpack.c.b16 %v2009, %v2008
        %v2045 = vpack.c.b16 %v2011, %v2010
        %v2046 = vpack.c.b16 %v2013, %v2012
        %v2047 = vpack.c.b16 %v2015, %v2014
        %2080 = vmatprep.subr.bf16.mxu0 0
        %2081 = vmatpush1.bf16.msra.mxu0 %v2016
        %2082 = vmatprep.subr.bf16.mxu0 0
        %2083 = vmatpush1.bf16.msra.mxu0 %v2017
        %2084 = vmatprep.subr.bf16.mxu0 0
        %2085 = vmatpush1.bf16.msra.mxu0 %v2018
        %2086 = vmatprep.subr.bf16.mxu0 0
        %2087 = vmatpush1.bf16.msra.mxu0 %v2019
        %2088 = vmatprep.subr.bf16.mxu0 0
        %2089 = vmatpush1.bf16.msra.mxu0 %v2020
        %2090 = vmatprep.subr.bf16.mxu0 0
        %2091 = vmatpush1.bf16.msra.mxu0 %v2021
        %2092 = vmatprep.subr.bf16.mxu0 0
        %2093 = vmatpush1.bf16.msra.mxu0 %v2022
        %2094 = vmatprep.subr.bf16.mxu0 0
        %2095 = vmatpush1.bf16.msra.mxu0 %v2023
        %2096 = vmatprep.subr.bf16.mxu0 0
        %2097 = vmatpush1.bf16.msra.mxu0 %v2024
        %2098 = vmatprep.subr.bf16.mxu0 0
        %2099 = vmatpush1.bf16.msra.mxu0 %v2025
        %2100 = vmatprep.subr.bf16.mxu0 0
        %2101 = vmatpush1.bf16.msra.mxu0 %v2026
        %2102 = vmatprep.subr.bf16.mxu0 0
        %2103 = vmatpush1.bf16.msra.mxu0 %v2027
        %2104 = vmatprep.subr.bf16.mxu0 0
        %2105 = vmatpush1.bf16.msra.mxu0 %v2028
        %2106 = vmatprep.subr.bf16.mxu0 0
        %2107 = vmatpush1.bf16.msra.mxu0 %v2029
        %2108 = vmatprep.subr.bf16.mxu0 0
        %2109 = vmatpush1.bf16.msra.mxu0 %v2030
        %2110 = vmatprep.subr.bf16.mxu0 0
        %2111 = vmatpush1.bf16.msra.mxu0 %v2031
        %2112 = vmatprep.mubr.bf16.mxu0 %v1814
        %2113 = vmatmul.mubr.bf16.gmra.mrb[0].mxu0 %v1813
        %v2114 = vpop.f32.mrb[0].mxu0
        %v2115 = vadd.f32 %v1886, %v2114
        %v2116 = vpop.f32.mrb[0].mxu0
        %v2117 = vpop.f32.mrb[0].mxu0
        %v2118 = vpop.f32.mrb[0].mxu0
        %2119 = vdwg.mxu0
        %2120 = vmatprep.subr.bf16.mxu0 0
        %2121 = vmatpush1.bf16.msra.mxu0 %v2032
        %2122 = vmatprep.subr.bf16.mxu0 0
        %2123 = vmatpush1.bf16.msra.mxu0 %v2033
        %2124 = vmatprep.subr.bf16.mxu0 0
        %2125 = vmatpush1.bf16.msra.mxu0 %v2034
        %2126 = vmatprep.subr.bf16.mxu0 0
        %2127 = vmatpush1.bf16.msra.mxu0 %v2035
        %2128 = vmatprep.subr.bf16.mxu0 0
        %2129 = vmatpush1.bf16.msra.mxu0 %v2036
        %2130 = vmatprep.subr.bf16.mxu0 0
        %2131 = vmatpush1.bf16.msra.mxu0 %v2037
        %2132 = vmatprep.subr.bf16.mxu0 0
        %2133 = vmatpush1.bf16.msra.mxu0 %v2038
        %2134 = vmatprep.subr.bf16.mxu0 0
        %2135 = vmatpush1.bf16.msra.mxu0 %v2039
        %2136 = vmatprep.subr.bf16.mxu0 0
        %2137 = vmatpush1.bf16.msra.mxu0 %v2040
        %2138 = vmatprep.subr.bf16.mxu0 0
        %2139 = vmatpush1.bf16.msra.mxu0 %v2041
        %2140 = vmatprep.subr.bf16.mxu0 0
        %2141 = vmatpush1.bf16.msra.mxu0 %v2042
        %2142 = vmatprep.subr.bf16.mxu0 0
        %2143 = vmatpush1.bf16.msra.mxu0 %v2043
        %2144 = vmatprep.subr.bf16.mxu0 0
        %2145 = vmatpush1.bf16.msra.mxu0 %v2044
        %2146 = vmatprep.subr.bf16.mxu0 0
        %2147 = vmatpush1.bf16.msra.mxu0 %v2045
        %2148 = vmatprep.subr.bf16.mxu0 0
        %2149 = vmatpush1.bf16.msra.mxu0 %v2046
        %2150 = vmatprep.subr.bf16.mxu0 0
        %2151 = vmatpush1.bf16.msra.mxu0 %v2047
        %2152 = vmatprep.mubr.bf16.mxu0 %v1816
        %2153 = vmatmul.mubr.bf16.gmra.mrb[0].mxu0 %v1815
        %v2154 = vpop.f32.mrb[0].mxu0
        %v2155 = vadd.f32 %v2115, %v2154
        %v2156 = vpop.f32.mrb[0].mxu0
        %v2157 = vpop.f32.mrb[0].mxu0
        %v2158 = vpop.f32.mrb[0].mxu0
        %2159 = vdwg.mxu0
        %v2160 = vadd.f32 %v1452, %v2155
        %2161 = vst [vmem:[%s702] sm:$0xff] %v2160
        %p2162 = scmp.lt.s32.totalorder %s34, 1
        %s2163 = scalar_select %p2162, %s34, 1
        %s2164 = smul.addr %s2163, 8
        %s2165 = scalar_lea.vmem %s13, %s2164
        // Predicated region
        $region89: #{_lambda_.2} parent=71 // pred_check
          %p2166 = pneg %p398
        $region90: #{_lambda_.2} parent=71 // pred_check_branch
          %2168 = sbr.rel (%p2166) target = $region92
        $region91: #{_lambda_.2} parent=71 // pred_region
          _
        $region92: #{_lambda_.2} parent=71 // pred_fallthru
          _
      $region72: #{_lambda_.2} parent=5 // pred_fallthru
        _
      %p2169 = scmp.le.s32.totalorder 2, %s25
      // Predicated region
      $region93: #{_lambda_.2} parent=5 // pred_check
        %p2170 = pneg %p2169
      $region94: #{_lambda_.2} parent=5 // pred_check_branch
        %2172 = sbr.rel (%p2170) target = $region96
      $region95: #{_lambda_.2} parent=5 // pred_region
        %s2173 = ssub.s32 %s25, 2
        // Predicated region
        $region97: #{_lambda_.2} parent=95 // pred_check
          %p2174 = pneg %p404
        $region98: #{_lambda_.2} parent=95 // pred_check_branch
          %2176 = sbr.rel (%p2174) target = $region100
        $region99: #{_lambda_.2} parent=95 // pred_region
          %p2177 = scmp.lt.s32.totalorder %s36, 1
          %s2178 = scalar_select %p2177, %s36, 1
          %s2179 = smul.addr %s2178, 8
          %s2180 = scalar_lea.vmem %s13, %s2179
        $region100: #{_lambda_.2} parent=95 // pred_fallthru
          _
      $region96: #{_lambda_.2} parent=5 // pred_fallthru
        _
    $region6: #{_lambda_.2} parent=1 // loop_footer
      %s29 = sadd.s32 1, %s25
    $region7: #{_lambda_.2} parent=1 // loop_footer_branch
      %24 = sbr.rel target = $region3
    $region8: #{_lambda_.2} parent=1 // loop_exit
      _
    %2181 = vsyncpa [#allocation3], 1
    %s2182 = scalar_lea.sflag [#allocation3], 1
    %2183 = vsyncpa %s2182, 1
    %2184 = vsyncpa [#allocation5], 1
    %s2185 = scalar_lea.sflag [#allocation5], 1
    %2186 = vsyncpa %s2185, 1

</llo_original>
